<compile_context>
chip_gen: v7x
topology: tpu7x:2x2x1
jax: 0.10.0
libtpu: 0.0.40
codegen_flags: <defaults>
</compile_context>

<pallas_src>
import jax
import jax.numpy as jnp
from jax.experimental import pallas as pl
from jax.experimental.pallas import tpu as pltpu


# ----------------------------- model dimensions -----------------------------
T = 6      # tgt_len
B = 8      # batch
S = 8      # src_len
E = 32     # embedding_size
H = 32     # hidden_size
C = 32     # cell_size
R = 4      # read_heads
N = 16     # nr_cells
V = 50     # vocab size (for the synthetic embedding table)

CR = C * R             # 128
RN = R * N             # 64
NN_IN = E + CR         # LSTM input size
NN_OUT = H + CR        # output-linear input size
G4 = 4 * H             # gate width


# --------------------------------- kernel -----------------------------------
def mem_decoder_kernel(
    emb_ref,      # [T, B, E]   embedded tgt sequence
    mb_ref,       # [B, S, H]   encoder memory bank (batch-major)
    wih_e_ref,    # [E, 4H]     LSTM input-hidden weights (embedding part, pre-T)
    wih_r_ref,    # [CR, 4H]    LSTM input-hidden weights (read part, pre-T; init step only)
    w_hk_ref,     # [H, 4H+CR]  fused [whh^T | wkey]
    blstm_ref,    # [1, 4H]     LSTM bias (b_ih + b_hh)
    memT_bd_ref,  # [CR, RN]    block-diagonal mem^T (R copies)
    ones_bd_ref,  # [RN, RN]    block-diagonal ones (grouped-softmax denominator)
    m2_ref,       # [RN, 4H]    mem folded into wih_r
    wattn_ref,    # [H, H]      'general' attention bilinear weight
    wout_h_ref,   # [H, E]      output Linear weight (hidden part, pre-T)
    m3_ref,       # [RN, E]     mem folded into wout_r
    bout_ref,     # [1, E]      output Linear bias
    h0_ref,       # [B, H]
    c0_ref,       # [B, H]
    r0_ref,       # [B, CR]
    out_ref,      # [T, B, E]   decoder outputs
    attn_ref,     # [T, B, S]   attention distributions
    pre_g,        # VMEM scratch [T, B, 4H]  carry-independent gate terms
    h_all,        # VMEM scratch [T, B, H]
    w_all,        # VMEM scratch [T, B, RN]  per-step read weights
):
    # Loop-invariant loads hoisted above the recurrence (JAX does not CSE these).
    w_hk = w_hk_ref[...]
    memT_bd = memT_bd_ref[...]
    ones_bd = ones_bd_ref[...]
    m2 = m2_ref[...]

    # ---- Carry-independent gate contribution (embedding + bias), one batched
    # ---- [T*B, E] x [E, 4H] matmul hoisted off the serial chain.
    emb_flat = emb_ref[...].reshape(T * B, E)                 # leading-dim merge (free)
    pre = (jnp.dot(emb_flat, wih_e_ref[...], preferred_element_type=jnp.float32)
           + blstm_ref[...])                                  # [T*B, 4H]
    pre_g[...] = pre.reshape(T, B, G4)                        # leading-dim split (free)

    # Initial carry terms: h0's gate contribution and r0's gate contribution.
    hg0 = jnp.dot(h0_ref[...], w_hk, preferred_element_type=jnp.float32)[:, :G4]
    rg0 = jnp.dot(r0_ref[...], wih_r_ref[...], preferred_element_type=jnp.float32)

    def step(t, carry):
        hg, c, rg = carry                                     # [B,4H], [B,H], [B,4H]
        gates = pre_g[t] + hg + rg                            # [B, 4H] = [8, 128]

        # One full-vreg sigmoid pass (i/f/o used) + tanh only on the g lanes.
        sg = jax.nn.sigmoid(gates)
        i_g = sg[:, 0 * H:1 * H]
        f_g = sg[:, 1 * H:2 * H]
        o_g = sg[:, 3 * H:4 * H]
        g_g = jnp.tanh(gates[:, 2 * H:3 * H])
        c_new = f_g * c + i_g * g_g
        h_new = o_g * jnp.tanh(c_new)

        # Fused hidden projection: one [8,32]x[32,256] push gives both the next
        # step's hidden-gate term and this step's memory read keys.
        hw = jnp.dot(h_new, w_hk, preferred_element_type=jnp.float32)  # [B, 4H+CR]
        hg_next = hw[:, :G4]                                           # [B, 4H]
        keys = hw[:, G4:]                                              # [B, CR]

        # Content-addressed read kept in the [B, R*N] lane layout (no reshapes).
        sim = jnp.dot(keys, memT_bd, preferred_element_type=jnp.float32)   # [B, RN]
        # Row max (same constant within every head group -> per-head softmax
        # unchanged; logits are bounded so no underflow risk).
        m = jnp.max(sim, axis=-1, keepdims=True)
        e = jnp.exp(sim - m)
        denom = jnp.dot(e, ones_bd, preferred_element_type=jnp.float32)    # per-head sums
        w_read = e * pl.reciprocal(denom, approx=False)                     # [B, RN]
        # Reads' contribution to the *next* step's gates (mem folded into wih_r).
        rg_next = jnp.dot(w_read, m2, preferred_element_type=jnp.float32)   # [B, 4H]

        # Stash per-step activations for the hoisted post-loop computation.
        h_all[t] = h_new
        w_all[t] = w_read
        return hg_next, c_new, rg_next

    jax.lax.fori_loop(0, T, step, (hg0, c0_ref[...], rg0), unroll=True)

    # ---- Hoisted off the serial path: attention + output projection, batched
    # ---- over all T*B rows at once.
    h_flat = h_all[...].reshape(T * B, H)                     # leading-dim merge (free)

    # 'general' global attention over memory_bank.
    hq = jnp.dot(h_flat, wattn_ref[...],
                 preferred_element_type=jnp.float32).reshape(T, B, H)
    scores = jnp.sum(hq[:, :, None, :] * mb_ref[...][None, :, :, :], axis=-1)  # [T, B, S]
    s_max = jnp.max(scores, axis=-1, keepdims=True)
    s_exp = jnp.exp(scores - s_max)
    s_den = jnp.sum(s_exp, axis=-1, keepdims=True)
    attn_ref[...] = s_exp * pl.reciprocal(s_den, approx=False)

    # Output projection: Linear(hidden + cell_size*read_heads -> emb), with the
    # memory matrix folded into the read-vector half (M3).
    out = (
        jnp.dot(h_flat, wout_h_ref[...], preferred_element_type=jnp.float32)
        + jnp.dot(w_all[...].reshape(T * B, RN), m3_ref[...],
                  preferred_element_type=jnp.float32)
        + bout_ref[...]
    )                                                         # [T*B, E]
    out_ref[...] = out.reshape(T, B, E)


# --------------------------------- wrapper ----------------------------------
@jax.jit
def mem_decoder_forward(emb_seq, memory_bank_bm, params, h0, c0, r0):
    """emb_seq: [T, B, E]; memory_bank_bm: [B, S, H]."""
    # Pre-transpose / split / fold weights once on the host side so the kernel
    # never transposes, concatenates, or reshapes on the per-step critical path.
    wih = params["wih"]                   # [4H, E + CR]
    wih_e = jnp.transpose(wih[:, :E])     # [E, 4H]
    wih_r = jnp.transpose(wih[:, E:])     # [CR, 4H]
    whh_t = jnp.transpose(params["whh"])  # [H, 4H]
    w_hk = jnp.concatenate([whh_t, params["wkey"]], axis=1)   # [H, 4H+CR] = [32,256]

    mem = params["mem"]                   # [N, C]
    eye_r = jnp.eye(R, dtype=mem.dtype)
    memT_bd = jnp.kron(eye_r, jnp.transpose(mem))             # [CR, RN]
    ones_bd = jnp.kron(eye_r, jnp.ones((N, N), mem.dtype))    # [RN, RN]
    # M2[(r,n), :] = sum_c mem[n,c] * wih_r[r*C+c, :]   ->  w_read @ M2 == reads @ wih_r
    m2 = jnp.einsum('nc,rcg->rng', mem, wih_r.reshape(R, C, G4)).reshape(RN, G4)

    wout = params["wout"]                 # [E, H + CR]
    wout_h = jnp.transpose(wout[:, :H])   # [H, E]
    wout_r = jnp.transpose(wout[:, H:])   # [CR, E]
    # M3[(r,n), :] = sum_c mem[n,c] * wout_r[r*C+c, :]  ->  w_read @ M3 == reads @ wout_r
    m3 = jnp.einsum('nc,rce->rne', mem, wout_r.reshape(R, C, E)).reshape(RN, E)

    vmem = lambda: pl.BlockSpec(memory_space=pltpu.MemorySpace.VMEM)
    n_in = 16

    dec_out, attns = pl.pallas_call(
        mem_decoder_kernel,
        out_shape=(
            jax.ShapeDtypeStruct((T, B, E), jnp.float32),
            jax.ShapeDtypeStruct((T, B, S), jnp.float32),
        ),
        # No grid: the whole problem (<1 MiB) lives in VMEM for a single
        # invocation; the time recurrence is an unrolled in-kernel loop.
        in_specs=[vmem() for _ in range(n_in)],
        out_specs=(vmem(), vmem()),
        scratch_shapes=[
            pltpu.VMEM((T, B, G4), jnp.float32),
            pltpu.VMEM((T, B, H), jnp.float32),
            pltpu.VMEM((T, B, RN), jnp.float32),
        ],
    )(
        emb_seq, memory_bank_bm,
        wih_e, wih_r, w_hk, params["b_lstm"],
        memT_bd, ones_bd, m2,
        params["wattn"], wout_h, m3, params["b_out"],
        h0, c0, r0,
    )
    return dec_out, attns


# ----------------------- pure-JAX reference (for check) ----------------------
def reference_forward(emb_seq, memory_bank_bm, params, h0, c0, r0):
    def step(carry, emb_t):
        h, c, r = carry
        x = jnp.concatenate([emb_t, r], axis=-1)
        gates = x @ params["wih"].T + h @ params["whh"].T + params["b_lstm"][0]
        i_g = jax.nn.sigmoid(gates[:, 0 * H:1 * H])
        f_g = jax.nn.sigmoid(gates[:, 1 * H:2 * H])
        g_g = jnp.tanh(gates[:, 2 * H:3 * H])
        o_g = jax.nn.sigmoid(gates[:, 3 * H:4 * H])
        c_new = f_g * c + i_g * g_g
        h_new = o_g * jnp.tanh(c_new)
        keys = (h_new @ params["wkey"]).reshape(B, R, C)
        sim = jnp.einsum('brc,nc->brn', keys, params["mem"])
        w_read = jax.nn.softmax(sim, axis=-1)
        reads = jnp.einsum('brn,nc->brc', w_read, params["mem"]).reshape(B, R * C)
        hq = h_new @ params["wattn"]
        scores = jnp.einsum('bh,bsh->bs', hq, memory_bank_bm)
        attn = jax.nn.softmax(scores, axis=-1)
        feat = jnp.concatenate([h_new, reads], axis=-1)
        out = feat @ params["wout"].T + params["b_out"][0]
        return (h_new, c_new, reads), (out, attn)

    _, (outs, attns) = jax.lax.scan(step, (h0, c0, r0), emb_seq)
    return outs, attns


# ----------------------------------- main ------------------------------------
if __name__ == "__main__":
    key = jax.random.PRNGKey(0)
    ks = jax.random.split(key, 16)

    # deterministic synthetic parameters (shapes implied by the module __init__)
    scale = 0.1
    params = {
        "wih":    scale * jax.random.normal(ks[0], (4 * H, NN_IN), jnp.float32),
        "whh":    scale * jax.random.normal(ks[1], (4 * H, H), jnp.float32),
        "b_lstm": scale * jax.random.normal(ks[2], (1, 4 * H), jnp.float32),
        "wkey":   scale * jax.random.normal(ks[3], (H, R * C), jnp.float32),
        "mem":    scale * jax.random.normal(ks[4], (N, C), jnp.float32),
        "wattn":  scale * jax.random.normal(ks[5], (H, H), jnp.float32),
        "wout":   scale * jax.random.normal(ks[6], (E, NN_OUT), jnp.float32),
        "b_out":  scale * jax.random.normal(ks[7], (1, E), jnp.float32),
    }
    emb_table = scale * jax.random.normal(ks[8], (V, E), jnp.float32)

    # inputs: tgt token ids [T, B], encoder memory_bank [S, B, H]
    tgt_ids = jax.random.randint(ks[9], (T, B), 0, V)
    memory_bank = jax.random.normal(ks[10], (S, B, H), jnp.float32)

    # glue: embedding lookup + batch-major memory bank + zero initial state
    emb_seq = emb_table[tgt_ids]                             # [T, B, E]
    memory_bank_bm = jnp.transpose(memory_bank, (1, 0, 2))   # [B, S, H]
    h0 = jnp.zeros((B, H), jnp.float32)
    c0 = jnp.zeros((B, H), jnp.float32)
    r0 = jnp.zeros((B, R * C), jnp.float32)

    dec_out, attns = mem_decoder_forward(
        emb_seq, memory_bank_bm, params, h0, c0, r0)
    jax.block_until_ready((dec_out, attns))

    ref_out, ref_attn = reference_forward(
        emb_seq, memory_bank_bm, params, h0, c0, r0)
    assert dec_out.shape == (T, B, E) and attns.shape == (T, B, S)
    assert jnp.allclose(dec_out, ref_out, atol=1e-4, rtol=1e-4)
    assert jnp.allclose(attns, ref_attn, atol=1e-4, rtol=1e-4)

    final_output = dec_out[-1]  # mirrors forward()'s `decoder_outputs[-1]`
    del final_output

    print("KERNEL_OK")
</pallas_src>

<mosaic_0001>
module attributes {stable_mosaic.version = 11 : i64} {
  func.func @mem_decoder_kernel(%arg0: memref<6x8x32xf32, #tpu.memory_space<vmem>>, %arg1: memref<8x8x32xf32, #tpu.memory_space<vmem>>, %arg2: memref<32x128xf32, #tpu.memory_space<vmem>>, %arg3: memref<128x128xf32, #tpu.memory_space<vmem>>, %arg4: memref<32x256xf32, #tpu.memory_space<vmem>>, %arg5: memref<1x128xf32, #tpu.memory_space<vmem>>, %arg6: memref<128x64xf32, #tpu.memory_space<vmem>>, %arg7: memref<64x64xf32, #tpu.memory_space<vmem>>, %arg8: memref<64x128xf32, #tpu.memory_space<vmem>>, %arg9: memref<32x32xf32, #tpu.memory_space<vmem>>, %arg10: memref<32x32xf32, #tpu.memory_space<vmem>>, %arg11: memref<64x32xf32, #tpu.memory_space<vmem>>, %arg12: memref<1x32xf32, #tpu.memory_space<vmem>>, %arg13: memref<8x32xf32, #tpu.memory_space<vmem>>, %arg14: memref<8x32xf32, #tpu.memory_space<vmem>>, %arg15: memref<8x128xf32, #tpu.memory_space<vmem>>, %arg16: memref<6x8x32xf32, #tpu.memory_space<vmem>>, %arg17: memref<6x8x8xf32, #tpu.memory_space<vmem>>, %arg18: memref<6x8x128xf32, #tpu.memory_space<vmem>>, %arg19: memref<6x8x32xf32, #tpu.memory_space<vmem>>, %arg20: memref<6x8x64xf32, #tpu.memory_space<vmem>>) attributes {dimension_semantics = [], scalar_prefetch = 0 : i64, scratch_operands = 3 : i64, tpu.core_type = #tpu.core_type<tc>} {
    %c0 = arith.constant 0 : index
    %c0_0 = arith.constant 0 : index
    %0 = vector.load %arg4[%c0, %c0_0] : memref<32x256xf32, #tpu.memory_space<vmem>>, vector<32x256xf32>
    %c0_1 = arith.constant 0 : index
    %c0_2 = arith.constant 0 : index
    %1 = vector.load %arg6[%c0_1, %c0_2] : memref<128x64xf32, #tpu.memory_space<vmem>>, vector<128x64xf32>
    %c0_3 = arith.constant 0 : index
    %c0_4 = arith.constant 0 : index
    %2 = vector.load %arg7[%c0_3, %c0_4] : memref<64x64xf32, #tpu.memory_space<vmem>>, vector<64x64xf32>
    %c0_5 = arith.constant 0 : index
    %c0_6 = arith.constant 0 : index
    %3 = vector.load %arg8[%c0_5, %c0_6] : memref<64x128xf32, #tpu.memory_space<vmem>>, vector<64x128xf32>
    %c0_7 = arith.constant 0 : index
    %c0_8 = arith.constant 0 : index
    %c0_9 = arith.constant 0 : index
    %4 = vector.load %arg0[%c0_7, %c0_8, %c0_9] : memref<6x8x32xf32, #tpu.memory_space<vmem>>, vector<6x8x32xf32>
    %5 = vector.shape_cast %4 : vector<6x8x32xf32> to vector<48x32xf32>
    %c0_10 = arith.constant 0 : index
    %c0_11 = arith.constant 0 : index
    %6 = vector.load %arg2[%c0_10, %c0_11] : memref<32x128xf32, #tpu.memory_space<vmem>>, vector<32x128xf32>
    %cst = arith.constant dense<0.000000e+00> : vector<48x128xf32>
    %7 = tpu.matmul %5, %6, %cst {dimension_numbers = #tpu.dot_dimension_numbers<[1], [0], [0], [1], [0, 0, 1, 1], [], []>} : vector<48x32xf32>, vector<32x128xf32>, vector<48x128xf32> -> vector<48x128xf32>
    %c0_12 = arith.constant 0 : index
    %c0_13 = arith.constant 0 : index
    %8 = vector.load %arg5[%c0_12, %c0_13] : memref<1x128xf32, #tpu.memory_space<vmem>>, vector<1x128xf32>
    %9 = vector.broadcast %8 : vector<1x128xf32> to vector<48x128xf32>
    %10 = arith.addf %7, %9 : vector<48x128xf32>
    %11 = vector.shape_cast %10 : vector<48x128xf32> to vector<6x8x128xf32>
    %c0_14 = arith.constant 0 : index
    %c0_15 = arith.constant 0 : index
    %c0_16 = arith.constant 0 : index
    %12 = vector.load %arg18[%c0_14, %c0_15, %c0_16] : memref<6x8x128xf32, #tpu.memory_space<vmem>>, vector<6x8x128xf32>
    tpu.vector_store %arg18[%c0_14, %c0_15, %c0_16], %11 {strides = array<i32>} : memref<6x8x128xf32, #tpu.memory_space<vmem>>, vector<6x8x128xf32>,
    %c0_17 = arith.constant 0 : index
    %c0_18 = arith.constant 0 : index
    %13 = vector.load %arg13[%c0_17, %c0_18] : memref<8x32xf32, #tpu.memory_space<vmem>>, vector<8x32xf32>
    %cst_19 = arith.constant dense<0.000000e+00> : vector<8x256xf32>
    %14 = tpu.matmul %13, %0, %cst_19 {dimension_numbers = #tpu.dot_dimension_numbers<[1], [0], [0], [1], [0, 0, 1, 1], [], []>} : vector<8x32xf32>, vector<32x256xf32>, vector<8x256xf32> -> vector<8x256xf32>
    %15 = vector.extract_strided_slice %14 {offsets = [0, 0], sizes = [8, 128], strides = [1, 1]} : vector<8x256xf32> to vector<8x128xf32>
    %c0_20 = arith.constant 0 : index
    %c0_21 = arith.constant 0 : index
    %16 = vector.load %arg15[%c0_20, %c0_21] : memref<8x128xf32, #tpu.memory_space<vmem>>, vector<8x128xf32>
    %c0_22 = arith.constant 0 : index
    %c0_23 = arith.constant 0 : index
    %17 = vector.load %arg3[%c0_22, %c0_23] : memref<128x128xf32, #tpu.memory_space<vmem>>, vector<128x128xf32>
    %cst_24 = arith.constant dense<0.000000e+00> : vector<8x128xf32>
    %18 = tpu.matmul %16, %17, %cst_24 {dimension_numbers = #tpu.dot_dimension_numbers<[1], [0], [0], [1], [0, 0, 1, 1], [], []>} : vector<8x128xf32>, vector<128x128xf32>, vector<8x128xf32> -> vector<8x128xf32>
    %c0_25 = arith.constant 0 : index
    %c0_26 = arith.constant 0 : index
    %19 = vector.load %arg14[%c0_25, %c0_26] : memref<8x32xf32, #tpu.memory_space<vmem>>, vector<8x32xf32>
    %c0_i32 = arith.constant 0 : i32
    %20 = arith.index_cast %c0_i32 : i32 to index
    %c0_27 = arith.constant 0 : index
    %c0_28 = arith.constant 0 : index
    %21 = vector.load %arg18[%20, %c0_27, %c0_28] : memref<6x8x128xf32, #tpu.memory_space<vmem>>, vector<1x8x128xf32>
    %22 = vector.shape_cast %21 : vector<1x8x128xf32> to vector<8x128xf32>
    %23 = arith.addf %22, %15 : vector<8x128xf32>
    %24 = arith.addf %23, %18 : vector<8x128xf32>
    %25 = arith.negf %24 : vector<8x128xf32>
    %26 = math.exp %25 : vector<8x128xf32>
    %cst_29 = arith.constant 1.000000e+00 : f32
    %27 = vector.broadcast %cst_29 : f32 to vector<8x128xf32>
    %28 = arith.addf %27, %26 : vector<8x128xf32>
    %29 = arith.divf %27, %28 : vector<8x128xf32>
    %30 = vector.extract_strided_slice %29 {offsets = [0, 0], sizes = [8, 32], strides = [1, 1]} : vector<8x128xf32> to vector<8x32xf32>
    %31 = vector.extract_strided_slice %29 {offsets = [0, 32], sizes = [8, 32], strides = [1, 1]} : vector<8x128xf32> to vector<8x32xf32>
    %32 = vector.extract_strided_slice %29 {offsets = [0, 96], sizes = [8, 32], strides = [1, 1]} : vector<8x128xf32> to vector<8x32xf32>
    %33 = vector.extract_strided_slice %24 {offsets = [0, 64], sizes = [8, 32], strides = [1, 1]} : vector<8x128xf32> to vector<8x32xf32>
    %34 = math.tanh %33 : vector<8x32xf32>
    %35 = arith.mulf %31, %19 : vector<8x32xf32>
    %36 = arith.mulf %30, %34 : vector<8x32xf32>
    %37 = arith.addf %35, %36 : vector<8x32xf32>
    %38 = math.tanh %37 : vector<8x32xf32>
    %39 = arith.mulf %32, %38 : vector<8x32xf32>
    %cst_30 = arith.constant dense<0.000000e+00> : vector<8x256xf32>
    %40 = tpu.matmul %39, %0, %cst_30 {dimension_numbers = #tpu.dot_dimension_numbers<[1], [0], [0], [1], [0, 0, 1, 1], [], []>} : vector<8x32xf32>, vector<32x256xf32>, vector<8x256xf32> -> vector<8x256xf32>
    %41 = vector.extract_strided_slice %40 {offsets = [0, 0], sizes = [8, 128], strides = [1, 1]} : vector<8x256xf32> to vector<8x128xf32>
    %42 = vector.extract_strided_slice %40 {offsets = [0, 128], sizes = [8, 128], strides = [1, 1]} : vector<8x256xf32> to vector<8x128xf32>
    %cst_31 = arith.constant dense<0.000000e+00> : vector<8x64xf32>
    %43 = tpu.matmul %42, %1, %cst_31 {dimension_numbers = #tpu.dot_dimension_numbers<[1], [0], [0], [1], [0, 0, 1, 1], [], []>} : vector<8x128xf32>, vector<128x64xf32>, vector<8x64xf32> -> vector<8x64xf32>
    %cst_32 = arith.constant dense<0xFF800000> : vector<8xf32>
    %44 = vector.multi_reduction <maximumf>, %43, %cst_32 [1] : vector<8x64xf32> to vector<8xf32>
    %45 = vector.shape_cast %44 : vector<8xf32> to vector<8x1xf32>
    %46 = vector.broadcast %45 : vector<8x1xf32> to vector<8x64xf32>
    %47 = arith.subf %43, %46 : vector<8x64xf32>
    %48 = math.exp %47 : vector<8x64xf32>
    %cst_33 = arith.constant dense<0.000000e+00> : vector<8x64xf32>
    %49 = tpu.matmul %48, %2, %cst_33 {dimension_numbers = #tpu.dot_dimension_numbers<[1], [0], [0], [1], [0, 0, 1, 1], [], []>} : vector<8x64xf32>, vector<64x64xf32>, vector<8x64xf32> -> vector<8x64xf32>
    %50 = tpu.reciprocal %49 : vector<8x64xf32> -> vector<8x64xf32>
    %51 = arith.mulf %48, %50 : vector<8x64xf32>
    %cst_34 = arith.constant dense<0.000000e+00> : vector<8x128xf32>
    %52 = tpu.matmul %51, %3, %cst_34 {dimension_numbers = #tpu.dot_dimension_numbers<[1], [0], [0], [1], [0, 0, 1, 1], [], []>} : vector<8x64xf32>, vector<64x128xf32>, vector<8x128xf32> -> vector<8x128xf32>
    %53 = arith.index_cast %c0_i32 : i32 to index
    %c0_35 = arith.constant 0 : index
    %c0_36 = arith.constant 0 : index
    %54 = vector.load %arg19[%53, %c0_35, %c0_36] : memref<6x8x32xf32, #tpu.memory_space<vmem>>, vector<1x8x32xf32>
    %55 = vector.shape_cast %54 : vector<1x8x32xf32> to vector<8x32xf32>
    %56 = vector.shape_cast %39 : vector<8x32xf32> to vector<1x8x32xf32>
    tpu.vector_store %arg19[%53, %c0_35, %c0_36], %56 {strides = array<i32>} : memref<6x8x32xf32, #tpu.memory_space<vmem>>, vector<1x8x32xf32>,
    %57 = arith.index_cast %c0_i32 : i32 to index
    %c0_37 = arith.constant 0 : index
    %c0_38 = arith.constant 0 : index
    %58 = vector.load %arg20[%57, %c0_37, %c0_38] : memref<6x8x64xf32, #tpu.memory_space<vmem>>, vector<1x8x64xf32>
    %59 = vector.shape_cast %58 : vector<1x8x64xf32> to vector<8x64xf32>
    %60 = vector.shape_cast %51 : vector<8x64xf32> to vector<1x8x64xf32>
    tpu.vector_store %arg20[%57, %c0_37, %c0_38], %60 {strides = array<i32>} : memref<6x8x64xf32, #tpu.memory_space<vmem>>, vector<1x8x64xf32>,
    %c1_i32 = arith.constant 1 : i32
    %61 = arith.index_cast %c1_i32 : i32 to index
    %c0_39 = arith.constant 0 : index
    %c0_40 = arith.constant 0 : index
    %62 = vector.load %arg18[%61, %c0_39, %c0_40] : memref<6x8x128xf32, #tpu.memory_space<vmem>>, vector<1x8x128xf32>
    %63 = vector.shape_cast %62 : vector<1x8x128xf32> to vector<8x128xf32>
    %64 = arith.addf %63, %41 : vector<8x128xf32>
    %65 = arith.addf %64, %52 : vector<8x128xf32>
    %66 = arith.negf %65 : vector<8x128xf32>
    %67 = math.exp %66 : vector<8x128xf32>
    %cst_41 = arith.constant 1.000000e+00 : f32
    %68 = vector.broadcast %cst_41 : f32 to vector<8x128xf32>
    %69 = arith.addf %68, %67 : vector<8x128xf32>
    %70 = arith.divf %68, %69 : vector<8x128xf32>
    %71 = vector.extract_strided_slice %70 {offsets = [0, 0], sizes = [8, 32], strides = [1, 1]} : vector<8x128xf32> to vector<8x32xf32>
    %72 = vector.extract_strided_slice %70 {offsets = [0, 32], sizes = [8, 32], strides = [1, 1]} : vector<8x128xf32> to vector<8x32xf32>
    %73 = vector.extract_strided_slice %70 {offsets = [0, 96], sizes = [8, 32], strides = [1, 1]} : vector<8x128xf32> to vector<8x32xf32>
    %74 = vector.extract_strided_slice %65 {offsets = [0, 64], sizes = [8, 32], strides = [1, 1]} : vector<8x128xf32> to vector<8x32xf32>
    %75 = math.tanh %74 : vector<8x32xf32>
    %76 = arith.mulf %72, %37 : vector<8x32xf32>
    %77 = arith.mulf %71, %75 : vector<8x32xf32>
    %78 = arith.addf %76, %77 : vector<8x32xf32>
    %79 = math.tanh %78 : vector<8x32xf32>
    %80 = arith.mulf %73, %79 : vector<8x32xf32>
    %cst_42 = arith.constant dense<0.000000e+00> : vector<8x256xf32>
    %81 = tpu.matmul %80, %0, %cst_42 {dimension_numbers = #tpu.dot_dimension_numbers<[1], [0], [0], [1], [0, 0, 1, 1], [], []>} : vector<8x32xf32>, vector<32x256xf32>, vector<8x256xf32> -> vector<8x256xf32>
    %82 = vector.extract_strided_slice %81 {offsets = [0, 0], sizes = [8, 128], strides = [1, 1]} : vector<8x256xf32> to vector<8x128xf32>
    %83 = vector.extract_strided_slice %81 {offsets = [0, 128], sizes = [8, 128], strides = [1, 1]} : vector<8x256xf32> to vector<8x128xf32>
    %cst_43 = arith.constant dense<0.000000e+00> : vector<8x64xf32>
    %84 = tpu.matmul %83, %1, %cst_43 {dimension_numbers = #tpu.dot_dimension_numbers<[1], [0], [0], [1], [0, 0, 1, 1], [], []>} : vector<8x128xf32>, vector<128x64xf32>, vector<8x64xf32> -> vector<8x64xf32>
    %cst_44 = arith.constant dense<0xFF800000> : vector<8xf32>
    %85 = vector.multi_reduction <maximumf>, %84, %cst_44 [1] : vector<8x64xf32> to vector<8xf32>
    %86 = vector.shape_cast %85 : vector<8xf32> to vector<8x1xf32>
    %87 = vector.broadcast %86 : vector<8x1xf32> to vector<8x64xf32>
    %88 = arith.subf %84, %87 : vector<8x64xf32>
    %89 = math.exp %88 : vector<8x64xf32>
    %cst_45 = arith.constant dense<0.000000e+00> : vector<8x64xf32>
    %90 = tpu.matmul %89, %2, %cst_45 {dimension_numbers = #tpu.dot_dimension_numbers<[1], [0], [0], [1], [0, 0, 1, 1], [], []>} : vector<8x64xf32>, vector<64x64xf32>, vector<8x64xf32> -> vector<8x64xf32>
    %91 = tpu.reciprocal %90 : vector<8x64xf32> -> vector<8x64xf32>
    %92 = arith.mulf %89, %91 : vector<8x64xf32>
    %cst_46 = arith.constant dense<0.000000e+00> : vector<8x128xf32>
    %93 = tpu.matmul %92, %3, %cst_46 {dimension_numbers = #tpu.dot_dimension_numbers<[1], [0], [0], [1], [0, 0, 1, 1], [], []>} : vector<8x64xf32>, vector<64x128xf32>, vector<8x128xf32> -> vector<8x128xf32>
    %94 = arith.index_cast %c1_i32 : i32 to index
    %c0_47 = arith.constant 0 : index
    %c0_48 = arith.constant 0 : index
    %95 = vector.load %arg19[%94, %c0_47, %c0_48] : memref<6x8x32xf32, #tpu.memory_space<vmem>>, vector<1x8x32xf32>
    %96 = vector.shape_cast %95 : vector<1x8x32xf32> to vector<8x32xf32>
    %97 = vector.shape_cast %80 : vector<8x32xf32> to vector<1x8x32xf32>
    tpu.vector_store %arg19[%94, %c0_47, %c0_48], %97 {strides = array<i32>} : memref<6x8x32xf32, #tpu.memory_space<vmem>>, vector<1x8x32xf32>,
    %98 = arith.index_cast %c1_i32 : i32 to index
    %c0_49 = arith.constant 0 : index
    %c0_50 = arith.constant 0 : index
    %99 = vector.load %arg20[%98, %c0_49, %c0_50] : memref<6x8x64xf32, #tpu.memory_space<vmem>>, vector<1x8x64xf32>
    %100 = vector.shape_cast %99 : vector<1x8x64xf32> to vector<8x64xf32>
    %101 = vector.shape_cast %92 : vector<8x64xf32> to vector<1x8x64xf32>
    tpu.vector_store %arg20[%98, %c0_49, %c0_50], %101 {strides = array<i32>} : memref<6x8x64xf32, #tpu.memory_space<vmem>>, vector<1x8x64xf32>,
    %c2_i32 = arith.constant 2 : i32
    %102 = arith.index_cast %c2_i32 : i32 to index
    %c0_51 = arith.constant 0 : index
    %c0_52 = arith.constant 0 : index
    %103 = vector.load %arg18[%102, %c0_51, %c0_52] : memref<6x8x128xf32, #tpu.memory_space<vmem>>, vector<1x8x128xf32>
    %104 = vector.shape_cast %103 : vector<1x8x128xf32> to vector<8x128xf32>
    %105 = arith.addf %104, %82 : vector<8x128xf32>
    %106 = arith.addf %105, %93 : vector<8x128xf32>
    %107 = arith.negf %106 : vector<8x128xf32>
    %108 = math.exp %107 : vector<8x128xf32>
    %cst_53 = arith.constant 1.000000e+00 : f32
    %109 = vector.broadcast %cst_53 : f32 to vector<8x128xf32>
    %110 = arith.addf %109, %108 : vector<8x128xf32>
    %111 = arith.divf %109, %110 : vector<8x128xf32>
    %112 = vector.extract_strided_slice %111 {offsets = [0, 0], sizes = [8, 32], strides = [1, 1]} : vector<8x128xf32> to vector<8x32xf32>
    %113 = vector.extract_strided_slice %111 {offsets = [0, 32], sizes = [8, 32], strides = [1, 1]} : vector<8x128xf32> to vector<8x32xf32>
    %114 = vector.extract_strided_slice %111 {offsets = [0, 96], sizes = [8, 32], strides = [1, 1]} : vector<8x128xf32> to vector<8x32xf32>
    %115 = vector.extract_strided_slice %106 {offsets = [0, 64], sizes = [8, 32], strides = [1, 1]} : vector<8x128xf32> to vector<8x32xf32>
    %116 = math.tanh %115 : vector<8x32xf32>
    %117 = arith.mulf %113, %78 : vector<8x32xf32>
    %118 = arith.mulf %112, %116 : vector<8x32xf32>
    %119 = arith.addf %117, %118 : vector<8x32xf32>
    %120 = math.tanh %119 : vector<8x32xf32>
    %121 = arith.mulf %114, %120 : vector<8x32xf32>
    %cst_54 = arith.constant dense<0.000000e+00> : vector<8x256xf32>
    %122 = tpu.matmul %121, %0, %cst_54 {dimension_numbers = #tpu.dot_dimension_numbers<[1], [0], [0], [1], [0, 0, 1, 1], [], []>} : vector<8x32xf32>, vector<32x256xf32>, vector<8x256xf32> -> vector<8x256xf32>
    %123 = vector.extract_strided_slice %122 {offsets = [0, 0], sizes = [8, 128], strides = [1, 1]} : vector<8x256xf32> to vector<8x128xf32>
    %124 = vector.extract_strided_slice %122 {offsets = [0, 128], sizes = [8, 128], strides = [1, 1]} : vector<8x256xf32> to vector<8x128xf32>
    %cst_55 = arith.constant dense<0.000000e+00> : vector<8x64xf32>
    %125 = tpu.matmul %124, %1, %cst_55 {dimension_numbers = #tpu.dot_dimension_numbers<[1], [0], [0], [1], [0, 0, 1, 1], [], []>} : vector<8x128xf32>, vector<128x64xf32>, vector<8x64xf32> -> vector<8x64xf32>
    %cst_56 = arith.constant dense<0xFF800000> : vector<8xf32>
    %126 = vector.multi_reduction <maximumf>, %125, %cst_56 [1] : vector<8x64xf32> to vector<8xf32>
    %127 = vector.shape_cast %126 : vector<8xf32> to vector<8x1xf32>
    %128 = vector.broadcast %127 : vector<8x1xf32> to vector<8x64xf32>
    %129 = arith.subf %125, %128 : vector<8x64xf32>
    %130 = math.exp %129 : vector<8x64xf32>
    %cst_57 = arith.constant dense<0.000000e+00> : vector<8x64xf32>
    %131 = tpu.matmul %130, %2, %cst_57 {dimension_numbers = #tpu.dot_dimension_numbers<[1], [0], [0], [1], [0, 0, 1, 1], [], []>} : vector<8x64xf32>, vector<64x64xf32>, vector<8x64xf32> -> vector<8x64xf32>
    %132 = tpu.reciprocal %131 : vector<8x64xf32> -> vector<8x64xf32>
    %133 = arith.mulf %130, %132 : vector<8x64xf32>
    %cst_58 = arith.constant dense<0.000000e+00> : vector<8x128xf32>
    %134 = tpu.matmul %133, %3, %cst_58 {dimension_numbers = #tpu.dot_dimension_numbers<[1], [0], [0], [1], [0, 0, 1, 1], [], []>} : vector<8x64xf32>, vector<64x128xf32>, vector<8x128xf32> -> vector<8x128xf32>
    %135 = arith.index_cast %c2_i32 : i32 to index
    %c0_59 = arith.constant 0 : index
    %c0_60 = arith.constant 0 : index
    %136 = vector.load %arg19[%135, %c0_59, %c0_60] : memref<6x8x32xf32, #tpu.memory_space<vmem>>, vector<1x8x32xf32>
    %137 = vector.shape_cast %136 : vector<1x8x32xf32> to vector<8x32xf32>
    %138 = vector.shape_cast %121 : vector<8x32xf32> to vector<1x8x32xf32>
    tpu.vector_store %arg19[%135, %c0_59, %c0_60], %138 {strides = array<i32>} : memref<6x8x32xf32, #tpu.memory_space<vmem>>, vector<1x8x32xf32>,
    %139 = arith.index_cast %c2_i32 : i32 to index
    %c0_61 = arith.constant 0 : index
    %c0_62 = arith.constant 0 : index
    %140 = vector.load %arg20[%139, %c0_61, %c0_62] : memref<6x8x64xf32, #tpu.memory_space<vmem>>, vector<1x8x64xf32>
    %141 = vector.shape_cast %140 : vector<1x8x64xf32> to vector<8x64xf32>
    %142 = vector.shape_cast %133 : vector<8x64xf32> to vector<1x8x64xf32>
    tpu.vector_store %arg20[%139, %c0_61, %c0_62], %142 {strides = array<i32>} : memref<6x8x64xf32, #tpu.memory_space<vmem>>, vector<1x8x64xf32>,
    %c3_i32 = arith.constant 3 : i32
    %143 = arith.index_cast %c3_i32 : i32 to index
    %c0_63 = arith.constant 0 : index
    %c0_64 = arith.constant 0 : index
    %144 = vector.load %arg18[%143, %c0_63, %c0_64] : memref<6x8x128xf32, #tpu.memory_space<vmem>>, vector<1x8x128xf32>
    %145 = vector.shape_cast %144 : vector<1x8x128xf32> to vector<8x128xf32>
    %146 = arith.addf %145, %123 : vector<8x128xf32>
    %147 = arith.addf %146, %134 : vector<8x128xf32>
    %148 = arith.negf %147 : vector<8x128xf32>
    %149 = math.exp %148 : vector<8x128xf32>
    %cst_65 = arith.constant 1.000000e+00 : f32
    %150 = vector.broadcast %cst_65 : f32 to vector<8x128xf32>
    %151 = arith.addf %150, %149 : vector<8x128xf32>
    %152 = arith.divf %150, %151 : vector<8x128xf32>
    %153 = vector.extract_strided_slice %152 {offsets = [0, 0], sizes = [8, 32], strides = [1, 1]} : vector<8x128xf32> to vector<8x32xf32>
    %154 = vector.extract_strided_slice %152 {offsets = [0, 32], sizes = [8, 32], strides = [1, 1]} : vector<8x128xf32> to vector<8x32xf32>
    %155 = vector.extract_strided_slice %152 {offsets = [0, 96], sizes = [8, 32], strides = [1, 1]} : vector<8x128xf32> to vector<8x32xf32>
    %156 = vector.extract_strided_slice %147 {offsets = [0, 64], sizes = [8, 32], strides = [1, 1]} : vector<8x128xf32> to vector<8x32xf32>
    %157 = math.tanh %156 : vector<8x32xf32>
    %158 = arith.mulf %154, %119 : vector<8x32xf32>
    %159 = arith.mulf %153, %157 : vector<8x32xf32>
    %160 = arith.addf %158, %159 : vector<8x32xf32>
    %161 = math.tanh %160 : vector<8x32xf32>
    %162 = arith.mulf %155, %161 : vector<8x32xf32>
    %cst_66 = arith.constant dense<0.000000e+00> : vector<8x256xf32>
    %163 = tpu.matmul %162, %0, %cst_66 {dimension_numbers = #tpu.dot_dimension_numbers<[1], [0], [0], [1], [0, 0, 1, 1], [], []>} : vector<8x32xf32>, vector<32x256xf32>, vector<8x256xf32> -> vector<8x256xf32>
    %164 = vector.extract_strided_slice %163 {offsets = [0, 0], sizes = [8, 128], strides = [1, 1]} : vector<8x256xf32> to vector<8x128xf32>
    %165 = vector.extract_strided_slice %163 {offsets = [0, 128], sizes = [8, 128], strides = [1, 1]} : vector<8x256xf32> to vector<8x128xf32>
    %cst_67 = arith.constant dense<0.000000e+00> : vector<8x64xf32>
    %166 = tpu.matmul %165, %1, %cst_67 {dimension_numbers = #tpu.dot_dimension_numbers<[1], [0], [0], [1], [0, 0, 1, 1], [], []>} : vector<8x128xf32>, vector<128x64xf32>, vector<8x64xf32> -> vector<8x64xf32>
    %cst_68 = arith.constant dense<0xFF800000> : vector<8xf32>
    %167 = vector.multi_reduction <maximumf>, %166, %cst_68 [1] : vector<8x64xf32> to vector<8xf32>
    %168 = vector.shape_cast %167 : vector<8xf32> to vector<8x1xf32>
    %169 = vector.broadcast %168 : vector<8x1xf32> to vector<8x64xf32>
    %170 = arith.subf %166, %169 : vector<8x64xf32>
    %171 = math.exp %170 : vector<8x64xf32>
    %cst_69 = arith.constant dense<0.000000e+00> : vector<8x64xf32>
    %172 = tpu.matmul %171, %2, %cst_69 {dimension_numbers = #tpu.dot_dimension_numbers<[1], [0], [0], [1], [0, 0, 1, 1], [], []>} : vector<8x64xf32>, vector<64x64xf32>, vector<8x64xf32> -> vector<8x64xf32>
    %173 = tpu.reciprocal %172 : vector<8x64xf32> -> vector<8x64xf32>
    %174 = arith.mulf %171, %173 : vector<8x64xf32>
    %cst_70 = arith.constant dense<0.000000e+00> : vector<8x128xf32>
    %175 = tpu.matmul %174, %3, %cst_70 {dimension_numbers = #tpu.dot_dimension_numbers<[1], [0], [0], [1], [0, 0, 1, 1], [], []>} : vector<8x64xf32>, vector<64x128xf32>, vector<8x128xf32> -> vector<8x128xf32>
    %176 = arith.index_cast %c3_i32 : i32 to index
    %c0_71 = arith.constant 0 : index
    %c0_72 = arith.constant 0 : index
    %177 = vector.load %arg19[%176, %c0_71, %c0_72] : memref<6x8x32xf32, #tpu.memory_space<vmem>>, vector<1x8x32xf32>
    %178 = vector.shape_cast %177 : vector<1x8x32xf32> to vector<8x32xf32>
    %179 = vector.shape_cast %162 : vector<8x32xf32> to vector<1x8x32xf32>
    tpu.vector_store %arg19[%176, %c0_71, %c0_72], %179 {strides = array<i32>} : memref<6x8x32xf32, #tpu.memory_space<vmem>>, vector<1x8x32xf32>,
    %180 = arith.index_cast %c3_i32 : i32 to index
    %c0_73 = arith.constant 0 : index
    %c0_74 = arith.constant 0 : index
    %181 = vector.load %arg20[%180, %c0_73, %c0_74] : memref<6x8x64xf32, #tpu.memory_space<vmem>>, vector<1x8x64xf32>
    %182 = vector.shape_cast %181 : vector<1x8x64xf32> to vector<8x64xf32>
    %183 = vector.shape_cast %174 : vector<8x64xf32> to vector<1x8x64xf32>
    tpu.vector_store %arg20[%180, %c0_73, %c0_74], %183 {strides = array<i32>} : memref<6x8x64xf32, #tpu.memory_space<vmem>>, vector<1x8x64xf32>,
    %c4_i32 = arith.constant 4 : i32
    %184 = arith.index_cast %c4_i32 : i32 to index
    %c0_75 = arith.constant 0 : index
    %c0_76 = arith.constant 0 : index
    %185 = vector.load %arg18[%184, %c0_75, %c0_76] : memref<6x8x128xf32, #tpu.memory_space<vmem>>, vector<1x8x128xf32>
    %186 = vector.shape_cast %185 : vector<1x8x128xf32> to vector<8x128xf32>
    %187 = arith.addf %186, %164 : vector<8x128xf32>
    %188 = arith.addf %187, %175 : vector<8x128xf32>
    %189 = arith.negf %188 : vector<8x128xf32>
    %190 = math.exp %189 : vector<8x128xf32>
    %cst_77 = arith.constant 1.000000e+00 : f32
    %191 = vector.broadcast %cst_77 : f32 to vector<8x128xf32>
    %192 = arith.addf %191, %190 : vector<8x128xf32>
    %193 = arith.divf %191, %192 : vector<8x128xf32>
    %194 = vector.extract_strided_slice %193 {offsets = [0, 0], sizes = [8, 32], strides = [1, 1]} : vector<8x128xf32> to vector<8x32xf32>
    %195 = vector.extract_strided_slice %193 {offsets = [0, 32], sizes = [8, 32], strides = [1, 1]} : vector<8x128xf32> to vector<8x32xf32>
    %196 = vector.extract_strided_slice %193 {offsets = [0, 96], sizes = [8, 32], strides = [1, 1]} : vector<8x128xf32> to vector<8x32xf32>
    %197 = vector.extract_strided_slice %188 {offsets = [0, 64], sizes = [8, 32], strides = [1, 1]} : vector<8x128xf32> to vector<8x32xf32>
    %198 = math.tanh %197 : vector<8x32xf32>
    %199 = arith.mulf %195, %160 : vector<8x32xf32>
    %200 = arith.mulf %194, %198 : vector<8x32xf32>
    %201 = arith.addf %199, %200 : vector<8x32xf32>
    %202 = math.tanh %201 : vector<8x32xf32>
    %203 = arith.mulf %196, %202 : vector<8x32xf32>
    %cst_78 = arith.constant dense<0.000000e+00> : vector<8x256xf32>
    %204 = tpu.matmul %203, %0, %cst_78 {dimension_numbers = #tpu.dot_dimension_numbers<[1], [0], [0], [1], [0, 0, 1, 1], [], []>} : vector<8x32xf32>, vector<32x256xf32>, vector<8x256xf32> -> vector<8x256xf32>
    %205 = vector.extract_strided_slice %204 {offsets = [0, 0], sizes = [8, 128], strides = [1, 1]} : vector<8x256xf32> to vector<8x128xf32>
    %206 = vector.extract_strided_slice %204 {offsets = [0, 128], sizes = [8, 128], strides = [1, 1]} : vector<8x256xf32> to vector<8x128xf32>
    %cst_79 = arith.constant dense<0.000000e+00> : vector<8x64xf32>
    %207 = tpu.matmul %206, %1, %cst_79 {dimension_numbers = #tpu.dot_dimension_numbers<[1], [0], [0], [1], [0, 0, 1, 1], [], []>} : vector<8x128xf32>, vector<128x64xf32>, vector<8x64xf32> -> vector<8x64xf32>
    %cst_80 = arith.constant dense<0xFF800000> : vector<8xf32>
    %208 = vector.multi_reduction <maximumf>, %207, %cst_80 [1] : vector<8x64xf32> to vector<8xf32>
    %209 = vector.shape_cast %208 : vector<8xf32> to vector<8x1xf32>
    %210 = vector.broadcast %209 : vector<8x1xf32> to vector<8x64xf32>
    %211 = arith.subf %207, %210 : vector<8x64xf32>
    %212 = math.exp %211 : vector<8x64xf32>
    %cst_81 = arith.constant dense<0.000000e+00> : vector<8x64xf32>
    %213 = tpu.matmul %212, %2, %cst_81 {dimension_numbers = #tpu.dot_dimension_numbers<[1], [0], [0], [1], [0, 0, 1, 1], [], []>} : vector<8x64xf32>, vector<64x64xf32>, vector<8x64xf32> -> vector<8x64xf32>
    %214 = tpu.reciprocal %213 : vector<8x64xf32> -> vector<8x64xf32>
    %215 = arith.mulf %212, %214 : vector<8x64xf32>
    %cst_82 = arith.constant dense<0.000000e+00> : vector<8x128xf32>
    %216 = tpu.matmul %215, %3, %cst_82 {dimension_numbers = #tpu.dot_dimension_numbers<[1], [0], [0], [1], [0, 0, 1, 1], [], []>} : vector<8x64xf32>, vector<64x128xf32>, vector<8x128xf32> -> vector<8x128xf32>
    %217 = arith.index_cast %c4_i32 : i32 to index
    %c0_83 = arith.constant 0 : index
    %c0_84 = arith.constant 0 : index
    %218 = vector.load %arg19[%217, %c0_83, %c0_84] : memref<6x8x32xf32, #tpu.memory_space<vmem>>, vector<1x8x32xf32>
    %219 = vector.shape_cast %218 : vector<1x8x32xf32> to vector<8x32xf32>
    %220 = vector.shape_cast %203 : vector<8x32xf32> to vector<1x8x32xf32>
    tpu.vector_store %arg19[%217, %c0_83, %c0_84], %220 {strides = array<i32>} : memref<6x8x32xf32, #tpu.memory_space<vmem>>, vector<1x8x32xf32>,
    %221 = arith.index_cast %c4_i32 : i32 to index
    %c0_85 = arith.constant 0 : index
    %c0_86 = arith.constant 0 : index
    %222 = vector.load %arg20[%221, %c0_85, %c0_86] : memref<6x8x64xf32, #tpu.memory_space<vmem>>, vector<1x8x64xf32>
    %223 = vector.shape_cast %222 : vector<1x8x64xf32> to vector<8x64xf32>
    %224 = vector.shape_cast %215 : vector<8x64xf32> to vector<1x8x64xf32>
    tpu.vector_store %arg20[%221, %c0_85, %c0_86], %224 {strides = array<i32>} : memref<6x8x64xf32, #tpu.memory_space<vmem>>, vector<1x8x64xf32>,
    %c5_i32 = arith.constant 5 : i32
    %225 = arith.index_cast %c5_i32 : i32 to index
    %c0_87 = arith.constant 0 : index
    %c0_88 = arith.constant 0 : index
    %226 = vector.load %arg18[%225, %c0_87, %c0_88] : memref<6x8x128xf32, #tpu.memory_space<vmem>>, vector<1x8x128xf32>
    %227 = vector.shape_cast %226 : vector<1x8x128xf32> to vector<8x128xf32>
    %228 = arith.addf %227, %205 : vector<8x128xf32>
    %229 = arith.addf %228, %216 : vector<8x128xf32>
    %230 = arith.negf %229 : vector<8x128xf32>
    %231 = math.exp %230 : vector<8x128xf32>
    %cst_89 = arith.constant 1.000000e+00 : f32
    %232 = vector.broadcast %cst_89 : f32 to vector<8x128xf32>
    %233 = arith.addf %232, %231 : vector<8x128xf32>
    %234 = arith.divf %232, %233 : vector<8x128xf32>
    %235 = vector.extract_strided_slice %234 {offsets = [0, 0], sizes = [8, 32], strides = [1, 1]} : vector<8x128xf32> to vector<8x32xf32>
    %236 = vector.extract_strided_slice %234 {offsets = [0, 32], sizes = [8, 32], strides = [1, 1]} : vector<8x128xf32> to vector<8x32xf32>
    %237 = vector.extract_strided_slice %234 {offsets = [0, 96], sizes = [8, 32], strides = [1, 1]} : vector<8x128xf32> to vector<8x32xf32>
    %238 = vector.extract_strided_slice %229 {offsets = [0, 64], sizes = [8, 32], strides = [1, 1]} : vector<8x128xf32> to vector<8x32xf32>
    %239 = math.tanh %238 : vector<8x32xf32>
    %240 = arith.mulf %236, %201 : vector<8x32xf32>
    %241 = arith.mulf %235, %239 : vector<8x32xf32>
    %242 = arith.addf %240, %241 : vector<8x32xf32>
    %243 = math.tanh %242 : vector<8x32xf32>
    %244 = arith.mulf %237, %243 : vector<8x32xf32>
    %cst_90 = arith.constant dense<0.000000e+00> : vector<8x256xf32>
    %245 = tpu.matmul %244, %0, %cst_90 {dimension_numbers = #tpu.dot_dimension_numbers<[1], [0], [0], [1], [0, 0, 1, 1], [], []>} : vector<8x32xf32>, vector<32x256xf32>, vector<8x256xf32> -> vector<8x256xf32>
    %246 = vector.extract_strided_slice %245 {offsets = [0, 0], sizes = [8, 128], strides = [1, 1]} : vector<8x256xf32> to vector<8x128xf32>
    %247 = vector.extract_strided_slice %245 {offsets = [0, 128], sizes = [8, 128], strides = [1, 1]} : vector<8x256xf32> to vector<8x128xf32>
    %cst_91 = arith.constant dense<0.000000e+00> : vector<8x64xf32>
    %248 = tpu.matmul %247, %1, %cst_91 {dimension_numbers = #tpu.dot_dimension_numbers<[1], [0], [0], [1], [0, 0, 1, 1], [], []>} : vector<8x128xf32>, vector<128x64xf32>, vector<8x64xf32> -> vector<8x64xf32>
    %cst_92 = arith.constant dense<0xFF800000> : vector<8xf32>
    %249 = vector.multi_reduction <maximumf>, %248, %cst_92 [1] : vector<8x64xf32> to vector<8xf32>
    %250 = vector.shape_cast %249 : vector<8xf32> to vector<8x1xf32>
    %251 = vector.broadcast %250 : vector<8x1xf32> to vector<8x64xf32>
    %252 = arith.subf %248, %251 : vector<8x64xf32>
    %253 = math.exp %252 : vector<8x64xf32>
    %cst_93 = arith.constant dense<0.000000e+00> : vector<8x64xf32>
    %254 = tpu.matmul %253, %2, %cst_93 {dimension_numbers = #tpu.dot_dimension_numbers<[1], [0], [0], [1], [0, 0, 1, 1], [], []>} : vector<8x64xf32>, vector<64x64xf32>, vector<8x64xf32> -> vector<8x64xf32>
    %255 = tpu.reciprocal %254 : vector<8x64xf32> -> vector<8x64xf32>
    %256 = arith.mulf %253, %255 : vector<8x64xf32>
    %cst_94 = arith.constant dense<0.000000e+00> : vector<8x128xf32>
    %257 = tpu.matmul %256, %3, %cst_94 {dimension_numbers = #tpu.dot_dimension_numbers<[1], [0], [0], [1], [0, 0, 1, 1], [], []>} : vector<8x64xf32>, vector<64x128xf32>, vector<8x128xf32> -> vector<8x128xf32>
    %258 = arith.index_cast %c5_i32 : i32 to index
    %c0_95 = arith.constant 0 : index
    %c0_96 = arith.constant 0 : index
    %259 = vector.load %arg19[%258, %c0_95, %c0_96] : memref<6x8x32xf32, #tpu.memory_space<vmem>>, vector<1x8x32xf32>
    %260 = vector.shape_cast %259 : vector<1x8x32xf32> to vector<8x32xf32>
    %261 = vector.shape_cast %244 : vector<8x32xf32> to vector<1x8x32xf32>
    tpu.vector_store %arg19[%258, %c0_95, %c0_96], %261 {strides = array<i32>} : memref<6x8x32xf32, #tpu.memory_space<vmem>>, vector<1x8x32xf32>,
    %262 = arith.index_cast %c5_i32 : i32 to index
    %c0_97 = arith.constant 0 : index
    %c0_98 = arith.constant 0 : index
    %263 = vector.load %arg20[%262, %c0_97, %c0_98] : memref<6x8x64xf32, #tpu.memory_space<vmem>>, vector<1x8x64xf32>
    %264 = vector.shape_cast %263 : vector<1x8x64xf32> to vector<8x64xf32>
    %265 = vector.shape_cast %256 : vector<8x64xf32> to vector<1x8x64xf32>
    tpu.vector_store %arg20[%262, %c0_97, %c0_98], %265 {strides = array<i32>} : memref<6x8x64xf32, #tpu.memory_space<vmem>>, vector<1x8x64xf32>,
    %c6_i32 = arith.constant 6 : i32
    %c0_99 = arith.constant 0 : index
    %c0_100 = arith.constant 0 : index
    %c0_101 = arith.constant 0 : index
    %266 = vector.load %arg19[%c0_99, %c0_100, %c0_101] : memref<6x8x32xf32, #tpu.memory_space<vmem>>, vector<6x8x32xf32>
    %267 = vector.shape_cast %266 : vector<6x8x32xf32> to vector<48x32xf32>
    %c0_102 = arith.constant 0 : index
    %c0_103 = arith.constant 0 : index
    %268 = vector.load %arg9[%c0_102, %c0_103] : memref<32x32xf32, #tpu.memory_space<vmem>>, vector<32x32xf32>
    %cst_104 = arith.constant dense<0.000000e+00> : vector<48x32xf32>
    %269 = tpu.matmul %267, %268, %cst_104 {dimension_numbers = #tpu.dot_dimension_numbers<[1], [0], [0], [1], [0, 0, 1, 1], [], []>} : vector<48x32xf32>, vector<32x32xf32>, vector<48x32xf32> -> vector<48x32xf32>
    %270 = vector.shape_cast %269 : vector<48x32xf32> to vector<6x8x32xf32>
    %271 = vector.shape_cast %270 : vector<6x8x32xf32> to vector<6x8x1x32xf32>
    %c0_105 = arith.constant 0 : index
    %c0_106 = arith.constant 0 : index
    %c0_107 = arith.constant 0 : index
    %272 = vector.load %arg1[%c0_105, %c0_106, %c0_107] : memref<8x8x32xf32, #tpu.memory_space<vmem>>, vector<8x8x32xf32>
    %273 = vector.shape_cast %272 : vector<8x8x32xf32> to vector<1x8x8x32xf32>
    %274 = vector.broadcast %271 : vector<6x8x1x32xf32> to vector<6x8x8x32xf32>
    %275 = vector.broadcast %273 : vector<1x8x8x32xf32> to vector<6x8x8x32xf32>
    %276 = arith.mulf %274, %275 : vector<6x8x8x32xf32>
    %cst_108 = arith.constant dense<0.000000e+00> : vector<6x8x8xf32>
    %277 = vector.multi_reduction <add>, %276, %cst_108 [3] : vector<6x8x8x32xf32> to vector<6x8x8xf32>
    %cst_109 = arith.constant dense<0xFF800000> : vector<6x8xf32>
    %278 = vector.multi_reduction <maximumf>, %277, %cst_109 [2] : vector<6x8x8xf32> to vector<6x8xf32>
    %279 = vector.shape_cast %278 : vector<6x8xf32> to vector<6x8x1xf32>
    %280 = vector.broadcast %279 : vector<6x8x1xf32> to vector<6x8x8xf32>
    %281 = arith.subf %277, %280 : vector<6x8x8xf32>
    %282 = math.exp %281 : vector<6x8x8xf32>
    %cst_110 = arith.constant dense<0.000000e+00> : vector<6x8xf32>
    %283 = vector.multi_reduction <add>, %282, %cst_110 [2] : vector<6x8x8xf32> to vector<6x8xf32>
    %284 = vector.shape_cast %283 : vector<6x8xf32> to vector<6x8x1xf32>
    %285 = tpu.reciprocal %284 : vector<6x8x1xf32> -> vector<6x8x1xf32>
    %286 = vector.broadcast %285 : vector<6x8x1xf32> to vector<6x8x8xf32>
    %287 = arith.mulf %282, %286 : vector<6x8x8xf32>
    %c0_111 = arith.constant 0 : index
    %c0_112 = arith.constant 0 : index
    %c0_113 = arith.constant 0 : index
    %288 = vector.load %arg17[%c0_111, %c0_112, %c0_113] : memref<6x8x8xf32, #tpu.memory_space<vmem>>, vector<6x8x8xf32>
    tpu.vector_store %arg17[%c0_111, %c0_112, %c0_113], %287 {strides = array<i32>} : memref<6x8x8xf32, #tpu.memory_space<vmem>>, vector<6x8x8xf32>,
    %c0_114 = arith.constant 0 : index
    %c0_115 = arith.constant 0 : index
    %289 = vector.load %arg10[%c0_114, %c0_115] : memref<32x32xf32, #tpu.memory_space<vmem>>, vector<32x32xf32>
    %cst_116 = arith.constant dense<0.000000e+00> : vector<48x32xf32>
    %290 = tpu.matmul %267, %289, %cst_116 {dimension_numbers = #tpu.dot_dimension_numbers<[1], [0], [0], [1], [0, 0, 1, 1], [], []>} : vector<48x32xf32>, vector<32x32xf32>, vector<48x32xf32> -> vector<48x32xf32>
    %c0_117 = arith.constant 0 : index
    %c0_118 = arith.constant 0 : index
    %c0_119 = arith.constant 0 : index
    %291 = vector.load %arg20[%c0_117, %c0_118, %c0_119] : memref<6x8x64xf32, #tpu.memory_space<vmem>>, vector<6x8x64xf32>
    %292 = vector.shape_cast %291 : vector<6x8x64xf32> to vector<48x64xf32>
    %c0_120 = arith.constant 0 : index
    %c0_121 = arith.constant 0 : index
    %293 = vector.load %arg11[%c0_120, %c0_121] : memref<64x32xf32, #tpu.memory_space<vmem>>, vector<64x32xf32>
    %cst_122 = arith.constant dense<0.000000e+00> : vector<48x32xf32>
    %294 = tpu.matmul %292, %293, %cst_122 {dimension_numbers = #tpu.dot_dimension_numbers<[1], [0], [0], [1], [0, 0, 1, 1], [], []>} : vector<48x64xf32>, vector<64x32xf32>, vector<48x32xf32> -> vector<48x32xf32>
    %295 = arith.addf %290, %294 : vector<48x32xf32>
    %c0_123 = arith.constant 0 : index
    %c0_124 = arith.constant 0 : index
    %296 = vector.load %arg12[%c0_123, %c0_124] : memref<1x32xf32, #tpu.memory_space<vmem>>, vector<1x32xf32>
    %297 = vector.broadcast %296 : vector<1x32xf32> to vector<48x32xf32>
    %298 = arith.addf %295, %297 : vector<48x32xf32>
    %299 = vector.shape_cast %298 : vector<48x32xf32> to vector<6x8x32xf32>
    %c0_125 = arith.constant 0 : index
    %c0_126 = arith.constant 0 : index
    %c0_127 = arith.constant 0 : index
    %300 = vector.load %arg16[%c0_125, %c0_126, %c0_127] : memref<6x8x32xf32, #tpu.memory_space<vmem>>, vector<6x8x32xf32>
    tpu.vector_store %arg16[%c0_125, %c0_126, %c0_127], %299 {strides = array<i32>} : memref<6x8x32xf32, #tpu.memory_space<vmem>>, vector<6x8x32xf32>,
    return
  }
}

</mosaic_0001>

<llo_original>
// kernel: mem_decoder_forward.1
$region0: #{mem_decoder_forward.1}
  #allocation0 [shape = 'u32[]', space=smem, size = 0x4, offset = 0x4, fixed_abs, tag = 'smem constant byte address 0x4 - core index']
  #allocation1 [shape = 'u32[144,128]{1,0:T(1,128)}', space=vmem, size = 0x12000, scoped, tag = 'internal scratch']
  #allocation2 [shape = 'f32[6,8,128]{2,1,0:T(8,128)}', space=vmem, size = 0x6000, scoped, tag = 'scratch operand']
  #allocation3 [shape = 'f32[6,8,32]{2,1,0:T(8,128)}', space=vmem, size = 0x6000, scoped, tag = 'scratch operand']
  #allocation4 [shape = 'f32[6,8,64]{2,1,0:T(8,128)}', space=vmem, size = 0x6000, scoped, tag = 'scratch operand']
  %s0 = inlined_call_operand.vmem [shape: f32[6,8,32], index: 0, kind: input, shape index: {}]
  %s1 = inlined_call_operand.vmem [shape: f32[8,8,32], index: 1, kind: input, shape index: {}]
  %s2 = inlined_call_operand.vmem [shape: f32[32,128], index: 2, kind: input, shape index: {}]
  %s3 = inlined_call_operand.vmem [shape: f32[128,128], index: 3, kind: input, shape index: {}]
  %s4 = inlined_call_operand.vmem [shape: f32[32,256], index: 4, kind: input, shape index: {}]
  %s5 = inlined_call_operand.vmem [shape: f32[1,128], index: 5, kind: input, shape index: {}]
  %s6 = inlined_call_operand.vmem [shape: f32[128,64], index: 6, kind: input, shape index: {}]
  %s7 = inlined_call_operand.vmem [shape: f32[64,64], index: 7, kind: input, shape index: {}]
  %s8 = inlined_call_operand.vmem [shape: f32[64,128], index: 8, kind: input, shape index: {}]
  %s9 = inlined_call_operand.vmem [shape: f32[32,32], index: 9, kind: input, shape index: {}]
  %s10 = inlined_call_operand.vmem [shape: f32[32,32], index: 10, kind: input, shape index: {}]
  %s11 = inlined_call_operand.vmem [shape: f32[64,32], index: 11, kind: input, shape index: {}]
  %s12 = inlined_call_operand.vmem [shape: f32[1,32], index: 12, kind: input, shape index: {}]
  %s13 = inlined_call_operand.vmem [shape: f32[8,32], index: 13, kind: input, shape index: {}]
  %s14 = inlined_call_operand.vmem [shape: f32[8,32], index: 14, kind: input, shape index: {}]
  %s15 = inlined_call_operand.vmem [shape: f32[8,128], index: 15, kind: input, shape index: {}]
  %s16 = inlined_call_operand.hbm [shape: f32[6,8,32], index: 16, kind: output, shape index: {0}]
  %s17 = inlined_call_operand.hbm [shape: f32[6,8,8], index: 17, kind: output, shape index: {1}]
  %18 = xla_tuple %s16, %s17
  %s19 = sld [smem:[#allocation0]]
  $region82: #{mem_decoder_forward.1} parent=0
    _
  %s21 = ssub.s32 1, %s19
  %s22 = scalar_select 0, %s21, %s19
  $region1: #{mem_decoder_forward.1} parent=0
    #allocation5 [shape = 'u8[24576]{0}', space=vmem, size = 0x6000, scoped, tag = 'output window, operand 0, single buffered']
    #allocation6 [shape = 's32[1]{0}', space=sflag, size = 0x4, scoped, tag = 'scoped memory for mem_decoder_forward.1']
    #allocation7 [shape = 'u8[24576]{0}', space=vmem, size = 0x6000, scoped, tag = 'output window, operand 1, single buffered']
    #allocation8 [shape = 's32[1]{0}', space=sflag, size = 0x4, scoped, tag = 'scoped memory for mem_decoder_forward.1']
    %23 = vsyncpa [#allocation6], 0
    %24 = vsyncpa [#allocation8], 0
    // Predicated region
    $region2: #{mem_decoder_forward.1} parent=1 // pred_check
      _
    $region3: #{mem_decoder_forward.1} parent=1 // pred_check_branch
      %26 = sbr.rel (0) target = $region5
    $region4: #{mem_decoder_forward.1} parent=1 // pred_region
      _
    $region5: #{mem_decoder_forward.1} parent=1 // pred_fallthru
      _
    // Predicated region
    $region6: #{mem_decoder_forward.1} parent=1 // pred_check
      _
    $region7: #{mem_decoder_forward.1} parent=1 // pred_check_branch
      %28 = sbr.rel (0) target = $region9
    $region8: #{mem_decoder_forward.1} parent=1 // pred_region
      _
    $region9: #{mem_decoder_forward.1} parent=1 // pred_fallthru
      _
    // Predicated region
    $region10: #{mem_decoder_forward.1} parent=1 // pred_check
      _
    $region11: #{mem_decoder_forward.1} parent=1 // pred_check_branch
      %30 = sbr.rel (0) target = $region13
    $region12: #{mem_decoder_forward.1} parent=1 // pred_region
      _
    $region13: #{mem_decoder_forward.1} parent=1 // pred_fallthru
      _
    // Predicated region
    $region14: #{mem_decoder_forward.1} parent=1 // pred_check
      _
    $region15: #{mem_decoder_forward.1} parent=1 // pred_check_branch
      %32 = sbr.rel (0) target = $region17
    $region16: #{mem_decoder_forward.1} parent=1 // pred_region
      _
    $region17: #{mem_decoder_forward.1} parent=1 // pred_fallthru
      _
    // Predicated region
    $region18: #{mem_decoder_forward.1} parent=1 // pred_check
      _
    $region19: #{mem_decoder_forward.1} parent=1 // pred_check_branch
      %34 = sbr.rel (0) target = $region21
    $region20: #{mem_decoder_forward.1} parent=1 // pred_region
      _
    $region21: #{mem_decoder_forward.1} parent=1 // pred_fallthru
      _
    // Predicated region
    $region22: #{mem_decoder_forward.1} parent=1 // pred_check
      _
    $region23: #{mem_decoder_forward.1} parent=1 // pred_check_branch
      %36 = sbr.rel (0) target = $region25
    $region24: #{mem_decoder_forward.1} parent=1 // pred_region
      _
    $region25: #{mem_decoder_forward.1} parent=1 // pred_fallthru
      _
    // Predicated region
    $region26: #{mem_decoder_forward.1} parent=1 // pred_check
      _
    $region27: #{mem_decoder_forward.1} parent=1 // pred_check_branch
      %38 = sbr.rel (0) target = $region29
    $region28: #{mem_decoder_forward.1} parent=1 // pred_region
      _
    $region29: #{mem_decoder_forward.1} parent=1 // pred_fallthru
      _
    // Predicated region
    $region30: #{mem_decoder_forward.1} parent=1 // pred_check
      _
    $region31: #{mem_decoder_forward.1} parent=1 // pred_check_branch
      %40 = sbr.rel (0) target = $region33
    $region32: #{mem_decoder_forward.1} parent=1 // pred_region
      _
    $region33: #{mem_decoder_forward.1} parent=1 // pred_fallthru
      _
    // Predicated region
    $region34: #{mem_decoder_forward.1} parent=1 // pred_check
      _
    $region35: #{mem_decoder_forward.1} parent=1 // pred_check_branch
      %42 = sbr.rel (0) target = $region37
    $region36: #{mem_decoder_forward.1} parent=1 // pred_region
      _
    $region37: #{mem_decoder_forward.1} parent=1 // pred_fallthru
      _
    // Predicated region
    $region38: #{mem_decoder_forward.1} parent=1 // pred_check
      _
    $region39: #{mem_decoder_forward.1} parent=1 // pred_check_branch
      %44 = sbr.rel (0) target = $region41
    $region40: #{mem_decoder_forward.1} parent=1 // pred_region
      _
    $region41: #{mem_decoder_forward.1} parent=1 // pred_fallthru
      _
    // Predicated region
    $region42: #{mem_decoder_forward.1} parent=1 // pred_check
      _
    $region43: #{mem_decoder_forward.1} parent=1 // pred_check_branch
      %46 = sbr.rel (0) target = $region45
    $region44: #{mem_decoder_forward.1} parent=1 // pred_region
      _
    $region45: #{mem_decoder_forward.1} parent=1 // pred_fallthru
      _
    // Predicated region
    $region46: #{mem_decoder_forward.1} parent=1 // pred_check
      _
    $region47: #{mem_decoder_forward.1} parent=1 // pred_check_branch
      %48 = sbr.rel (0) target = $region49
    $region48: #{mem_decoder_forward.1} parent=1 // pred_region
      _
    $region49: #{mem_decoder_forward.1} parent=1 // pred_fallthru
      _
    // Predicated region
    $region50: #{mem_decoder_forward.1} parent=1 // pred_check
      _
    $region51: #{mem_decoder_forward.1} parent=1 // pred_check_branch
      %50 = sbr.rel (0) target = $region53
    $region52: #{mem_decoder_forward.1} parent=1 // pred_region
      _
    $region53: #{mem_decoder_forward.1} parent=1 // pred_fallthru
      _
    // Predicated region
    $region54: #{mem_decoder_forward.1} parent=1 // pred_check
      _
    $region55: #{mem_decoder_forward.1} parent=1 // pred_check_branch
      %52 = sbr.rel (0) target = $region57
    $region56: #{mem_decoder_forward.1} parent=1 // pred_region
      _
    $region57: #{mem_decoder_forward.1} parent=1 // pred_fallthru
      _
    // Predicated region
    $region58: #{mem_decoder_forward.1} parent=1 // pred_check
      _
    $region59: #{mem_decoder_forward.1} parent=1 // pred_check_branch
      %54 = sbr.rel (0) target = $region61
    $region60: #{mem_decoder_forward.1} parent=1 // pred_region
      _
    $region61: #{mem_decoder_forward.1} parent=1 // pred_fallthru
      _
    // Predicated region
    $region62: #{mem_decoder_forward.1} parent=1 // pred_check
      _
    $region63: #{mem_decoder_forward.1} parent=1 // pred_check_branch
      %56 = sbr.rel (0) target = $region65
    $region64: #{mem_decoder_forward.1} parent=1 // pred_region
      _
    $region65: #{mem_decoder_forward.1} parent=1 // pred_fallthru
      _
    %v57 = vld [vmem:[%s4] sm:$0xff]
    %v58 = vld [vmem:[%s4 + $0x8] sm:$0xff]
    %v59 = vld [vmem:[%s4 + $0x10] sm:$0xff]
    %v60 = vld [vmem:[%s4 + $0x18] sm:$0xff]
    %v61 = vld [vmem:[%s4 + $0x20] sm:$0xff]
    %v62 = vld [vmem:[%s4 + $0x28] sm:$0xff]
    %v63 = vld [vmem:[%s4 + $0x30] sm:$0xff]
    %v64 = vld [vmem:[%s4 + $0x38] sm:$0xff]
    %v65 = vld [vmem:[%s6] sm:$0xff]
    %v66 = vld [vmem:[%s6 + $0x8] sm:$0xff]
    %v67 = vld [vmem:[%s6 + $0x10] sm:$0xff]
    %v68 = vld [vmem:[%s6 + $0x18] sm:$0xff]
    %v69 = vld [vmem:[%s6 + $0x20] sm:$0xff]
    %v70 = vld [vmem:[%s6 + $0x28] sm:$0xff]
    %v71 = vld [vmem:[%s6 + $0x30] sm:$0xff]
    %v72 = vld [vmem:[%s6 + $0x38] sm:$0xff]
    %v73 = vld [vmem:[%s6 + $0x40] sm:$0xff]
    %v74 = vld [vmem:[%s6 + $0x48] sm:$0xff]
    %v75 = vld [vmem:[%s6 + $0x50] sm:$0xff]
    %v76 = vld [vmem:[%s6 + $0x58] sm:$0xff]
    %v77 = vld [vmem:[%s6 + $0x60] sm:$0xff]
    %v78 = vld [vmem:[%s6 + $0x68] sm:$0xff]
    %v79 = vld [vmem:[%s6 + $0x70] sm:$0xff]
    %v80 = vld [vmem:[%s6 + $0x78] sm:$0xff]
    %v81 = vld [vmem:[%s7] sm:$0xff]
    %v82 = vld [vmem:[%s7 + $0x8] sm:$0xff]
    %v83 = vld [vmem:[%s7 + $0x10] sm:$0xff]
    %v84 = vld [vmem:[%s7 + $0x18] sm:$0xff]
    %v85 = vld [vmem:[%s7 + $0x20] sm:$0xff]
    %v86 = vld [vmem:[%s7 + $0x28] sm:$0xff]
    %v87 = vld [vmem:[%s7 + $0x30] sm:$0xff]
    %v88 = vld [vmem:[%s7 + $0x38] sm:$0xff]
    %v89 = vld [vmem:[%s8] sm:$0xff]
    %v90 = vld [vmem:[%s8 + $0x8] sm:$0xff]
    %v91 = vld [vmem:[%s8 + $0x10] sm:$0xff]
    %v92 = vld [vmem:[%s8 + $0x18] sm:$0xff]
    %v93 = vld [vmem:[%s8 + $0x20] sm:$0xff]
    %v94 = vld [vmem:[%s8 + $0x28] sm:$0xff]
    %v95 = vld [vmem:[%s8 + $0x30] sm:$0xff]
    %v96 = vld [vmem:[%s8 + $0x38] sm:$0xff]
    %v97 = vld [vmem:[%s0] sm:$0xff]
    %v98 = vld [vmem:[%s0 + $0x8] sm:$0xff]
    %v99 = vld [vmem:[%s0 + $0x10] sm:$0xff]
    %v100 = vld [vmem:[%s0 + $0x18] sm:$0xff]
    %v101 = vld [vmem:[%s0 + $0x20] sm:$0xff]
    %v102 = vld [vmem:[%s0 + $0x28] sm:$0xff]
    %v103 = vld [vmem:[%s2] sm:$0xff]
    %v104 = vld [vmem:[%s2 + $0x8] sm:$0xff]
    %v105 = vld [vmem:[%s2 + $0x10] sm:$0xff]
    %v106 = vld [vmem:[%s2 + $0x18] sm:$0xff]
    %v107 = vld [vmem:[%s5] sm:$0x1]
    %v109 = vlaneseq
    %v110 = vshrl.u32 %v109, 7
    %v111 = vsub.s32 0, %v110
    %v112 = vrot.slane %v107, %v111
    %vm114 = vcmask 261120
    %v116 = vsel %vm114, %v97, 0
    %v119 = vsel %vm114, %v98, 0
    %v122 = vsel %vm114, %v99, 0
    %v125 = vsel %vm114, %v100, 0
    %v128 = vsel %vm114, %v101, 0
    %v131 = vsel %vm114, %v102, 0
    %133 = vmatprep.subr.mxu0 0.0
    %134 = vmatpush1.msra.mxu0 %v103
    %135 = vmatprep.subr.mxu0 0.0
    %136 = vmatpush1.msra.mxu0 %v104
    %137 = vmatprep.subr.mxu0 0.0
    %138 = vmatpush1.msra.mxu0 %v105
    %139 = vmatprep.subr.mxu0 0.0
    %140 = vmatpush1.msra.mxu0 %v106
    %141 = vmatprep.subr.mxu0 0.0
    %142 = vmatpush1.msra.mxu0 0.0
    %143 = vmatprep.subr.mxu0 0.0
    %144 = vmatpush1.msra.mxu0 0.0
    %145 = vmatprep.subr.mxu0 0.0
    %146 = vmatpush1.msra.mxu0 0.0
    %147 = vmatprep.subr.mxu0 0.0
    %148 = vmatpush1.msra.mxu0 0.0
    %149 = vmatprep.subr.mxu0 0.0
    %150 = vmatpush1.msra.mxu0 0.0
    %151 = vmatprep.subr.mxu0 0.0
    %152 = vmatpush1.msra.mxu0 0.0
    %153 = vmatprep.subr.mxu0 0.0
    %154 = vmatpush1.msra.mxu0 0.0
    %155 = vmatprep.subr.mxu0 0.0
    %156 = vmatpush1.msra.mxu0 0.0
    %157 = vmatprep.subr.mxu0 0.0
    %158 = vmatpush1.msra.mxu0 0.0
    %159 = vmatprep.subr.mxu0 0.0
    %160 = vmatpush1.msra.mxu0 0.0
    %161 = vmatprep.subr.mxu0 0.0
    %162 = vmatpush1.msra.mxu0 0.0
    %163 = vmatprep.subr.mxu0 0.0
    %164 = vmatpush1.msra.mxu0 0.0
    %165 = vmatprep.subr.mxu0 0.0
    %166 = vmatpush1.msra.mxu0 0.0
    %167 = vmatprep.subr.mxu0 0.0
    %168 = vmatpush1.msra.mxu0 0.0
    %169 = vmatprep.subr.mxu0 0.0
    %170 = vmatpush1.msra.mxu0 0.0
    %171 = vmatprep.subr.mxu0 0.0
    %172 = vmatpush1.msra.mxu0 0.0
    %173 = vmatprep.subr.mxu0 0.0
    %174 = vmatpush1.msra.mxu0 0.0
    %175 = vmatprep.subr.mxu0 0.0
    %176 = vmatpush1.msra.mxu0 0.0
    %177 = vmatprep.subr.mxu0 0.0
    %178 = vmatpush1.msra.mxu0 0.0
    %179 = vmatprep.subr.mxu0 0.0
    %180 = vmatpush1.msra.mxu0 0.0
    %181 = vmatprep.subr.mxu0 0.0
    %182 = vmatpush1.msra.mxu0 0.0
    %183 = vmatprep.subr.mxu0 0.0
    %184 = vmatpush1.msra.mxu0 0.0
    %185 = vmatprep.subr.mxu0 0.0
    %186 = vmatpush1.msra.mxu0 0.0
    %187 = vmatprep.subr.mxu0 0.0
    %188 = vmatpush1.msra.mxu0 0.0
    %189 = vmatprep.subr.mxu0 0.0
    %190 = vmatpush1.msra.mxu0 0.0
    %191 = vmatprep.subr.mxu0 0.0
    %192 = vmatpush1.msra.mxu0 0.0
    %193 = vmatprep.subr.mxu0 0.0
    %194 = vmatpush1.msra.mxu0 0.0
    %195 = vmatprep.subr.mxu0 0.0
    %196 = vmatpush1.msra.mxu0 0.0
    %197 = vmatprep.mubr.f32.mxu0 0.0
    %198 = vmatmul.mubr.f32.gmra.mrb[0].mxu0 %v116
    %v199 = vpop.f32.mrb[0].mxu0
    %v200 = vadd.f32 %v112, %v199
    %v201 = vpop.f32.mrb[0].mxu0
    %202 = vmatprep.mubr.f32.mxu0 0.0
    %203 = vmatmul.mubr.f32.gmra.mrb[0].mxu0 %v119
    %v204 = vpop.f32.mrb[0].mxu0
    %v205 = vadd.f32 %v112, %v204
    %v206 = vpop.f32.mrb[0].mxu0
    %207 = vmatprep.mubr.f32.mxu0 0.0
    %208 = vmatmul.mubr.f32.gmra.mrb[0].mxu0 %v122
    %v209 = vpop.f32.mrb[0].mxu0
    %v210 = vadd.f32 %v112, %v209
    %v211 = vpop.f32.mrb[0].mxu0
    %212 = vmatprep.mubr.f32.mxu0 0.0
    %213 = vmatmul.mubr.f32.gmra.mrb[0].mxu0 %v125
    %v214 = vpop.f32.mrb[0].mxu0
    %v215 = vadd.f32 %v112, %v214
    %v216 = vpop.f32.mrb[0].mxu0
    %217 = vmatprep.mubr.f32.mxu0 0.0
    %218 = vmatmul.mubr.f32.gmra.mrb[0].mxu0 %v128
    %v219 = vpop.f32.mrb[0].mxu0
    %v220 = vadd.f32 %v112, %v219
    %v221 = vpop.f32.mrb[0].mxu0
    %222 = vmatprep.mubr.f32.mxu0 0.0
    %223 = vmatmul.mubr.f32.gmra.mrb[0].mxu0 %v131
    %v224 = vpop.f32.mrb[0].mxu0
    %v225 = vadd.f32 %v112, %v224
    %v226 = vpop.f32.mrb[0].mxu0
    %227 = vdwg.mxu0
    %228 = vst [vmem:[#allocation2] sm:$0xff] %v200
    %229 = vst [vmem:[#allocation2 + $0x8] sm:$0xff] %v205
    %230 = vst [vmem:[#allocation2 + $0x10] sm:$0xff] %v210
    %231 = vst [vmem:[#allocation2 + $0x18] sm:$0xff] %v215
    %232 = vst [vmem:[#allocation2 + $0x20] sm:$0xff] %v220
    %233 = vst [vmem:[#allocation2 + $0x28] sm:$0xff] %v225
    %v234 = vld [vmem:[%s13] sm:$0xff]
    %v236 = vsel %vm114, %v234, 0
    %238 = vmatprep.subr.mxu0 %v58
    %239 = vmatpush1.msra.mxu0 %v57
    %240 = vmatprep.subr.mxu0 %v60
    %241 = vmatpush1.msra.mxu0 %v59
    %242 = vmatprep.subr.mxu0 %v62
    %243 = vmatpush1.msra.mxu0 %v61
    %244 = vmatprep.subr.mxu0 %v64
    %245 = vmatpush1.msra.mxu0 %v63
    %246 = vmatprep.subr.mxu0 0.0
    %247 = vmatpush1.msra.mxu0 0.0
    %248 = vmatprep.subr.mxu0 0.0
    %249 = vmatpush1.msra.mxu0 0.0
    %250 = vmatprep.subr.mxu0 0.0
    %251 = vmatpush1.msra.mxu0 0.0
    %252 = vmatprep.subr.mxu0 0.0
    %253 = vmatpush1.msra.mxu0 0.0
    %254 = vmatprep.subr.mxu0 0.0
    %255 = vmatpush1.msra.mxu0 0.0
    %256 = vmatprep.subr.mxu0 0.0
    %257 = vmatpush1.msra.mxu0 0.0
    %258 = vmatprep.subr.mxu0 0.0
    %259 = vmatpush1.msra.mxu0 0.0
    %260 = vmatprep.subr.mxu0 0.0
    %261 = vmatpush1.msra.mxu0 0.0
    %262 = vmatprep.subr.mxu0 0.0
    %263 = vmatpush1.msra.mxu0 0.0
    %264 = vmatprep.subr.mxu0 0.0
    %265 = vmatpush1.msra.mxu0 0.0
    %266 = vmatprep.subr.mxu0 0.0
    %267 = vmatpush1.msra.mxu0 0.0
    %268 = vmatprep.subr.mxu0 0.0
    %269 = vmatpush1.msra.mxu0 0.0
    %270 = vmatprep.subr.mxu0 0.0
    %271 = vmatpush1.msra.mxu0 0.0
    %272 = vmatprep.subr.mxu0 0.0
    %273 = vmatpush1.msra.mxu0 0.0
    %274 = vmatprep.subr.mxu0 0.0
    %275 = vmatpush1.msra.mxu0 0.0
    %276 = vmatprep.subr.mxu0 0.0
    %277 = vmatpush1.msra.mxu0 0.0
    %278 = vmatprep.subr.mxu0 0.0
    %279 = vmatpush1.msra.mxu0 0.0
    %280 = vmatprep.subr.mxu0 0.0
    %281 = vmatpush1.msra.mxu0 0.0
    %282 = vmatprep.subr.mxu0 0.0
    %283 = vmatpush1.msra.mxu0 0.0
    %284 = vmatprep.subr.mxu0 0.0
    %285 = vmatpush1.msra.mxu0 0.0
    %286 = vmatprep.subr.mxu0 0.0
    %287 = vmatpush1.msra.mxu0 0.0
    %288 = vmatprep.subr.mxu0 0.0
    %289 = vmatpush1.msra.mxu0 0.0
    %290 = vmatprep.subr.mxu0 0.0
    %291 = vmatpush1.msra.mxu0 0.0
    %292 = vmatprep.subr.mxu0 0.0
    %293 = vmatpush1.msra.mxu0 0.0
    %294 = vmatprep.subr.mxu0 0.0
    %295 = vmatpush1.msra.mxu0 0.0
    %296 = vmatprep.subr.mxu0 0.0
    %297 = vmatpush1.msra.mxu0 0.0
    %298 = vmatprep.subr.mxu0 0.0
    %299 = vmatpush1.msra.mxu0 0.0
    %300 = vmatprep.subr.mxu0 0.0
    %301 = vmatpush1.msra.mxu0 0.0
    %302 = vmatprep.mubr.f32.mxu0 0.0
    %303 = vmatmul.mubr.f32.gmra.mrb[0].mxu0 %v236
    %v304 = vpop.f32.mrb[0].mxu0
    %v305 = vadd.f32 0.0, %v304
    %v306 = vpop.f32.mrb[0].mxu0
    %307 = vdwg.mxu0
    %v308 = vld [vmem:[%s15] sm:$0xff]
    %v309 = vld [vmem:[%s3] sm:$0xff]
    %v310 = vld [vmem:[%s3 + $0x8] sm:$0xff]
    %v311 = vld [vmem:[%s3 + $0x10] sm:$0xff]
    %v312 = vld [vmem:[%s3 + $0x18] sm:$0xff]
    %v313 = vld [vmem:[%s3 + $0x20] sm:$0xff]
    %v314 = vld [vmem:[%s3 + $0x28] sm:$0xff]
    %v315 = vld [vmem:[%s3 + $0x30] sm:$0xff]
    %v316 = vld [vmem:[%s3 + $0x38] sm:$0xff]
    %v317 = vld [vmem:[%s3 + $0x40] sm:$0xff]
    %v318 = vld [vmem:[%s3 + $0x48] sm:$0xff]
    %v319 = vld [vmem:[%s3 + $0x50] sm:$0xff]
    %v320 = vld [vmem:[%s3 + $0x58] sm:$0xff]
    %v321 = vld [vmem:[%s3 + $0x60] sm:$0xff]
    %v322 = vld [vmem:[%s3 + $0x68] sm:$0xff]
    %v323 = vld [vmem:[%s3 + $0x70] sm:$0xff]
    %v324 = vld [vmem:[%s3 + $0x78] sm:$0xff]
    %325 = vmatprep.subr.mxu0 0.0
    %326 = vmatpush1.msra.mxu0 %v309
    %327 = vmatprep.subr.mxu0 0.0
    %328 = vmatpush1.msra.mxu0 %v310
    %329 = vmatprep.subr.mxu0 0.0
    %330 = vmatpush1.msra.mxu0 %v311
    %331 = vmatprep.subr.mxu0 0.0
    %332 = vmatpush1.msra.mxu0 %v312
    %333 = vmatprep.subr.mxu0 0.0
    %334 = vmatpush1.msra.mxu0 %v313
    %335 = vmatprep.subr.mxu0 0.0
    %336 = vmatpush1.msra.mxu0 %v314
    %337 = vmatprep.subr.mxu0 0.0
    %338 = vmatpush1.msra.mxu0 %v315
    %339 = vmatprep.subr.mxu0 0.0
    %340 = vmatpush1.msra.mxu0 %v316
    %341 = vmatprep.subr.mxu0 0.0
    %342 = vmatpush1.msra.mxu0 %v317
    %343 = vmatprep.subr.mxu0 0.0
    %344 = vmatpush1.msra.mxu0 %v318
    %345 = vmatprep.subr.mxu0 0.0
    %346 = vmatpush1.msra.mxu0 %v319
    %347 = vmatprep.subr.mxu0 0.0
    %348 = vmatpush1.msra.mxu0 %v320
    %349 = vmatprep.subr.mxu0 0.0
    %350 = vmatpush1.msra.mxu0 %v321
    %351 = vmatprep.subr.mxu0 0.0
    %352 = vmatpush1.msra.mxu0 %v322
    %353 = vmatprep.subr.mxu0 0.0
    %354 = vmatpush1.msra.mxu0 %v323
    %355 = vmatprep.subr.mxu0 0.0
    %356 = vmatpush1.msra.mxu0 %v324
    %357 = vmatprep.subr.mxu0 0.0
    %358 = vmatpush1.msra.mxu0 0.0
    %359 = vmatprep.subr.mxu0 0.0
    %360 = vmatpush1.msra.mxu0 0.0
    %361 = vmatprep.subr.mxu0 0.0
    %362 = vmatpush1.msra.mxu0 0.0
    %363 = vmatprep.subr.mxu0 0.0
    %364 = vmatpush1.msra.mxu0 0.0
    %365 = vmatprep.subr.mxu0 0.0
    %366 = vmatpush1.msra.mxu0 0.0
    %367 = vmatprep.subr.mxu0 0.0
    %368 = vmatpush1.msra.mxu0 0.0
    %369 = vmatprep.subr.mxu0 0.0
    %370 = vmatpush1.msra.mxu0 0.0
    %371 = vmatprep.subr.mxu0 0.0
    %372 = vmatpush1.msra.mxu0 0.0
    %373 = vmatprep.subr.mxu0 0.0
    %374 = vmatpush1.msra.mxu0 0.0
    %375 = vmatprep.subr.mxu0 0.0
    %376 = vmatpush1.msra.mxu0 0.0
    %377 = vmatprep.subr.mxu0 0.0
    %378 = vmatpush1.msra.mxu0 0.0
    %379 = vmatprep.subr.mxu0 0.0
    %380 = vmatpush1.msra.mxu0 0.0
    %381 = vmatprep.subr.mxu0 0.0
    %382 = vmatpush1.msra.mxu0 0.0
    %383 = vmatprep.subr.mxu0 0.0
    %384 = vmatpush1.msra.mxu0 0.0
    %385 = vmatprep.subr.mxu0 0.0
    %386 = vmatpush1.msra.mxu0 0.0
    %387 = vmatprep.subr.mxu0 0.0
    %388 = vmatpush1.msra.mxu0 0.0
    %389 = vmatprep.mubr.f32.mxu0 0.0
    %390 = vmatmul.mubr.f32.gmra.mrb[0].mxu0 %v308
    %v391 = vpop.f32.mrb[0].mxu0
    %v392 = vadd.f32 0.0, %v391
    %v393 = vpop.f32.mrb[0].mxu0
    %394 = vdwg.mxu0
    %v395 = vld [vmem:[%s14] sm:$0xff]
    %v396 = vld [vmem:[#allocation2] sm:$0xff]
    %v397 = vadd.f32 %v396, %v305
    %v398 = vadd.f32 %v397, %v392
    %v399 = vxor.u32 %v398, 2147483648
    %v400 = vmul.f32 %v399, 1.442695
    %v401 = vpow.pop %v400
    %v402 = vadd.f32 %v401, 1.0
    %v403 = vrcp.pop %v402
    %v404 = vmul.f32 1.0, %v403
    %v405 = vtanh.pop %v398
    %407 = vrot.lane.b32.xlu0 %v395, 32
    %v408 = vpop.permute.xlu0 %407
    %v410 = vmul.f32 %v404, %v408
    %412 = vrot.lane.b32.xlu0 %v405, 64
    %v413 = vpop.permute.xlu0 %412
    %v415 = vmul.f32 %v404, %v413
    %417 = vrot.lane.b32.xlu0 %v415, 32
    %v418 = vpop.permute.xlu0 %417
    %v420 = vadd.f32 %v410, %v418
    %v421 = vtanh.pop %v420
    %423 = vrot.lane.b32.xlu0 %v421, 64
    %v424 = vpop.permute.xlu0 %423
    %v426 = vmul.f32 %v404, %v424
    %428 = vrot.lane.b32.xlu0 %v426, 32
    %v429 = vpop.permute.xlu0 %428
    %v430 = vsel %vm114, %v429, 0
    %432 = vmatprep.subr.mxu0 %v58
    %433 = vmatpush1.msra.mxu0 %v57
    %434 = vmatprep.subr.mxu0 %v60
    %435 = vmatpush1.msra.mxu0 %v59
    %436 = vmatprep.subr.mxu0 %v62
    %437 = vmatpush1.msra.mxu0 %v61
    %438 = vmatprep.subr.mxu0 %v64
    %439 = vmatpush1.msra.mxu0 %v63
    %440 = vmatprep.subr.mxu0 0.0
    %441 = vmatpush1.msra.mxu0 0.0
    %442 = vmatprep.subr.mxu0 0.0
    %443 = vmatpush1.msra.mxu0 0.0
    %444 = vmatprep.subr.mxu0 0.0
    %445 = vmatpush1.msra.mxu0 0.0
    %446 = vmatprep.subr.mxu0 0.0
    %447 = vmatpush1.msra.mxu0 0.0
    %448 = vmatprep.subr.mxu0 0.0
    %449 = vmatpush1.msra.mxu0 0.0
    %450 = vmatprep.subr.mxu0 0.0
    %451 = vmatpush1.msra.mxu0 0.0
    %452 = vmatprep.subr.mxu0 0.0
    %453 = vmatpush1.msra.mxu0 0.0
    %454 = vmatprep.subr.mxu0 0.0
    %455 = vmatpush1.msra.mxu0 0.0
    %456 = vmatprep.subr.mxu0 0.0
    %457 = vmatpush1.msra.mxu0 0.0
    %458 = vmatprep.subr.mxu0 0.0
    %459 = vmatpush1.msra.mxu0 0.0
    %460 = vmatprep.subr.mxu0 0.0
    %461 = vmatpush1.msra.mxu0 0.0
    %462 = vmatprep.subr.mxu0 0.0
    %463 = vmatpush1.msra.mxu0 0.0
    %464 = vmatprep.subr.mxu0 0.0
    %465 = vmatpush1.msra.mxu0 0.0
    %466 = vmatprep.subr.mxu0 0.0
    %467 = vmatpush1.msra.mxu0 0.0
    %468 = vmatprep.subr.mxu0 0.0
    %469 = vmatpush1.msra.mxu0 0.0
    %470 = vmatprep.subr.mxu0 0.0
    %471 = vmatpush1.msra.mxu0 0.0
    %472 = vmatprep.subr.mxu0 0.0
    %473 = vmatpush1.msra.mxu0 0.0
    %474 = vmatprep.subr.mxu0 0.0
    %475 = vmatpush1.msra.mxu0 0.0
    %476 = vmatprep.subr.mxu0 0.0
    %477 = vmatpush1.msra.mxu0 0.0
    %478 = vmatprep.subr.mxu0 0.0
    %479 = vmatpush1.msra.mxu0 0.0
    %480 = vmatprep.subr.mxu0 0.0
    %481 = vmatpush1.msra.mxu0 0.0
    %482 = vmatprep.subr.mxu0 0.0
    %483 = vmatpush1.msra.mxu0 0.0
    %484 = vmatprep.subr.mxu0 0.0
    %485 = vmatpush1.msra.mxu0 0.0
    %486 = vmatprep.subr.mxu0 0.0
    %487 = vmatpush1.msra.mxu0 0.0
    %488 = vmatprep.subr.mxu0 0.0
    %489 = vmatpush1.msra.mxu0 0.0
    %490 = vmatprep.subr.mxu0 0.0
    %491 = vmatpush1.msra.mxu0 0.0
    %492 = vmatprep.subr.mxu0 0.0
    %493 = vmatpush1.msra.mxu0 0.0
    %494 = vmatprep.subr.mxu0 0.0
    %495 = vmatpush1.msra.mxu0 0.0
    %496 = vmatprep.mubr.f32.mxu0 0.0
    %497 = vmatmul.mubr.f32.gmra.mrb[0].mxu0 %v430
    %v498 = vpop.f32.mrb[0].mxu0
    %v499 = vadd.f32 0.0, %v498
    %v500 = vpop.f32.mrb[0].mxu0
    %v501 = vadd.f32 0.0, %v500
    %502 = vdwg.mxu0
    %503 = vmatprep.subr.mxu0 0.0
    %504 = vmatpush1.msra.mxu0 %v65
    %505 = vmatprep.subr.mxu0 0.0
    %506 = vmatpush1.msra.mxu0 %v66
    %507 = vmatprep.subr.mxu0 0.0
    %508 = vmatpush1.msra.mxu0 %v67
    %509 = vmatprep.subr.mxu0 0.0
    %510 = vmatpush1.msra.mxu0 %v68
    %511 = vmatprep.subr.mxu0 0.0
    %512 = vmatpush1.msra.mxu0 %v69
    %513 = vmatprep.subr.mxu0 0.0
    %514 = vmatpush1.msra.mxu0 %v70
    %515 = vmatprep.subr.mxu0 0.0
    %516 = vmatpush1.msra.mxu0 %v71
    %517 = vmatprep.subr.mxu0 0.0
    %518 = vmatpush1.msra.mxu0 %v72
    %519 = vmatprep.subr.mxu0 0.0
    %520 = vmatpush1.msra.mxu0 %v73
    %521 = vmatprep.subr.mxu0 0.0
    %522 = vmatpush1.msra.mxu0 %v74
    %523 = vmatprep.subr.mxu0 0.0
    %524 = vmatpush1.msra.mxu0 %v75
    %525 = vmatprep.subr.mxu0 0.0
    %526 = vmatpush1.msra.mxu0 %v76
    %527 = vmatprep.subr.mxu0 0.0
    %528 = vmatpush1.msra.mxu0 %v77
    %529 = vmatprep.subr.mxu0 0.0
    %530 = vmatpush1.msra.mxu0 %v78
    %531 = vmatprep.subr.mxu0 0.0
    %532 = vmatpush1.msra.mxu0 %v79
    %533 = vmatprep.subr.mxu0 0.0
    %534 = vmatpush1.msra.mxu0 %v80
    %535 = vmatprep.subr.mxu0 0.0
    %536 = vmatpush1.msra.mxu0 0.0
    %537 = vmatprep.subr.mxu0 0.0
    %538 = vmatpush1.msra.mxu0 0.0
    %539 = vmatprep.subr.mxu0 0.0
    %540 = vmatpush1.msra.mxu0 0.0
    %541 = vmatprep.subr.mxu0 0.0
    %542 = vmatpush1.msra.mxu0 0.0
    %543 = vmatprep.subr.mxu0 0.0
    %544 = vmatpush1.msra.mxu0 0.0
    %545 = vmatprep.subr.mxu0 0.0
    %546 = vmatpush1.msra.mxu0 0.0
    %547 = vmatprep.subr.mxu0 0.0
    %548 = vmatpush1.msra.mxu0 0.0
    %549 = vmatprep.subr.mxu0 0.0
    %550 = vmatpush1.msra.mxu0 0.0
    %551 = vmatprep.subr.mxu0 0.0
    %552 = vmatpush1.msra.mxu0 0.0
    %553 = vmatprep.subr.mxu0 0.0
    %554 = vmatpush1.msra.mxu0 0.0
    %555 = vmatprep.subr.mxu0 0.0
    %556 = vmatpush1.msra.mxu0 0.0
    %557 = vmatprep.subr.mxu0 0.0
    %558 = vmatpush1.msra.mxu0 0.0
    %559 = vmatprep.subr.mxu0 0.0
    %560 = vmatpush1.msra.mxu0 0.0
    %561 = vmatprep.subr.mxu0 0.0
    %562 = vmatpush1.msra.mxu0 0.0
    %563 = vmatprep.subr.mxu0 0.0
    %564 = vmatpush1.msra.mxu0 0.0
    %565 = vmatprep.subr.mxu0 0.0
    %566 = vmatpush1.msra.mxu0 0.0
    %567 = vmatprep.mubr.f32.mxu0 0.0
    %568 = vmatmul.mubr.f32.gmra.mrb[0].mxu0 %v501
    %v569 = vpop.f32.mrb[0].mxu0
    %v570 = vadd.f32 0.0, %v569
    %v571 = vpop.f32.mrb[0].mxu0
    %572 = vdwg.mxu0
    %vm573 = vcmask 523264
    %v574 = vsel %vm573, %v570, -inf
    %575 = vmax.xlane.f32.xlu0 %v574
    %v576 = vpop.xlane.xlu0 %575
    %v577 = vsub.f32 %v570, %v576
    %v578 = vmul.f32 %v577, 1.442695
    %v579 = vpow.pop %v578
    %v581 = vsel %vm573, %v579, 0
    %583 = vmatprep.subr.mxu0 0.0
    %584 = vmatpush1.msra.mxu0 %v81
    %585 = vmatprep.subr.mxu0 0.0
    %586 = vmatpush1.msra.mxu0 %v82
    %587 = vmatprep.subr.mxu0 0.0
    %588 = vmatpush1.msra.mxu0 %v83
    %589 = vmatprep.subr.mxu0 0.0
    %590 = vmatpush1.msra.mxu0 %v84
    %591 = vmatprep.subr.mxu0 0.0
    %592 = vmatpush1.msra.mxu0 %v85
    %593 = vmatprep.subr.mxu0 0.0
    %594 = vmatpush1.msra.mxu0 %v86
    %595 = vmatprep.subr.mxu0 0.0
    %596 = vmatpush1.msra.mxu0 %v87
    %597 = vmatprep.subr.mxu0 0.0
    %598 = vmatpush1.msra.mxu0 %v88
    %599 = vmatprep.subr.mxu0 0.0
    %600 = vmatpush1.msra.mxu0 0.0
    %601 = vmatprep.subr.mxu0 0.0
    %602 = vmatpush1.msra.mxu0 0.0
    %603 = vmatprep.subr.mxu0 0.0
    %604 = vmatpush1.msra.mxu0 0.0
    %605 = vmatprep.subr.mxu0 0.0
    %606 = vmatpush1.msra.mxu0 0.0
    %607 = vmatprep.subr.mxu0 0.0
    %608 = vmatpush1.msra.mxu0 0.0
    %609 = vmatprep.subr.mxu0 0.0
    %610 = vmatpush1.msra.mxu0 0.0
    %611 = vmatprep.subr.mxu0 0.0
    %612 = vmatpush1.msra.mxu0 0.0
    %613 = vmatprep.subr.mxu0 0.0
    %614 = vmatpush1.msra.mxu0 0.0
    %615 = vmatprep.subr.mxu0 0.0
    %616 = vmatpush1.msra.mxu0 0.0
    %617 = vmatprep.subr.mxu0 0.0
    %618 = vmatpush1.msra.mxu0 0.0
    %619 = vmatprep.subr.mxu0 0.0
    %620 = vmatpush1.msra.mxu0 0.0
    %621 = vmatprep.subr.mxu0 0.0
    %622 = vmatpush1.msra.mxu0 0.0
    %623 = vmatprep.subr.mxu0 0.0
    %624 = vmatpush1.msra.mxu0 0.0
    %625 = vmatprep.subr.mxu0 0.0
    %626 = vmatpush1.msra.mxu0 0.0
    %627 = vmatprep.subr.mxu0 0.0
    %628 = vmatpush1.msra.mxu0 0.0
    %629 = vmatprep.subr.mxu0 0.0
    %630 = vmatpush1.msra.mxu0 0.0
    %631 = vmatprep.subr.mxu0 0.0
    %632 = vmatpush1.msra.mxu0 0.0
    %633 = vmatprep.subr.mxu0 0.0
    %634 = vmatpush1.msra.mxu0 0.0
    %635 = vmatprep.subr.mxu0 0.0
    %636 = vmatpush1.msra.mxu0 0.0
    %637 = vmatprep.subr.mxu0 0.0
    %638 = vmatpush1.msra.mxu0 0.0
    %639 = vmatprep.subr.mxu0 0.0
    %640 = vmatpush1.msra.mxu0 0.0
    %641 = vmatprep.subr.mxu0 0.0
    %642 = vmatpush1.msra.mxu0 0.0
    %643 = vmatprep.subr.mxu0 0.0
    %644 = vmatpush1.msra.mxu0 0.0
    %645 = vmatprep.subr.mxu0 0.0
    %646 = vmatpush1.msra.mxu0 0.0
    %647 = vmatprep.mubr.f32.mxu0 0.0
    %648 = vmatmul.mubr.f32.gmra.mrb[0].mxu0 %v581
    %v649 = vpop.f32.mrb[0].mxu0
    %v650 = vadd.f32 0.0, %v649
    %v651 = vpop.f32.mrb[0].mxu0
    %652 = vdwg.mxu0
    %v653 = vrcp.pop %v650
    %v654 = vmul.f32 %v579, %v653
    %v656 = vsel %vm573, %v654, 0
    %658 = vmatprep.subr.mxu0 0.0
    %659 = vmatpush1.msra.mxu0 %v89
    %660 = vmatprep.subr.mxu0 0.0
    %661 = vmatpush1.msra.mxu0 %v90
    %662 = vmatprep.subr.mxu0 0.0
    %663 = vmatpush1.msra.mxu0 %v91
    %664 = vmatprep.subr.mxu0 0.0
    %665 = vmatpush1.msra.mxu0 %v92
    %666 = vmatprep.subr.mxu0 0.0
    %667 = vmatpush1.msra.mxu0 %v93
    %668 = vmatprep.subr.mxu0 0.0
    %669 = vmatpush1.msra.mxu0 %v94
    %670 = vmatprep.subr.mxu0 0.0
    %671 = vmatpush1.msra.mxu0 %v95
    %672 = vmatprep.subr.mxu0 0.0
    %673 = vmatpush1.msra.mxu0 %v96
    %674 = vmatprep.subr.mxu0 0.0
    %675 = vmatpush1.msra.mxu0 0.0
    %676 = vmatprep.subr.mxu0 0.0
    %677 = vmatpush1.msra.mxu0 0.0
    %678 = vmatprep.subr.mxu0 0.0
    %679 = vmatpush1.msra.mxu0 0.0
    %680 = vmatprep.subr.mxu0 0.0
    %681 = vmatpush1.msra.mxu0 0.0
    %682 = vmatprep.subr.mxu0 0.0
    %683 = vmatpush1.msra.mxu0 0.0
    %684 = vmatprep.subr.mxu0 0.0
    %685 = vmatpush1.msra.mxu0 0.0
    %686 = vmatprep.subr.mxu0 0.0
    %687 = vmatpush1.msra.mxu0 0.0
    %688 = vmatprep.subr.mxu0 0.0
    %689 = vmatpush1.msra.mxu0 0.0
    %690 = vmatprep.subr.mxu0 0.0
    %691 = vmatpush1.msra.mxu0 0.0
    %692 = vmatprep.subr.mxu0 0.0
    %693 = vmatpush1.msra.mxu0 0.0
    %694 = vmatprep.subr.mxu0 0.0
    %695 = vmatpush1.msra.mxu0 0.0
    %696 = vmatprep.subr.mxu0 0.0
    %697 = vmatpush1.msra.mxu0 0.0
    %698 = vmatprep.subr.mxu0 0.0
    %699 = vmatpush1.msra.mxu0 0.0
    %700 = vmatprep.subr.mxu0 0.0
    %701 = vmatpush1.msra.mxu0 0.0
    %702 = vmatprep.subr.mxu0 0.0
    %703 = vmatpush1.msra.mxu0 0.0
    %704 = vmatprep.subr.mxu0 0.0
    %705 = vmatpush1.msra.mxu0 0.0
    %706 = vmatprep.subr.mxu0 0.0
    %707 = vmatpush1.msra.mxu0 0.0
    %708 = vmatprep.subr.mxu0 0.0
    %709 = vmatpush1.msra.mxu0 0.0
    %710 = vmatprep.subr.mxu0 0.0
    %711 = vmatpush1.msra.mxu0 0.0
    %712 = vmatprep.subr.mxu0 0.0
    %713 = vmatpush1.msra.mxu0 0.0
    %714 = vmatprep.subr.mxu0 0.0
    %715 = vmatpush1.msra.mxu0 0.0
    %716 = vmatprep.subr.mxu0 0.0
    %717 = vmatpush1.msra.mxu0 0.0
    %718 = vmatprep.subr.mxu0 0.0
    %719 = vmatpush1.msra.mxu0 0.0
    %720 = vmatprep.subr.mxu0 0.0
    %721 = vmatpush1.msra.mxu0 0.0
    %722 = vmatprep.mubr.f32.mxu0 0.0
    %723 = vmatmul.mubr.f32.gmra.mrb[0].mxu0 %v656
    %v724 = vpop.f32.mrb[0].mxu0
    %v725 = vadd.f32 0.0, %v724
    %v726 = vpop.f32.mrb[0].mxu0
    %727 = vdwg.mxu0
    %729 = vst.msk [vmem:[#allocation3] sm:$0xff] %vm114, %v429
    %730 = vst.msk [vmem:[#allocation4] sm:$0xff] %vm573, %v654
    %s731 = scalar_lea.vmem [#allocation2], 8
    %v732 = vld [vmem:[%s731] sm:$0xff]
    %v733 = vadd.f32 %v732, %v499
    %v734 = vadd.f32 %v733, %v725
    %v735 = vxor.u32 %v734, 2147483648
    %v736 = vmul.f32 %v735, 1.442695
    %v737 = vpow.pop %v736
    %v738 = vadd.f32 %v737, 1.0
    %v739 = vrcp.pop %v738
    %v740 = vmul.f32 1.0, %v739
    %v741 = vtanh.pop %v734
    %v742 = vmul.f32 %v740, %v420
    %744 = vrot.lane.b32.xlu0 %v741, 64
    %v745 = vpop.permute.xlu0 %744
    %v747 = vmul.f32 %v740, %v745
    %749 = vrot.lane.b32.xlu0 %v747, 32
    %v750 = vpop.permute.xlu0 %749
    %v752 = vadd.f32 %v742, %v750
    %v753 = vtanh.pop %v752
    %755 = vrot.lane.b32.xlu0 %v753, 64
    %v756 = vpop.permute.xlu0 %755
    %v758 = vmul.f32 %v740, %v756
    %760 = vrot.lane.b32.xlu0 %v758, 32
    %v761 = vpop.permute.xlu0 %760
    %v762 = vsel %vm114, %v761, 0
    %764 = vmatprep.subr.mxu0 %v58
    %765 = vmatpush1.msra.mxu0 %v57
    %766 = vmatprep.subr.mxu0 %v60
    %767 = vmatpush1.msra.mxu0 %v59
    %768 = vmatprep.subr.mxu0 %v62
    %769 = vmatpush1.msra.mxu0 %v61
    %770 = vmatprep.subr.mxu0 %v64
    %771 = vmatpush1.msra.mxu0 %v63
    %772 = vmatprep.subr.mxu0 0.0
    %773 = vmatpush1.msra.mxu0 0.0
    %774 = vmatprep.subr.mxu0 0.0
    %775 = vmatpush1.msra.mxu0 0.0
    %776 = vmatprep.subr.mxu0 0.0
    %777 = vmatpush1.msra.mxu0 0.0
    %778 = vmatprep.subr.mxu0 0.0
    %779 = vmatpush1.msra.mxu0 0.0
    %780 = vmatprep.subr.mxu0 0.0
    %781 = vmatpush1.msra.mxu0 0.0
    %782 = vmatprep.subr.mxu0 0.0
    %783 = vmatpush1.msra.mxu0 0.0
    %784 = vmatprep.subr.mxu0 0.0
    %785 = vmatpush1.msra.mxu0 0.0
    %786 = vmatprep.subr.mxu0 0.0
    %787 = vmatpush1.msra.mxu0 0.0
    %788 = vmatprep.subr.mxu0 0.0
    %789 = vmatpush1.msra.mxu0 0.0
    %790 = vmatprep.subr.mxu0 0.0
    %791 = vmatpush1.msra.mxu0 0.0
    %792 = vmatprep.subr.mxu0 0.0
    %793 = vmatpush1.msra.mxu0 0.0
    %794 = vmatprep.subr.mxu0 0.0
    %795 = vmatpush1.msra.mxu0 0.0
    %796 = vmatprep.subr.mxu0 0.0
    %797 = vmatpush1.msra.mxu0 0.0
    %798 = vmatprep.subr.mxu0 0.0
    %799 = vmatpush1.msra.mxu0 0.0
    %800 = vmatprep.subr.mxu0 0.0
    %801 = vmatpush1.msra.mxu0 0.0
    %802 = vmatprep.subr.mxu0 0.0
    %803 = vmatpush1.msra.mxu0 0.0
    %804 = vmatprep.subr.mxu0 0.0
    %805 = vmatpush1.msra.mxu0 0.0
    %806 = vmatprep.subr.mxu0 0.0
    %807 = vmatpush1.msra.mxu0 0.0
    %808 = vmatprep.subr.mxu0 0.0
    %809 = vmatpush1.msra.mxu0 0.0
    %810 = vmatprep.subr.mxu0 0.0
    %811 = vmatpush1.msra.mxu0 0.0
    %812 = vmatprep.subr.mxu0 0.0
    %813 = vmatpush1.msra.mxu0 0.0
    %814 = vmatprep.subr.mxu0 0.0
    %815 = vmatpush1.msra.mxu0 0.0
    %816 = vmatprep.subr.mxu0 0.0
    %817 = vmatpush1.msra.mxu0 0.0
    %818 = vmatprep.subr.mxu0 0.0
    %819 = vmatpush1.msra.mxu0 0.0
    %820 = vmatprep.subr.mxu0 0.0
    %821 = vmatpush1.msra.mxu0 0.0
    %822 = vmatprep.subr.mxu0 0.0
    %823 = vmatpush1.msra.mxu0 0.0
    %824 = vmatprep.subr.mxu0 0.0
    %825 = vmatpush1.msra.mxu0 0.0
    %826 = vmatprep.subr.mxu0 0.0
    %827 = vmatpush1.msra.mxu0 0.0
    %828 = vmatprep.mubr.f32.mxu0 0.0
    %829 = vmatmul.mubr.f32.gmra.mrb[0].mxu0 %v762
    %v830 = vpop.f32.mrb[0].mxu0
    %v831 = vadd.f32 0.0, %v830
    %v832 = vpop.f32.mrb[0].mxu0
    %v833 = vadd.f32 0.0, %v832
    %834 = vdwg.mxu0
    %835 = vmatprep.subr.mxu0 0.0
    %836 = vmatpush1.msra.mxu0 %v65
    %837 = vmatprep.subr.mxu0 0.0
    %838 = vmatpush1.msra.mxu0 %v66
    %839 = vmatprep.subr.mxu0 0.0
    %840 = vmatpush1.msra.mxu0 %v67
    %841 = vmatprep.subr.mxu0 0.0
    %842 = vmatpush1.msra.mxu0 %v68
    %843 = vmatprep.subr.mxu0 0.0
    %844 = vmatpush1.msra.mxu0 %v69
    %845 = vmatprep.subr.mxu0 0.0
    %846 = vmatpush1.msra.mxu0 %v70
    %847 = vmatprep.subr.mxu0 0.0
    %848 = vmatpush1.msra.mxu0 %v71
    %849 = vmatprep.subr.mxu0 0.0
    %850 = vmatpush1.msra.mxu0 %v72
    %851 = vmatprep.subr.mxu0 0.0
    %852 = vmatpush1.msra.mxu0 %v73
    %853 = vmatprep.subr.mxu0 0.0
    %854 = vmatpush1.msra.mxu0 %v74
    %855 = vmatprep.subr.mxu0 0.0
    %856 = vmatpush1.msra.mxu0 %v75
    %857 = vmatprep.subr.mxu0 0.0
    %858 = vmatpush1.msra.mxu0 %v76
    %859 = vmatprep.subr.mxu0 0.0
    %860 = vmatpush1.msra.mxu0 %v77
    %861 = vmatprep.subr.mxu0 0.0
    %862 = vmatpush1.msra.mxu0 %v78
    %863 = vmatprep.subr.mxu0 0.0
    %864 = vmatpush1.msra.mxu0 %v79
    %865 = vmatprep.subr.mxu0 0.0
    %866 = vmatpush1.msra.mxu0 %v80
    %867 = vmatprep.subr.mxu0 0.0
    %868 = vmatpush1.msra.mxu0 0.0
    %869 = vmatprep.subr.mxu0 0.0
    %870 = vmatpush1.msra.mxu0 0.0
    %871 = vmatprep.subr.mxu0 0.0
    %872 = vmatpush1.msra.mxu0 0.0
    %873 = vmatprep.subr.mxu0 0.0
    %874 = vmatpush1.msra.mxu0 0.0
    %875 = vmatprep.subr.mxu0 0.0
    %876 = vmatpush1.msra.mxu0 0.0
    %877 = vmatprep.subr.mxu0 0.0
    %878 = vmatpush1.msra.mxu0 0.0
    %879 = vmatprep.subr.mxu0 0.0
    %880 = vmatpush1.msra.mxu0 0.0
    %881 = vmatprep.subr.mxu0 0.0
    %882 = vmatpush1.msra.mxu0 0.0
    %883 = vmatprep.subr.mxu0 0.0
    %884 = vmatpush1.msra.mxu0 0.0
    %885 = vmatprep.subr.mxu0 0.0
    %886 = vmatpush1.msra.mxu0 0.0
    %887 = vmatprep.subr.mxu0 0.0
    %888 = vmatpush1.msra.mxu0 0.0
    %889 = vmatprep.subr.mxu0 0.0
    %890 = vmatpush1.msra.mxu0 0.0
    %891 = vmatprep.subr.mxu0 0.0
    %892 = vmatpush1.msra.mxu0 0.0
    %893 = vmatprep.subr.mxu0 0.0
    %894 = vmatpush1.msra.mxu0 0.0
    %895 = vmatprep.subr.mxu0 0.0
    %896 = vmatpush1.msra.mxu0 0.0
    %897 = vmatprep.subr.mxu0 0.0
    %898 = vmatpush1.msra.mxu0 0.0
    %899 = vmatprep.mubr.f32.mxu0 0.0
    %900 = vmatmul.mubr.f32.gmra.mrb[0].mxu0 %v833
    %v901 = vpop.f32.mrb[0].mxu0
    %v902 = vadd.f32 0.0, %v901
    %v903 = vpop.f32.mrb[0].mxu0
    %904 = vdwg.mxu0
    %v905 = vsel %vm573, %v902, -inf
    %906 = vmax.xlane.f32.xlu0 %v905
    %v907 = vpop.xlane.xlu0 %906
    %v908 = vsub.f32 %v902, %v907
    %v909 = vmul.f32 %v908, 1.442695
    %v910 = vpow.pop %v909
    %v912 = vsel %vm573, %v910, 0
    %914 = vmatprep.subr.mxu0 0.0
    %915 = vmatpush1.msra.mxu0 %v81
    %916 = vmatprep.subr.mxu0 0.0
    %917 = vmatpush1.msra.mxu0 %v82
    %918 = vmatprep.subr.mxu0 0.0
    %919 = vmatpush1.msra.mxu0 %v83
    %920 = vmatprep.subr.mxu0 0.0
    %921 = vmatpush1.msra.mxu0 %v84
    %922 = vmatprep.subr.mxu0 0.0
    %923 = vmatpush1.msra.mxu0 %v85
    %924 = vmatprep.subr.mxu0 0.0
    %925 = vmatpush1.msra.mxu0 %v86
    %926 = vmatprep.subr.mxu0 0.0
    %927 = vmatpush1.msra.mxu0 %v87
    %928 = vmatprep.subr.mxu0 0.0
    %929 = vmatpush1.msra.mxu0 %v88
    %930 = vmatprep.subr.mxu0 0.0
    %931 = vmatpush1.msra.mxu0 0.0
    %932 = vmatprep.subr.mxu0 0.0
    %933 = vmatpush1.msra.mxu0 0.0
    %934 = vmatprep.subr.mxu0 0.0
    %935 = vmatpush1.msra.mxu0 0.0
    %936 = vmatprep.subr.mxu0 0.0
    %937 = vmatpush1.msra.mxu0 0.0
    %938 = vmatprep.subr.mxu0 0.0
    %939 = vmatpush1.msra.mxu0 0.0
    %940 = vmatprep.subr.mxu0 0.0
    %941 = vmatpush1.msra.mxu0 0.0
    %942 = vmatprep.subr.mxu0 0.0
    %943 = vmatpush1.msra.mxu0 0.0
    %944 = vmatprep.subr.mxu0 0.0
    %945 = vmatpush1.msra.mxu0 0.0
    %946 = vmatprep.subr.mxu0 0.0
    %947 = vmatpush1.msra.mxu0 0.0
    %948 = vmatprep.subr.mxu0 0.0
    %949 = vmatpush1.msra.mxu0 0.0
    %950 = vmatprep.subr.mxu0 0.0
    %951 = vmatpush1.msra.mxu0 0.0
    %952 = vmatprep.subr.mxu0 0.0
    %953 = vmatpush1.msra.mxu0 0.0
    %954 = vmatprep.subr.mxu0 0.0
    %955 = vmatpush1.msra.mxu0 0.0
    %956 = vmatprep.subr.mxu0 0.0
    %957 = vmatpush1.msra.mxu0 0.0
    %958 = vmatprep.subr.mxu0 0.0
    %959 = vmatpush1.msra.mxu0 0.0
    %960 = vmatprep.subr.mxu0 0.0
    %961 = vmatpush1.msra.mxu0 0.0
    %962 = vmatprep.subr.mxu0 0.0
    %963 = vmatpush1.msra.mxu0 0.0
    %964 = vmatprep.subr.mxu0 0.0
    %965 = vmatpush1.msra.mxu0 0.0
    %966 = vmatprep.subr.mxu0 0.0
    %967 = vmatpush1.msra.mxu0 0.0
    %968 = vmatprep.subr.mxu0 0.0
    %969 = vmatpush1.msra.mxu0 0.0
    %970 = vmatprep.subr.mxu0 0.0
    %971 = vmatpush1.msra.mxu0 0.0
    %972 = vmatprep.subr.mxu0 0.0
    %973 = vmatpush1.msra.mxu0 0.0
    %974 = vmatprep.subr.mxu0 0.0
    %975 = vmatpush1.msra.mxu0 0.0
    %976 = vmatprep.subr.mxu0 0.0
    %977 = vmatpush1.msra.mxu0 0.0
    %978 = vmatprep.mubr.f32.mxu0 0.0
    %979 = vmatmul.mubr.f32.gmra.mrb[0].mxu0 %v912
    %v980 = vpop.f32.mrb[0].mxu0
    %v981 = vadd.f32 0.0, %v980
    %v982 = vpop.f32.mrb[0].mxu0
    %983 = vdwg.mxu0
    %v984 = vrcp.pop %v981
    %v985 = vmul.f32 %v910, %v984
    %v987 = vsel %vm573, %v985, 0
    %989 = vmatprep.subr.mxu0 0.0
    %990 = vmatpush1.msra.mxu0 %v89
    %991 = vmatprep.subr.mxu0 0.0
    %992 = vmatpush1.msra.mxu0 %v90
    %993 = vmatprep.subr.mxu0 0.0
    %994 = vmatpush1.msra.mxu0 %v91
    %995 = vmatprep.subr.mxu0 0.0
    %996 = vmatpush1.msra.mxu0 %v92
    %997 = vmatprep.subr.mxu0 0.0
    %998 = vmatpush1.msra.mxu0 %v93
    %999 = vmatprep.subr.mxu0 0.0
    %1000 = vmatpush1.msra.mxu0 %v94
    %1001 = vmatprep.subr.mxu0 0.0
    %1002 = vmatpush1.msra.mxu0 %v95
    %1003 = vmatprep.subr.mxu0 0.0
    %1004 = vmatpush1.msra.mxu0 %v96
    %1005 = vmatprep.subr.mxu0 0.0
    %1006 = vmatpush1.msra.mxu0 0.0
    %1007 = vmatprep.subr.mxu0 0.0
    %1008 = vmatpush1.msra.mxu0 0.0
    %1009 = vmatprep.subr.mxu0 0.0
    %1010 = vmatpush1.msra.mxu0 0.0
    %1011 = vmatprep.subr.mxu0 0.0
    %1012 = vmatpush1.msra.mxu0 0.0
    %1013 = vmatprep.subr.mxu0 0.0
    %1014 = vmatpush1.msra.mxu0 0.0
    %1015 = vmatprep.subr.mxu0 0.0
    %1016 = vmatpush1.msra.mxu0 0.0
    %1017 = vmatprep.subr.mxu0 0.0
    %1018 = vmatpush1.msra.mxu0 0.0
    %1019 = vmatprep.subr.mxu0 0.0
    %1020 = vmatpush1.msra.mxu0 0.0
    %1021 = vmatprep.subr.mxu0 0.0
    %1022 = vmatpush1.msra.mxu0 0.0
    %1023 = vmatprep.subr.mxu0 0.0
    %1024 = vmatpush1.msra.mxu0 0.0
    %1025 = vmatprep.subr.mxu0 0.0
    %1026 = vmatpush1.msra.mxu0 0.0
    %1027 = vmatprep.subr.mxu0 0.0
    %1028 = vmatpush1.msra.mxu0 0.0
    %1029 = vmatprep.subr.mxu0 0.0
    %1030 = vmatpush1.msra.mxu0 0.0
    %1031 = vmatprep.subr.mxu0 0.0
    %1032 = vmatpush1.msra.mxu0 0.0
    %1033 = vmatprep.subr.mxu0 0.0
    %1034 = vmatpush1.msra.mxu0 0.0
    %1035 = vmatprep.subr.mxu0 0.0
    %1036 = vmatpush1.msra.mxu0 0.0
    %1037 = vmatprep.subr.mxu0 0.0
    %1038 = vmatpush1.msra.mxu0 0.0
    %1039 = vmatprep.subr.mxu0 0.0
    %1040 = vmatpush1.msra.mxu0 0.0
    %1041 = vmatprep.subr.mxu0 0.0
    %1042 = vmatpush1.msra.mxu0 0.0
    %1043 = vmatprep.subr.mxu0 0.0
    %1044 = vmatpush1.msra.mxu0 0.0
    %1045 = vmatprep.subr.mxu0 0.0
    %1046 = vmatpush1.msra.mxu0 0.0
    %1047 = vmatprep.subr.mxu0 0.0
    %1048 = vmatpush1.msra.mxu0 0.0
    %1049 = vmatprep.subr.mxu0 0.0
    %1050 = vmatpush1.msra.mxu0 0.0
    %1051 = vmatprep.subr.mxu0 0.0
    %1052 = vmatpush1.msra.mxu0 0.0
    %1053 = vmatprep.mubr.f32.mxu0 0.0
    %1054 = vmatmul.mubr.f32.gmra.mrb[0].mxu0 %v987
    %v1055 = vpop.f32.mrb[0].mxu0
    %v1056 = vadd.f32 0.0, %v1055
    %v1057 = vpop.f32.mrb[0].mxu0
    %1058 = vdwg.mxu0
    %s1060 = scalar_lea.vmem [#allocation3], 8
    %1061 = vst.msk [vmem:[%s1060] sm:$0xff] %vm114, %v761
    %s1062 = scalar_lea.vmem [#allocation4], 8
    %1063 = vst.msk [vmem:[%s1062] sm:$0xff] %vm573, %v985
    %s1064 = scalar_lea.vmem [#allocation2], 16
    %v1065 = vld [vmem:[%s1064] sm:$0xff]
    %v1066 = vadd.f32 %v1065, %v831
    %v1067 = vadd.f32 %v1066, %v1056
    %v1068 = vxor.u32 %v1067, 2147483648
    %v1069 = vmul.f32 %v1068, 1.442695
    %v1070 = vpow.pop %v1069
    %v1071 = vadd.f32 %v1070, 1.0
    %v1072 = vrcp.pop %v1071
    %v1073 = vmul.f32 1.0, %v1072
    %v1074 = vtanh.pop %v1067
    %v1075 = vmul.f32 %v1073, %v752
    %1077 = vrot.lane.b32.xlu0 %v1074, 64
    %v1078 = vpop.permute.xlu0 %1077
    %v1080 = vmul.f32 %v1073, %v1078
    %1082 = vrot.lane.b32.xlu0 %v1080, 32
    %v1083 = vpop.permute.xlu0 %1082
    %v1085 = vadd.f32 %v1075, %v1083
    %v1086 = vtanh.pop %v1085
    %1088 = vrot.lane.b32.xlu0 %v1086, 64
    %v1089 = vpop.permute.xlu0 %1088
    %v1091 = vmul.f32 %v1073, %v1089
    %1093 = vrot.lane.b32.xlu0 %v1091, 32
    %v1094 = vpop.permute.xlu0 %1093
    %v1095 = vsel %vm114, %v1094, 0
    %1097 = vmatprep.subr.mxu0 %v58
    %1098 = vmatpush1.msra.mxu0 %v57
    %1099 = vmatprep.subr.mxu0 %v60
    %1100 = vmatpush1.msra.mxu0 %v59
    %1101 = vmatprep.subr.mxu0 %v62
    %1102 = vmatpush1.msra.mxu0 %v61
    %1103 = vmatprep.subr.mxu0 %v64
    %1104 = vmatpush1.msra.mxu0 %v63
    %1105 = vmatprep.subr.mxu0 0.0
    %1106 = vmatpush1.msra.mxu0 0.0
    %1107 = vmatprep.subr.mxu0 0.0
    %1108 = vmatpush1.msra.mxu0 0.0
    %1109 = vmatprep.subr.mxu0 0.0
    %1110 = vmatpush1.msra.mxu0 0.0
    %1111 = vmatprep.subr.mxu0 0.0
    %1112 = vmatpush1.msra.mxu0 0.0
    %1113 = vmatprep.subr.mxu0 0.0
    %1114 = vmatpush1.msra.mxu0 0.0
    %1115 = vmatprep.subr.mxu0 0.0
    %1116 = vmatpush1.msra.mxu0 0.0
    %1117 = vmatprep.subr.mxu0 0.0
    %1118 = vmatpush1.msra.mxu0 0.0
    %1119 = vmatprep.subr.mxu0 0.0
    %1120 = vmatpush1.msra.mxu0 0.0
    %1121 = vmatprep.subr.mxu0 0.0
    %1122 = vmatpush1.msra.mxu0 0.0
    %1123 = vmatprep.subr.mxu0 0.0
    %1124 = vmatpush1.msra.mxu0 0.0
    %1125 = vmatprep.subr.mxu0 0.0
    %1126 = vmatpush1.msra.mxu0 0.0
    %1127 = vmatprep.subr.mxu0 0.0
    %1128 = vmatpush1.msra.mxu0 0.0
    %1129 = vmatprep.subr.mxu0 0.0
    %1130 = vmatpush1.msra.mxu0 0.0
    %1131 = vmatprep.subr.mxu0 0.0
    %1132 = vmatpush1.msra.mxu0 0.0
    %1133 = vmatprep.subr.mxu0 0.0
    %1134 = vmatpush1.msra.mxu0 0.0
    %1135 = vmatprep.subr.mxu0 0.0
    %1136 = vmatpush1.msra.mxu0 0.0
    %1137 = vmatprep.subr.mxu0 0.0
    %1138 = vmatpush1.msra.mxu0 0.0
    %1139 = vmatprep.subr.mxu0 0.0
    %1140 = vmatpush1.msra.mxu0 0.0
    %1141 = vmatprep.subr.mxu0 0.0
    %1142 = vmatpush1.msra.mxu0 0.0
    %1143 = vmatprep.subr.mxu0 0.0
    %1144 = vmatpush1.msra.mxu0 0.0
    %1145 = vmatprep.subr.mxu0 0.0
    %1146 = vmatpush1.msra.mxu0 0.0
    %1147 = vmatprep.subr.mxu0 0.0
    %1148 = vmatpush1.msra.mxu0 0.0
    %1149 = vmatprep.subr.mxu0 0.0
    %1150 = vmatpush1.msra.mxu0 0.0
    %1151 = vmatprep.subr.mxu0 0.0
    %1152 = vmatpush1.msra.mxu0 0.0
    %1153 = vmatprep.subr.mxu0 0.0
    %1154 = vmatpush1.msra.mxu0 0.0
    %1155 = vmatprep.subr.mxu0 0.0
    %1156 = vmatpush1.msra.mxu0 0.0
    %1157 = vmatprep.subr.mxu0 0.0
    %1158 = vmatpush1.msra.mxu0 0.0
    %1159 = vmatprep.subr.mxu0 0.0
    %1160 = vmatpush1.msra.mxu0 0.0
    %1161 = vmatprep.mubr.f32.mxu0 0.0
    %1162 = vmatmul.mubr.f32.gmra.mrb[0].mxu0 %v1095
    %v1163 = vpop.f32.mrb[0].mxu0
    %v1164 = vadd.f32 0.0, %v1163
    %v1165 = vpop.f32.mrb[0].mxu0
    %v1166 = vadd.f32 0.0, %v1165
    %1167 = vdwg.mxu0
    %1168 = vmatprep.subr.mxu0 0.0
    %1169 = vmatpush1.msra.mxu0 %v65
    %1170 = vmatprep.subr.mxu0 0.0
    %1171 = vmatpush1.msra.mxu0 %v66
    %1172 = vmatprep.subr.mxu0 0.0
    %1173 = vmatpush1.msra.mxu0 %v67
    %1174 = vmatprep.subr.mxu0 0.0
    %1175 = vmatpush1.msra.mxu0 %v68
    %1176 = vmatprep.subr.mxu0 0.0
    %1177 = vmatpush1.msra.mxu0 %v69
    %1178 = vmatprep.subr.mxu0 0.0
    %1179 = vmatpush1.msra.mxu0 %v70
    %1180 = vmatprep.subr.mxu0 0.0
    %1181 = vmatpush1.msra.mxu0 %v71
    %1182 = vmatprep.subr.mxu0 0.0
    %1183 = vmatpush1.msra.mxu0 %v72
    %1184 = vmatprep.subr.mxu0 0.0
    %1185 = vmatpush1.msra.mxu0 %v73
    %1186 = vmatprep.subr.mxu0 0.0
    %1187 = vmatpush1.msra.mxu0 %v74
    %1188 = vmatprep.subr.mxu0 0.0
    %1189 = vmatpush1.msra.mxu0 %v75
    %1190 = vmatprep.subr.mxu0 0.0
    %1191 = vmatpush1.msra.mxu0 %v76
    %1192 = vmatprep.subr.mxu0 0.0
    %1193 = vmatpush1.msra.mxu0 %v77
    %1194 = vmatprep.subr.mxu0 0.0
    %1195 = vmatpush1.msra.mxu0 %v78
    %1196 = vmatprep.subr.mxu0 0.0
    %1197 = vmatpush1.msra.mxu0 %v79
    %1198 = vmatprep.subr.mxu0 0.0
    %1199 = vmatpush1.msra.mxu0 %v80
    %1200 = vmatprep.subr.mxu0 0.0
    %1201 = vmatpush1.msra.mxu0 0.0
    %1202 = vmatprep.subr.mxu0 0.0
    %1203 = vmatpush1.msra.mxu0 0.0
    %1204 = vmatprep.subr.mxu0 0.0
    %1205 = vmatpush1.msra.mxu0 0.0
    %1206 = vmatprep.subr.mxu0 0.0
    %1207 = vmatpush1.msra.mxu0 0.0
    %1208 = vmatprep.subr.mxu0 0.0
    %1209 = vmatpush1.msra.mxu0 0.0
    %1210 = vmatprep.subr.mxu0 0.0
    %1211 = vmatpush1.msra.mxu0 0.0
    %1212 = vmatprep.subr.mxu0 0.0
    %1213 = vmatpush1.msra.mxu0 0.0
    %1214 = vmatprep.subr.mxu0 0.0
    %1215 = vmatpush1.msra.mxu0 0.0
    %1216 = vmatprep.subr.mxu0 0.0
    %1217 = vmatpush1.msra.mxu0 0.0
    %1218 = vmatprep.subr.mxu0 0.0
    %1219 = vmatpush1.msra.mxu0 0.0
    %1220 = vmatprep.subr.mxu0 0.0
    %1221 = vmatpush1.msra.mxu0 0.0
    %1222 = vmatprep.subr.mxu0 0.0
    %1223 = vmatpush1.msra.mxu0 0.0
    %1224 = vmatprep.subr.mxu0 0.0
    %1225 = vmatpush1.msra.mxu0 0.0
    %1226 = vmatprep.subr.mxu0 0.0
    %1227 = vmatpush1.msra.mxu0 0.0
    %1228 = vmatprep.subr.mxu0 0.0
    %1229 = vmatpush1.msra.mxu0 0.0
    %1230 = vmatprep.subr.mxu0 0.0
    %1231 = vmatpush1.msra.mxu0 0.0
    %1232 = vmatprep.mubr.f32.mxu0 0.0
    %1233 = vmatmul.mubr.f32.gmra.mrb[0].mxu0 %v1166
    %v1234 = vpop.f32.mrb[0].mxu0
    %v1235 = vadd.f32 0.0, %v1234
    %v1236 = vpop.f32.mrb[0].mxu0
    %1237 = vdwg.mxu0
    %v1238 = vsel %vm573, %v1235, -inf
    %1239 = vmax.xlane.f32.xlu0 %v1238
    %v1240 = vpop.xlane.xlu0 %1239
    %v1241 = vsub.f32 %v1235, %v1240
    %v1242 = vmul.f32 %v1241, 1.442695
    %v1243 = vpow.pop %v1242
    %v1245 = vsel %vm573, %v1243, 0
    %1247 = vmatprep.subr.mxu0 0.0
    %1248 = vmatpush1.msra.mxu0 %v81
    %1249 = vmatprep.subr.mxu0 0.0
    %1250 = vmatpush1.msra.mxu0 %v82
    %1251 = vmatprep.subr.mxu0 0.0
    %1252 = vmatpush1.msra.mxu0 %v83
    %1253 = vmatprep.subr.mxu0 0.0
    %1254 = vmatpush1.msra.mxu0 %v84
    %1255 = vmatprep.subr.mxu0 0.0
    %1256 = vmatpush1.msra.mxu0 %v85
    %1257 = vmatprep.subr.mxu0 0.0
    %1258 = vmatpush1.msra.mxu0 %v86
    %1259 = vmatprep.subr.mxu0 0.0
    %1260 = vmatpush1.msra.mxu0 %v87
    %1261 = vmatprep.subr.mxu0 0.0
    %1262 = vmatpush1.msra.mxu0 %v88
    %1263 = vmatprep.subr.mxu0 0.0
    %1264 = vmatpush1.msra.mxu0 0.0
    %1265 = vmatprep.subr.mxu0 0.0
    %1266 = vmatpush1.msra.mxu0 0.0
    %1267 = vmatprep.subr.mxu0 0.0
    %1268 = vmatpush1.msra.mxu0 0.0
    %1269 = vmatprep.subr.mxu0 0.0
    %1270 = vmatpush1.msra.mxu0 0.0
    %1271 = vmatprep.subr.mxu0 0.0
    %1272 = vmatpush1.msra.mxu0 0.0
    %1273 = vmatprep.subr.mxu0 0.0
    %1274 = vmatpush1.msra.mxu0 0.0
    %1275 = vmatprep.subr.mxu0 0.0
    %1276 = vmatpush1.msra.mxu0 0.0
    %1277 = vmatprep.subr.mxu0 0.0
    %1278 = vmatpush1.msra.mxu0 0.0
    %1279 = vmatprep.subr.mxu0 0.0
    %1280 = vmatpush1.msra.mxu0 0.0
    %1281 = vmatprep.subr.mxu0 0.0
    %1282 = vmatpush1.msra.mxu0 0.0
    %1283 = vmatprep.subr.mxu0 0.0
    %1284 = vmatpush1.msra.mxu0 0.0
    %1285 = vmatprep.subr.mxu0 0.0
    %1286 = vmatpush1.msra.mxu0 0.0
    %1287 = vmatprep.subr.mxu0 0.0
    %1288 = vmatpush1.msra.mxu0 0.0
    %1289 = vmatprep.subr.mxu0 0.0
    %1290 = vmatpush1.msra.mxu0 0.0
    %1291 = vmatprep.subr.mxu0 0.0
    %1292 = vmatpush1.msra.mxu0 0.0
    %1293 = vmatprep.subr.mxu0 0.0
    %1294 = vmatpush1.msra.mxu0 0.0
    %1295 = vmatprep.subr.mxu0 0.0
    %1296 = vmatpush1.msra.mxu0 0.0
    %1297 = vmatprep.subr.mxu0 0.0
    %1298 = vmatpush1.msra.mxu0 0.0
    %1299 = vmatprep.subr.mxu0 0.0
    %1300 = vmatpush1.msra.mxu0 0.0
    %1301 = vmatprep.subr.mxu0 0.0
    %1302 = vmatpush1.msra.mxu0 0.0
    %1303 = vmatprep.subr.mxu0 0.0
    %1304 = vmatpush1.msra.mxu0 0.0
    %1305 = vmatprep.subr.mxu0 0.0
    %1306 = vmatpush1.msra.mxu0 0.0
    %1307 = vmatprep.subr.mxu0 0.0
    %1308 = vmatpush1.msra.mxu0 0.0
    %1309 = vmatprep.subr.mxu0 0.0
    %1310 = vmatpush1.msra.mxu0 0.0
    %1311 = vmatprep.mubr.f32.mxu0 0.0
    %1312 = vmatmul.mubr.f32.gmra.mrb[0].mxu0 %v1245
    %v1313 = vpop.f32.mrb[0].mxu0
    %v1314 = vadd.f32 0.0, %v1313
    %v1315 = vpop.f32.mrb[0].mxu0
    %1316 = vdwg.mxu0
    %v1317 = vrcp.pop %v1314
    %v1318 = vmul.f32 %v1243, %v1317
    %v1320 = vsel %vm573, %v1318, 0
    %1322 = vmatprep.subr.mxu0 0.0
    %1323 = vmatpush1.msra.mxu0 %v89
    %1324 = vmatprep.subr.mxu0 0.0
    %1325 = vmatpush1.msra.mxu0 %v90
    %1326 = vmatprep.subr.mxu0 0.0
    %1327 = vmatpush1.msra.mxu0 %v91
    %1328 = vmatprep.subr.mxu0 0.0
    %1329 = vmatpush1.msra.mxu0 %v92
    %1330 = vmatprep.subr.mxu0 0.0
    %1331 = vmatpush1.msra.mxu0 %v93
    %1332 = vmatprep.subr.mxu0 0.0
    %1333 = vmatpush1.msra.mxu0 %v94
    %1334 = vmatprep.subr.mxu0 0.0
    %1335 = vmatpush1.msra.mxu0 %v95
    %1336 = vmatprep.subr.mxu0 0.0
    %1337 = vmatpush1.msra.mxu0 %v96
    %1338 = vmatprep.subr.mxu0 0.0
    %1339 = vmatpush1.msra.mxu0 0.0
    %1340 = vmatprep.subr.mxu0 0.0
    %1341 = vmatpush1.msra.mxu0 0.0
    %1342 = vmatprep.subr.mxu0 0.0
    %1343 = vmatpush1.msra.mxu0 0.0
    %1344 = vmatprep.subr.mxu0 0.0
    %1345 = vmatpush1.msra.mxu0 0.0
    %1346 = vmatprep.subr.mxu0 0.0
    %1347 = vmatpush1.msra.mxu0 0.0
    %1348 = vmatprep.subr.mxu0 0.0
    %1349 = vmatpush1.msra.mxu0 0.0
    %1350 = vmatprep.subr.mxu0 0.0
    %1351 = vmatpush1.msra.mxu0 0.0
    %1352 = vmatprep.subr.mxu0 0.0
    %1353 = vmatpush1.msra.mxu0 0.0
    %1354 = vmatprep.subr.mxu0 0.0
    %1355 = vmatpush1.msra.mxu0 0.0
    %1356 = vmatprep.subr.mxu0 0.0
    %1357 = vmatpush1.msra.mxu0 0.0
    %1358 = vmatprep.subr.mxu0 0.0
    %1359 = vmatpush1.msra.mxu0 0.0
    %1360 = vmatprep.subr.mxu0 0.0
    %1361 = vmatpush1.msra.mxu0 0.0
    %1362 = vmatprep.subr.mxu0 0.0
    %1363 = vmatpush1.msra.mxu0 0.0
    %1364 = vmatprep.subr.mxu0 0.0
    %1365 = vmatpush1.msra.mxu0 0.0
    %1366 = vmatprep.subr.mxu0 0.0
    %1367 = vmatpush1.msra.mxu0 0.0
    %1368 = vmatprep.subr.mxu0 0.0
    %1369 = vmatpush1.msra.mxu0 0.0
    %1370 = vmatprep.subr.mxu0 0.0
    %1371 = vmatpush1.msra.mxu0 0.0
    %1372 = vmatprep.subr.mxu0 0.0
    %1373 = vmatpush1.msra.mxu0 0.0
    %1374 = vmatprep.subr.mxu0 0.0
    %1375 = vmatpush1.msra.mxu0 0.0
    %1376 = vmatprep.subr.mxu0 0.0
    %1377 = vmatpush1.msra.mxu0 0.0
    %1378 = vmatprep.subr.mxu0 0.0
    %1379 = vmatpush1.msra.mxu0 0.0
    %1380 = vmatprep.subr.mxu0 0.0
    %1381 = vmatpush1.msra.mxu0 0.0
    %1382 = vmatprep.subr.mxu0 0.0
    %1383 = vmatpush1.msra.mxu0 0.0
    %1384 = vmatprep.subr.mxu0 0.0
    %1385 = vmatpush1.msra.mxu0 0.0
    %1386 = vmatprep.mubr.f32.mxu0 0.0
    %1387 = vmatmul.mubr.f32.gmra.mrb[0].mxu0 %v1320
    %v1388 = vpop.f32.mrb[0].mxu0
    %v1389 = vadd.f32 0.0, %v1388
    %v1390 = vpop.f32.mrb[0].mxu0
    %1391 = vdwg.mxu0
    %s1393 = scalar_lea.vmem [#allocation3], 16
    %1394 = vst.msk [vmem:[%s1393] sm:$0xff] %vm114, %v1094
    %s1395 = scalar_lea.vmem [#allocation4], 16
    %1396 = vst.msk [vmem:[%s1395] sm:$0xff] %vm573, %v1318
    %s1397 = scalar_lea.vmem [#allocation2], 24
    %v1398 = vld [vmem:[%s1397] sm:$0xff]
    %v1399 = vadd.f32 %v1398, %v1164
    %v1400 = vadd.f32 %v1399, %v1389
    %v1401 = vxor.u32 %v1400, 2147483648
    %v1402 = vmul.f32 %v1401, 1.442695
    %v1403 = vpow.pop %v1402
    %v1404 = vadd.f32 %v1403, 1.0
    %v1405 = vrcp.pop %v1404
    %v1406 = vmul.f32 1.0, %v1405
    %v1407 = vtanh.pop %v1400
    %v1408 = vmul.f32 %v1406, %v1085
    %1410 = vrot.lane.b32.xlu0 %v1407, 64
    %v1411 = vpop.permute.xlu0 %1410
    %v1413 = vmul.f32 %v1406, %v1411
    %1415 = vrot.lane.b32.xlu0 %v1413, 32
    %v1416 = vpop.permute.xlu0 %1415
    %v1418 = vadd.f32 %v1408, %v1416
    %v1419 = vtanh.pop %v1418
    %1421 = vrot.lane.b32.xlu0 %v1419, 64
    %v1422 = vpop.permute.xlu0 %1421
    %v1424 = vmul.f32 %v1406, %v1422
    %1426 = vrot.lane.b32.xlu0 %v1424, 32
    %v1427 = vpop.permute.xlu0 %1426
    %v1428 = vsel %vm114, %v1427, 0
    %1430 = vmatprep.subr.mxu0 %v58
    %1431 = vmatpush1.msra.mxu0 %v57
    %1432 = vmatprep.subr.mxu0 %v60
    %1433 = vmatpush1.msra.mxu0 %v59
    %1434 = vmatprep.subr.mxu0 %v62
    %1435 = vmatpush1.msra.mxu0 %v61
    %1436 = vmatprep.subr.mxu0 %v64
    %1437 = vmatpush1.msra.mxu0 %v63
    %1438 = vmatprep.subr.mxu0 0.0
    %1439 = vmatpush1.msra.mxu0 0.0
    %1440 = vmatprep.subr.mxu0 0.0
    %1441 = vmatpush1.msra.mxu0 0.0
    %1442 = vmatprep.subr.mxu0 0.0
    %1443 = vmatpush1.msra.mxu0 0.0
    %1444 = vmatprep.subr.mxu0 0.0
    %1445 = vmatpush1.msra.mxu0 0.0
    %1446 = vmatprep.subr.mxu0 0.0
    %1447 = vmatpush1.msra.mxu0 0.0
    %1448 = vmatprep.subr.mxu0 0.0
    %1449 = vmatpush1.msra.mxu0 0.0
    %1450 = vmatprep.subr.mxu0 0.0
    %1451 = vmatpush1.msra.mxu0 0.0
    %1452 = vmatprep.subr.mxu0 0.0
    %1453 = vmatpush1.msra.mxu0 0.0
    %1454 = vmatprep.subr.mxu0 0.0
    %1455 = vmatpush1.msra.mxu0 0.0
    %1456 = vmatprep.subr.mxu0 0.0
    %1457 = vmatpush1.msra.mxu0 0.0
    %1458 = vmatprep.subr.mxu0 0.0
    %1459 = vmatpush1.msra.mxu0 0.0
    %1460 = vmatprep.subr.mxu0 0.0
    %1461 = vmatpush1.msra.mxu0 0.0
    %1462 = vmatprep.subr.mxu0 0.0
    %1463 = vmatpush1.msra.mxu0 0.0
    %1464 = vmatprep.subr.mxu0 0.0
    %1465 = vmatpush1.msra.mxu0 0.0
    %1466 = vmatprep.subr.mxu0 0.0
    %1467 = vmatpush1.msra.mxu0 0.0
    %1468 = vmatprep.subr.mxu0 0.0
    %1469 = vmatpush1.msra.mxu0 0.0
    %1470 = vmatprep.subr.mxu0 0.0
    %1471 = vmatpush1.msra.mxu0 0.0
    %1472 = vmatprep.subr.mxu0 0.0
    %1473 = vmatpush1.msra.mxu0 0.0
    %1474 = vmatprep.subr.mxu0 0.0
    %1475 = vmatpush1.msra.mxu0 0.0
    %1476 = vmatprep.subr.mxu0 0.0
    %1477 = vmatpush1.msra.mxu0 0.0
    %1478 = vmatprep.subr.mxu0 0.0
    %1479 = vmatpush1.msra.mxu0 0.0
    %1480 = vmatprep.subr.mxu0 0.0
    %1481 = vmatpush1.msra.mxu0 0.0
    %1482 = vmatprep.subr.mxu0 0.0
    %1483 = vmatpush1.msra.mxu0 0.0
    %1484 = vmatprep.subr.mxu0 0.0
    %1485 = vmatpush1.msra.mxu0 0.0
    %1486 = vmatprep.subr.mxu0 0.0
    %1487 = vmatpush1.msra.mxu0 0.0
    %1488 = vmatprep.subr.mxu0 0.0
    %1489 = vmatpush1.msra.mxu0 0.0
    %1490 = vmatprep.subr.mxu0 0.0
    %1491 = vmatpush1.msra.mxu0 0.0
    %1492 = vmatprep.subr.mxu0 0.0
    %1493 = vmatpush1.msra.mxu0 0.0
    %1494 = vmatprep.mubr.f32.mxu0 0.0
    %1495 = vmatmul.mubr.f32.gmra.mrb[0].mxu0 %v1428
    %v1496 = vpop.f32.mrb[0].mxu0
    %v1497 = vadd.f32 0.0, %v1496
    %v1498 = vpop.f32.mrb[0].mxu0
    %v1499 = vadd.f32 0.0, %v1498
    %1500 = vdwg.mxu0
    %1501 = vmatprep.subr.mxu0 0.0
    %1502 = vmatpush1.msra.mxu0 %v65
    %1503 = vmatprep.subr.mxu0 0.0
    %1504 = vmatpush1.msra.mxu0 %v66
    %1505 = vmatprep.subr.mxu0 0.0
    %1506 = vmatpush1.msra.mxu0 %v67
    %1507 = vmatprep.subr.mxu0 0.0
    %1508 = vmatpush1.msra.mxu0 %v68
    %1509 = vmatprep.subr.mxu0 0.0
    %1510 = vmatpush1.msra.mxu0 %v69
    %1511 = vmatprep.subr.mxu0 0.0
    %1512 = vmatpush1.msra.mxu0 %v70
    %1513 = vmatprep.subr.mxu0 0.0
    %1514 = vmatpush1.msra.mxu0 %v71
    %1515 = vmatprep.subr.mxu0 0.0
    %1516 = vmatpush1.msra.mxu0 %v72
    %1517 = vmatprep.subr.mxu0 0.0
    %1518 = vmatpush1.msra.mxu0 %v73
    %1519 = vmatprep.subr.mxu0 0.0
    %1520 = vmatpush1.msra.mxu0 %v74
    %1521 = vmatprep.subr.mxu0 0.0
    %1522 = vmatpush1.msra.mxu0 %v75
    %1523 = vmatprep.subr.mxu0 0.0
    %1524 = vmatpush1.msra.mxu0 %v76
    %1525 = vmatprep.subr.mxu0 0.0
    %1526 = vmatpush1.msra.mxu0 %v77
    %1527 = vmatprep.subr.mxu0 0.0
    %1528 = vmatpush1.msra.mxu0 %v78
    %1529 = vmatprep.subr.mxu0 0.0
    %1530 = vmatpush1.msra.mxu0 %v79
    %1531 = vmatprep.subr.mxu0 0.0
    %1532 = vmatpush1.msra.mxu0 %v80
    %1533 = vmatprep.subr.mxu0 0.0
    %1534 = vmatpush1.msra.mxu0 0.0
    %1535 = vmatprep.subr.mxu0 0.0
    %1536 = vmatpush1.msra.mxu0 0.0
    %1537 = vmatprep.subr.mxu0 0.0
    %1538 = vmatpush1.msra.mxu0 0.0
    %1539 = vmatprep.subr.mxu0 0.0
    %1540 = vmatpush1.msra.mxu0 0.0
    %1541 = vmatprep.subr.mxu0 0.0
    %1542 = vmatpush1.msra.mxu0 0.0
    %1543 = vmatprep.subr.mxu0 0.0
    %1544 = vmatpush1.msra.mxu0 0.0
    %1545 = vmatprep.subr.mxu0 0.0
    %1546 = vmatpush1.msra.mxu0 0.0
    %1547 = vmatprep.subr.mxu0 0.0
    %1548 = vmatpush1.msra.mxu0 0.0
    %1549 = vmatprep.subr.mxu0 0.0
    %1550 = vmatpush1.msra.mxu0 0.0
    %1551 = vmatprep.subr.mxu0 0.0
    %1552 = vmatpush1.msra.mxu0 0.0
    %1553 = vmatprep.subr.mxu0 0.0
    %1554 = vmatpush1.msra.mxu0 0.0
    %1555 = vmatprep.subr.mxu0 0.0
    %1556 = vmatpush1.msra.mxu0 0.0
    %1557 = vmatprep.subr.mxu0 0.0
    %1558 = vmatpush1.msra.mxu0 0.0
    %1559 = vmatprep.subr.mxu0 0.0
    %1560 = vmatpush1.msra.mxu0 0.0
    %1561 = vmatprep.subr.mxu0 0.0
    %1562 = vmatpush1.msra.mxu0 0.0
    %1563 = vmatprep.subr.mxu0 0.0
    %1564 = vmatpush1.msra.mxu0 0.0
    %1565 = vmatprep.mubr.f32.mxu0 0.0
    %1566 = vmatmul.mubr.f32.gmra.mrb[0].mxu0 %v1499
    %v1567 = vpop.f32.mrb[0].mxu0
    %v1568 = vadd.f32 0.0, %v1567
    %v1569 = vpop.f32.mrb[0].mxu0
    %1570 = vdwg.mxu0
    %v1571 = vsel %vm573, %v1568, -inf
    %1572 = vmax.xlane.f32.xlu0 %v1571
    %v1573 = vpop.xlane.xlu0 %1572
    %v1574 = vsub.f32 %v1568, %v1573
    %v1575 = vmul.f32 %v1574, 1.442695
    %v1576 = vpow.pop %v1575
    %v1578 = vsel %vm573, %v1576, 0
    %1580 = vmatprep.subr.mxu0 0.0
    %1581 = vmatpush1.msra.mxu0 %v81
    %1582 = vmatprep.subr.mxu0 0.0
    %1583 = vmatpush1.msra.mxu0 %v82
    %1584 = vmatprep.subr.mxu0 0.0
    %1585 = vmatpush1.msra.mxu0 %v83
    %1586 = vmatprep.subr.mxu0 0.0
    %1587 = vmatpush1.msra.mxu0 %v84
    %1588 = vmatprep.subr.mxu0 0.0
    %1589 = vmatpush1.msra.mxu0 %v85
    %1590 = vmatprep.subr.mxu0 0.0
    %1591 = vmatpush1.msra.mxu0 %v86
    %1592 = vmatprep.subr.mxu0 0.0
    %1593 = vmatpush1.msra.mxu0 %v87
    %1594 = vmatprep.subr.mxu0 0.0
    %1595 = vmatpush1.msra.mxu0 %v88
    %1596 = vmatprep.subr.mxu0 0.0
    %1597 = vmatpush1.msra.mxu0 0.0
    %1598 = vmatprep.subr.mxu0 0.0
    %1599 = vmatpush1.msra.mxu0 0.0
    %1600 = vmatprep.subr.mxu0 0.0
    %1601 = vmatpush1.msra.mxu0 0.0
    %1602 = vmatprep.subr.mxu0 0.0
    %1603 = vmatpush1.msra.mxu0 0.0
    %1604 = vmatprep.subr.mxu0 0.0
    %1605 = vmatpush1.msra.mxu0 0.0
    %1606 = vmatprep.subr.mxu0 0.0
    %1607 = vmatpush1.msra.mxu0 0.0
    %1608 = vmatprep.subr.mxu0 0.0
    %1609 = vmatpush1.msra.mxu0 0.0
    %1610 = vmatprep.subr.mxu0 0.0
    %1611 = vmatpush1.msra.mxu0 0.0
    %1612 = vmatprep.subr.mxu0 0.0
    %1613 = vmatpush1.msra.mxu0 0.0
    %1614 = vmatprep.subr.mxu0 0.0
    %1615 = vmatpush1.msra.mxu0 0.0
    %1616 = vmatprep.subr.mxu0 0.0
    %1617 = vmatpush1.msra.mxu0 0.0
    %1618 = vmatprep.subr.mxu0 0.0
    %1619 = vmatpush1.msra.mxu0 0.0
    %1620 = vmatprep.subr.mxu0 0.0
    %1621 = vmatpush1.msra.mxu0 0.0
    %1622 = vmatprep.subr.mxu0 0.0
    %1623 = vmatpush1.msra.mxu0 0.0
    %1624 = vmatprep.subr.mxu0 0.0
    %1625 = vmatpush1.msra.mxu0 0.0
    %1626 = vmatprep.subr.mxu0 0.0
    %1627 = vmatpush1.msra.mxu0 0.0
    %1628 = vmatprep.subr.mxu0 0.0
    %1629 = vmatpush1.msra.mxu0 0.0
    %1630 = vmatprep.subr.mxu0 0.0
    %1631 = vmatpush1.msra.mxu0 0.0
    %1632 = vmatprep.subr.mxu0 0.0
    %1633 = vmatpush1.msra.mxu0 0.0
    %1634 = vmatprep.subr.mxu0 0.0
    %1635 = vmatpush1.msra.mxu0 0.0
    %1636 = vmatprep.subr.mxu0 0.0
    %1637 = vmatpush1.msra.mxu0 0.0
    %1638 = vmatprep.subr.mxu0 0.0
    %1639 = vmatpush1.msra.mxu0 0.0
    %1640 = vmatprep.subr.mxu0 0.0
    %1641 = vmatpush1.msra.mxu0 0.0
    %1642 = vmatprep.subr.mxu0 0.0
    %1643 = vmatpush1.msra.mxu0 0.0
    %1644 = vmatprep.mubr.f32.mxu0 0.0
    %1645 = vmatmul.mubr.f32.gmra.mrb[0].mxu0 %v1578
    %v1646 = vpop.f32.mrb[0].mxu0
    %v1647 = vadd.f32 0.0, %v1646
    %v1648 = vpop.f32.mrb[0].mxu0
    %1649 = vdwg.mxu0
    %v1650 = vrcp.pop %v1647
    %v1651 = vmul.f32 %v1576, %v1650
    %v1653 = vsel %vm573, %v1651, 0
    %1655 = vmatprep.subr.mxu0 0.0
    %1656 = vmatpush1.msra.mxu0 %v89
    %1657 = vmatprep.subr.mxu0 0.0
    %1658 = vmatpush1.msra.mxu0 %v90
    %1659 = vmatprep.subr.mxu0 0.0
    %1660 = vmatpush1.msra.mxu0 %v91
    %1661 = vmatprep.subr.mxu0 0.0
    %1662 = vmatpush1.msra.mxu0 %v92
    %1663 = vmatprep.subr.mxu0 0.0
    %1664 = vmatpush1.msra.mxu0 %v93
    %1665 = vmatprep.subr.mxu0 0.0
    %1666 = vmatpush1.msra.mxu0 %v94
    %1667 = vmatprep.subr.mxu0 0.0
    %1668 = vmatpush1.msra.mxu0 %v95
    %1669 = vmatprep.subr.mxu0 0.0
    %1670 = vmatpush1.msra.mxu0 %v96
    %1671 = vmatprep.subr.mxu0 0.0
    %1672 = vmatpush1.msra.mxu0 0.0
    %1673 = vmatprep.subr.mxu0 0.0
    %1674 = vmatpush1.msra.mxu0 0.0
    %1675 = vmatprep.subr.mxu0 0.0
    %1676 = vmatpush1.msra.mxu0 0.0
    %1677 = vmatprep.subr.mxu0 0.0
    %1678 = vmatpush1.msra.mxu0 0.0
    %1679 = vmatprep.subr.mxu0 0.0
    %1680 = vmatpush1.msra.mxu0 0.0
    %1681 = vmatprep.subr.mxu0 0.0
    %1682 = vmatpush1.msra.mxu0 0.0
    %1683 = vmatprep.subr.mxu0 0.0
    %1684 = vmatpush1.msra.mxu0 0.0
    %1685 = vmatprep.subr.mxu0 0.0
    %1686 = vmatpush1.msra.mxu0 0.0
    %1687 = vmatprep.subr.mxu0 0.0
    %1688 = vmatpush1.msra.mxu0 0.0
    %1689 = vmatprep.subr.mxu0 0.0
    %1690 = vmatpush1.msra.mxu0 0.0
    %1691 = vmatprep.subr.mxu0 0.0
    %1692 = vmatpush1.msra.mxu0 0.0
    %1693 = vmatprep.subr.mxu0 0.0
    %1694 = vmatpush1.msra.mxu0 0.0
    %1695 = vmatprep.subr.mxu0 0.0
    %1696 = vmatpush1.msra.mxu0 0.0
    %1697 = vmatprep.subr.mxu0 0.0
    %1698 = vmatpush1.msra.mxu0 0.0
    %1699 = vmatprep.subr.mxu0 0.0
    %1700 = vmatpush1.msra.mxu0 0.0
    %1701 = vmatprep.subr.mxu0 0.0
    %1702 = vmatpush1.msra.mxu0 0.0
    %1703 = vmatprep.subr.mxu0 0.0
    %1704 = vmatpush1.msra.mxu0 0.0
    %1705 = vmatprep.subr.mxu0 0.0
    %1706 = vmatpush1.msra.mxu0 0.0
    %1707 = vmatprep.subr.mxu0 0.0
    %1708 = vmatpush1.msra.mxu0 0.0
    %1709 = vmatprep.subr.mxu0 0.0
    %1710 = vmatpush1.msra.mxu0 0.0
    %1711 = vmatprep.subr.mxu0 0.0
    %1712 = vmatpush1.msra.mxu0 0.0
    %1713 = vmatprep.subr.mxu0 0.0
    %1714 = vmatpush1.msra.mxu0 0.0
    %1715 = vmatprep.subr.mxu0 0.0
    %1716 = vmatpush1.msra.mxu0 0.0
    %1717 = vmatprep.subr.mxu0 0.0
    %1718 = vmatpush1.msra.mxu0 0.0
    %1719 = vmatprep.mubr.f32.mxu0 0.0
    %1720 = vmatmul.mubr.f32.gmra.mrb[0].mxu0 %v1653
    %v1721 = vpop.f32.mrb[0].mxu0
    %v1722 = vadd.f32 0.0, %v1721
    %v1723 = vpop.f32.mrb[0].mxu0
    %1724 = vdwg.mxu0
    %s1726 = scalar_lea.vmem [#allocation3], 24
    %1727 = vst.msk [vmem:[%s1726] sm:$0xff] %vm114, %v1427
    %s1728 = scalar_lea.vmem [#allocation4], 24
    %1729 = vst.msk [vmem:[%s1728] sm:$0xff] %vm573, %v1651
    %s1730 = scalar_lea.vmem [#allocation2], 32
    %v1731 = vld [vmem:[%s1730] sm:$0xff]
    %v1732 = vadd.f32 %v1731, %v1497
    %v1733 = vadd.f32 %v1732, %v1722
    %v1734 = vxor.u32 %v1733, 2147483648
    %v1735 = vmul.f32 %v1734, 1.442695
    %v1736 = vpow.pop %v1735
    %v1737 = vadd.f32 %v1736, 1.0
    %v1738 = vrcp.pop %v1737
    %v1739 = vmul.f32 1.0, %v1738
    %v1740 = vtanh.pop %v1733
    %v1741 = vmul.f32 %v1739, %v1418
    %1743 = vrot.lane.b32.xlu0 %v1740, 64
    %v1744 = vpop.permute.xlu0 %1743
    %v1746 = vmul.f32 %v1739, %v1744
    %1748 = vrot.lane.b32.xlu0 %v1746, 32
    %v1749 = vpop.permute.xlu0 %1748
    %v1751 = vadd.f32 %v1741, %v1749
    %v1752 = vtanh.pop %v1751
    %1754 = vrot.lane.b32.xlu0 %v1752, 64
    %v1755 = vpop.permute.xlu0 %1754
    %v1757 = vmul.f32 %v1739, %v1755
    %1759 = vrot.lane.b32.xlu0 %v1757, 32
    %v1760 = vpop.permute.xlu0 %1759
    %v1761 = vsel %vm114, %v1760, 0
    %1763 = vmatprep.subr.mxu0 %v58
    %1764 = vmatpush1.msra.mxu0 %v57
    %1765 = vmatprep.subr.mxu0 %v60
    %1766 = vmatpush1.msra.mxu0 %v59
    %1767 = vmatprep.subr.mxu0 %v62
    %1768 = vmatpush1.msra.mxu0 %v61
    %1769 = vmatprep.subr.mxu0 %v64
    %1770 = vmatpush1.msra.mxu0 %v63
    %1771 = vmatprep.subr.mxu0 0.0
    %1772 = vmatpush1.msra.mxu0 0.0
    %1773 = vmatprep.subr.mxu0 0.0
    %1774 = vmatpush1.msra.mxu0 0.0
    %1775 = vmatprep.subr.mxu0 0.0
    %1776 = vmatpush1.msra.mxu0 0.0
    %1777 = vmatprep.subr.mxu0 0.0
    %1778 = vmatpush1.msra.mxu0 0.0
    %1779 = vmatprep.subr.mxu0 0.0
    %1780 = vmatpush1.msra.mxu0 0.0
    %1781 = vmatprep.subr.mxu0 0.0
    %1782 = vmatpush1.msra.mxu0 0.0
    %1783 = vmatprep.subr.mxu0 0.0
    %1784 = vmatpush1.msra.mxu0 0.0
    %1785 = vmatprep.subr.mxu0 0.0
    %1786 = vmatpush1.msra.mxu0 0.0
    %1787 = vmatprep.subr.mxu0 0.0
    %1788 = vmatpush1.msra.mxu0 0.0
    %1789 = vmatprep.subr.mxu0 0.0
    %1790 = vmatpush1.msra.mxu0 0.0
    %1791 = vmatprep.subr.mxu0 0.0
    %1792 = vmatpush1.msra.mxu0 0.0
    %1793 = vmatprep.subr.mxu0 0.0
    %1794 = vmatpush1.msra.mxu0 0.0
    %1795 = vmatprep.subr.mxu0 0.0
    %1796 = vmatpush1.msra.mxu0 0.0
    %1797 = vmatprep.subr.mxu0 0.0
    %1798 = vmatpush1.msra.mxu0 0.0
    %1799 = vmatprep.subr.mxu0 0.0
    %1800 = vmatpush1.msra.mxu0 0.0
    %1801 = vmatprep.subr.mxu0 0.0
    %1802 = vmatpush1.msra.mxu0 0.0
    %1803 = vmatprep.subr.mxu0 0.0
    %1804 = vmatpush1.msra.mxu0 0.0
    %1805 = vmatprep.subr.mxu0 0.0
    %1806 = vmatpush1.msra.mxu0 0.0
    %1807 = vmatprep.subr.mxu0 0.0
    %1808 = vmatpush1.msra.mxu0 0.0
    %1809 = vmatprep.subr.mxu0 0.0
    %1810 = vmatpush1.msra.mxu0 0.0
    %1811 = vmatprep.subr.mxu0 0.0
    %1812 = vmatpush1.msra.mxu0 0.0
    %1813 = vmatprep.subr.mxu0 0.0
    %1814 = vmatpush1.msra.mxu0 0.0
    %1815 = vmatprep.subr.mxu0 0.0
    %1816 = vmatpush1.msra.mxu0 0.0
    %1817 = vmatprep.subr.mxu0 0.0
    %1818 = vmatpush1.msra.mxu0 0.0
    %1819 = vmatprep.subr.mxu0 0.0
    %1820 = vmatpush1.msra.mxu0 0.0
    %1821 = vmatprep.subr.mxu0 0.0
    %1822 = vmatpush1.msra.mxu0 0.0
    %1823 = vmatprep.subr.mxu0 0.0
    %1824 = vmatpush1.msra.mxu0 0.0
    %1825 = vmatprep.subr.mxu0 0.0
    %1826 = vmatpush1.msra.mxu0 0.0
    %1827 = vmatprep.mubr.f32.mxu0 0.0
    %1828 = vmatmul.mubr.f32.gmra.mrb[0].mxu0 %v1761
    %v1829 = vpop.f32.mrb[0].mxu0
    %v1830 = vadd.f32 0.0, %v1829
    %v1831 = vpop.f32.mrb[0].mxu0
    %v1832 = vadd.f32 0.0, %v1831
    %1833 = vdwg.mxu0
    %1834 = vmatprep.subr.mxu0 0.0
    %1835 = vmatpush1.msra.mxu0 %v65
    %1836 = vmatprep.subr.mxu0 0.0
    %1837 = vmatpush1.msra.mxu0 %v66
    %1838 = vmatprep.subr.mxu0 0.0
    %1839 = vmatpush1.msra.mxu0 %v67
    %1840 = vmatprep.subr.mxu0 0.0
    %1841 = vmatpush1.msra.mxu0 %v68
    %1842 = vmatprep.subr.mxu0 0.0
    %1843 = vmatpush1.msra.mxu0 %v69
    %1844 = vmatprep.subr.mxu0 0.0
    %1845 = vmatpush1.msra.mxu0 %v70
    %1846 = vmatprep.subr.mxu0 0.0
    %1847 = vmatpush1.msra.mxu0 %v71
    %1848 = vmatprep.subr.mxu0 0.0
    %1849 = vmatpush1.msra.mxu0 %v72
    %1850 = vmatprep.subr.mxu0 0.0
    %1851 = vmatpush1.msra.mxu0 %v73
    %1852 = vmatprep.subr.mxu0 0.0
    %1853 = vmatpush1.msra.mxu0 %v74
    %1854 = vmatprep.subr.mxu0 0.0
    %1855 = vmatpush1.msra.mxu0 %v75
    %1856 = vmatprep.subr.mxu0 0.0
    %1857 = vmatpush1.msra.mxu0 %v76
    %1858 = vmatprep.subr.mxu0 0.0
    %1859 = vmatpush1.msra.mxu0 %v77
    %1860 = vmatprep.subr.mxu0 0.0
    %1861 = vmatpush1.msra.mxu0 %v78
    %1862 = vmatprep.subr.mxu0 0.0
    %1863 = vmatpush1.msra.mxu0 %v79
    %1864 = vmatprep.subr.mxu0 0.0
    %1865 = vmatpush1.msra.mxu0 %v80
    %1866 = vmatprep.subr.mxu0 0.0
    %1867 = vmatpush1.msra.mxu0 0.0
    %1868 = vmatprep.subr.mxu0 0.0
    %1869 = vmatpush1.msra.mxu0 0.0
    %1870 = vmatprep.subr.mxu0 0.0
    %1871 = vmatpush1.msra.mxu0 0.0
    %1872 = vmatprep.subr.mxu0 0.0
    %1873 = vmatpush1.msra.mxu0 0.0
    %1874 = vmatprep.subr.mxu0 0.0
    %1875 = vmatpush1.msra.mxu0 0.0
    %1876 = vmatprep.subr.mxu0 0.0
    %1877 = vmatpush1.msra.mxu0 0.0
    %1878 = vmatprep.subr.mxu0 0.0
    %1879 = vmatpush1.msra.mxu0 0.0
    %1880 = vmatprep.subr.mxu0 0.0
    %1881 = vmatpush1.msra.mxu0 0.0
    %1882 = vmatprep.subr.mxu0 0.0
    %1883 = vmatpush1.msra.mxu0 0.0
    %1884 = vmatprep.subr.mxu0 0.0
    %1885 = vmatpush1.msra.mxu0 0.0
    %1886 = vmatprep.subr.mxu0 0.0
    %1887 = vmatpush1.msra.mxu0 0.0
    %1888 = vmatprep.subr.mxu0 0.0
    %1889 = vmatpush1.msra.mxu0 0.0
    %1890 = vmatprep.subr.mxu0 0.0
    %1891 = vmatpush1.msra.mxu0 0.0
    %1892 = vmatprep.subr.mxu0 0.0
    %1893 = vmatpush1.msra.mxu0 0.0
    %1894 = vmatprep.subr.mxu0 0.0
    %1895 = vmatpush1.msra.mxu0 0.0
    %1896 = vmatprep.subr.mxu0 0.0
    %1897 = vmatpush1.msra.mxu0 0.0
    %1898 = vmatprep.mubr.f32.mxu0 0.0
    %1899 = vmatmul.mubr.f32.gmra.mrb[0].mxu0 %v1832
    %v1900 = vpop.f32.mrb[0].mxu0
    %v1901 = vadd.f32 0.0, %v1900
    %v1902 = vpop.f32.mrb[0].mxu0
    %1903 = vdwg.mxu0
    %v1904 = vsel %vm573, %v1901, -inf
    %1905 = vmax.xlane.f32.xlu0 %v1904
    %v1906 = vpop.xlane.xlu0 %1905
    %v1907 = vsub.f32 %v1901, %v1906
    %v1908 = vmul.f32 %v1907, 1.442695
    %v1909 = vpow.pop %v1908
    %v1911 = vsel %vm573, %v1909, 0
    %1913 = vmatprep.subr.mxu0 0.0
    %1914 = vmatpush1.msra.mxu0 %v81
    %1915 = vmatprep.subr.mxu0 0.0
    %1916 = vmatpush1.msra.mxu0 %v82
    %1917 = vmatprep.subr.mxu0 0.0
    %1918 = vmatpush1.msra.mxu0 %v83
    %1919 = vmatprep.subr.mxu0 0.0
    %1920 = vmatpush1.msra.mxu0 %v84
    %1921 = vmatprep.subr.mxu0 0.0
    %1922 = vmatpush1.msra.mxu0 %v85
    %1923 = vmatprep.subr.mxu0 0.0
    %1924 = vmatpush1.msra.mxu0 %v86
    %1925 = vmatprep.subr.mxu0 0.0
    %1926 = vmatpush1.msra.mxu0 %v87
    %1927 = vmatprep.subr.mxu0 0.0
    %1928 = vmatpush1.msra.mxu0 %v88
    %1929 = vmatprep.subr.mxu0 0.0
    %1930 = vmatpush1.msra.mxu0 0.0
    %1931 = vmatprep.subr.mxu0 0.0
    %1932 = vmatpush1.msra.mxu0 0.0
    %1933 = vmatprep.subr.mxu0 0.0
    %1934 = vmatpush1.msra.mxu0 0.0
    %1935 = vmatprep.subr.mxu0 0.0
    %1936 = vmatpush1.msra.mxu0 0.0
    %1937 = vmatprep.subr.mxu0 0.0
    %1938 = vmatpush1.msra.mxu0 0.0
    %1939 = vmatprep.subr.mxu0 0.0
    %1940 = vmatpush1.msra.mxu0 0.0
    %1941 = vmatprep.subr.mxu0 0.0
    %1942 = vmatpush1.msra.mxu0 0.0
    %1943 = vmatprep.subr.mxu0 0.0
    %1944 = vmatpush1.msra.mxu0 0.0
    %1945 = vmatprep.subr.mxu0 0.0
    %1946 = vmatpush1.msra.mxu0 0.0
    %1947 = vmatprep.subr.mxu0 0.0
    %1948 = vmatpush1.msra.mxu0 0.0
    %1949 = vmatprep.subr.mxu0 0.0
    %1950 = vmatpush1.msra.mxu0 0.0
    %1951 = vmatprep.subr.mxu0 0.0
    %1952 = vmatpush1.msra.mxu0 0.0
    %1953 = vmatprep.subr.mxu0 0.0
    %1954 = vmatpush1.msra.mxu0 0.0
    %1955 = vmatprep.subr.mxu0 0.0
    %1956 = vmatpush1.msra.mxu0 0.0
    %1957 = vmatprep.subr.mxu0 0.0
    %1958 = vmatpush1.msra.mxu0 0.0
    %1959 = vmatprep.subr.mxu0 0.0
    %1960 = vmatpush1.msra.mxu0 0.0
    %1961 = vmatprep.subr.mxu0 0.0
    %1962 = vmatpush1.msra.mxu0 0.0
    %1963 = vmatprep.subr.mxu0 0.0
    %1964 = vmatpush1.msra.mxu0 0.0
    %1965 = vmatprep.subr.mxu0 0.0
    %1966 = vmatpush1.msra.mxu0 0.0
    %1967 = vmatprep.subr.mxu0 0.0
    %1968 = vmatpush1.msra.mxu0 0.0
    %1969 = vmatprep.subr.mxu0 0.0
    %1970 = vmatpush1.msra.mxu0 0.0
    %1971 = vmatprep.subr.mxu0 0.0
    %1972 = vmatpush1.msra.mxu0 0.0
    %1973 = vmatprep.subr.mxu0 0.0
    %1974 = vmatpush1.msra.mxu0 0.0
    %1975 = vmatprep.subr.mxu0 0.0
    %1976 = vmatpush1.msra.mxu0 0.0
    %1977 = vmatprep.mubr.f32.mxu0 0.0
    %1978 = vmatmul.mubr.f32.gmra.mrb[0].mxu0 %v1911
    %v1979 = vpop.f32.mrb[0].mxu0
    %v1980 = vadd.f32 0.0, %v1979
    %v1981 = vpop.f32.mrb[0].mxu0
    %1982 = vdwg.mxu0
    %v1983 = vrcp.pop %v1980
    %v1984 = vmul.f32 %v1909, %v1983
    %v1986 = vsel %vm573, %v1984, 0
    %1988 = vmatprep.subr.mxu0 0.0
    %1989 = vmatpush1.msra.mxu0 %v89
    %1990 = vmatprep.subr.mxu0 0.0
    %1991 = vmatpush1.msra.mxu0 %v90
    %1992 = vmatprep.subr.mxu0 0.0
    %1993 = vmatpush1.msra.mxu0 %v91
    %1994 = vmatprep.subr.mxu0 0.0
    %1995 = vmatpush1.msra.mxu0 %v92
    %1996 = vmatprep.subr.mxu0 0.0
    %1997 = vmatpush1.msra.mxu0 %v93
    %1998 = vmatprep.subr.mxu0 0.0
    %1999 = vmatpush1.msra.mxu0 %v94
    %2000 = vmatprep.subr.mxu0 0.0
    %2001 = vmatpush1.msra.mxu0 %v95
    %2002 = vmatprep.subr.mxu0 0.0
    %2003 = vmatpush1.msra.mxu0 %v96
    %2004 = vmatprep.subr.mxu0 0.0
    %2005 = vmatpush1.msra.mxu0 0.0
    %2006 = vmatprep.subr.mxu0 0.0
    %2007 = vmatpush1.msra.mxu0 0.0
    %2008 = vmatprep.subr.mxu0 0.0
    %2009 = vmatpush1.msra.mxu0 0.0
    %2010 = vmatprep.subr.mxu0 0.0
    %2011 = vmatpush1.msra.mxu0 0.0
    %2012 = vmatprep.subr.mxu0 0.0
    %2013 = vmatpush1.msra.mxu0 0.0
    %2014 = vmatprep.subr.mxu0 0.0
    %2015 = vmatpush1.msra.mxu0 0.0
    %2016 = vmatprep.subr.mxu0 0.0
    %2017 = vmatpush1.msra.mxu0 0.0
    %2018 = vmatprep.subr.mxu0 0.0
    %2019 = vmatpush1.msra.mxu0 0.0
    %2020 = vmatprep.subr.mxu0 0.0
    %2021 = vmatpush1.msra.mxu0 0.0
    %2022 = vmatprep.subr.mxu0 0.0
    %2023 = vmatpush1.msra.mxu0 0.0
    %2024 = vmatprep.subr.mxu0 0.0
    %2025 = vmatpush1.msra.mxu0 0.0
    %2026 = vmatprep.subr.mxu0 0.0
    %2027 = vmatpush1.msra.mxu0 0.0
    %2028 = vmatprep.subr.mxu0 0.0
    %2029 = vmatpush1.msra.mxu0 0.0
    %2030 = vmatprep.subr.mxu0 0.0
    %2031 = vmatpush1.msra.mxu0 0.0
    %2032 = vmatprep.subr.mxu0 0.0
    %2033 = vmatpush1.msra.mxu0 0.0
    %2034 = vmatprep.subr.mxu0 0.0
    %2035 = vmatpush1.msra.mxu0 0.0
    %2036 = vmatprep.subr.mxu0 0.0
    %2037 = vmatpush1.msra.mxu0 0.0
    %2038 = vmatprep.subr.mxu0 0.0
    %2039 = vmatpush1.msra.mxu0 0.0
    %2040 = vmatprep.subr.mxu0 0.0
    %2041 = vmatpush1.msra.mxu0 0.0
    %2042 = vmatprep.subr.mxu0 0.0
    %2043 = vmatpush1.msra.mxu0 0.0
    %2044 = vmatprep.subr.mxu0 0.0
    %2045 = vmatpush1.msra.mxu0 0.0
    %2046 = vmatprep.subr.mxu0 0.0
    %2047 = vmatpush1.msra.mxu0 0.0
    %2048 = vmatprep.subr.mxu0 0.0
    %2049 = vmatpush1.msra.mxu0 0.0
    %2050 = vmatprep.subr.mxu0 0.0
    %2051 = vmatpush1.msra.mxu0 0.0
    %2052 = vmatprep.mubr.f32.mxu0 0.0
    %2053 = vmatmul.mubr.f32.gmra.mrb[0].mxu0 %v1986
    %v2054 = vpop.f32.mrb[0].mxu0
    %v2055 = vadd.f32 0.0, %v2054
    %v2056 = vpop.f32.mrb[0].mxu0
    %2057 = vdwg.mxu0
    %s2059 = scalar_lea.vmem [#allocation3], 32
    %2060 = vst.msk [vmem:[%s2059] sm:$0xff] %vm114, %v1760
    %s2061 = scalar_lea.vmem [#allocation4], 32
    %2062 = vst.msk [vmem:[%s2061] sm:$0xff] %vm573, %v1984
    %s2063 = scalar_lea.vmem [#allocation2], 40
    %v2064 = vld [vmem:[%s2063] sm:$0xff]
    %v2065 = vadd.f32 %v2064, %v1830
    %v2066 = vadd.f32 %v2065, %v2055
    %v2067 = vxor.u32 %v2066, 2147483648
    %v2068 = vmul.f32 %v2067, 1.442695
    %v2069 = vpow.pop %v2068
    %v2070 = vadd.f32 %v2069, 1.0
    %v2071 = vrcp.pop %v2070
    %v2072 = vmul.f32 1.0, %v2071
    %v2073 = vtanh.pop %v2066
    %v2074 = vmul.f32 %v2072, %v1751
    %2076 = vrot.lane.b32.xlu0 %v2073, 64
    %v2077 = vpop.permute.xlu0 %2076
    %v2079 = vmul.f32 %v2072, %v2077
    %2081 = vrot.lane.b32.xlu0 %v2079, 32
    %v2082 = vpop.permute.xlu0 %2081
    %v2084 = vadd.f32 %v2074, %v2082
    %v2085 = vtanh.pop %v2084
    %2087 = vrot.lane.b32.xlu0 %v2085, 64
    %v2088 = vpop.permute.xlu0 %2087
    %v2090 = vmul.f32 %v2072, %v2088
    %2092 = vrot.lane.b32.xlu0 %v2090, 32
    %v2093 = vpop.permute.xlu0 %2092
    %v2094 = vsel %vm114, %v2093, 0
    %2096 = vmatprep.subr.mxu0 %v58
    %2097 = vmatpush1.msra.mxu0 %v57
    %2098 = vmatprep.subr.mxu0 %v60
    %2099 = vmatpush1.msra.mxu0 %v59
    %2100 = vmatprep.subr.mxu0 %v62
    %2101 = vmatpush1.msra.mxu0 %v61
    %2102 = vmatprep.subr.mxu0 %v64
    %2103 = vmatpush1.msra.mxu0 %v63
    %2104 = vmatprep.subr.mxu0 0.0
    %2105 = vmatpush1.msra.mxu0 0.0
    %2106 = vmatprep.subr.mxu0 0.0
    %2107 = vmatpush1.msra.mxu0 0.0
    %2108 = vmatprep.subr.mxu0 0.0
    %2109 = vmatpush1.msra.mxu0 0.0
    %2110 = vmatprep.subr.mxu0 0.0
    %2111 = vmatpush1.msra.mxu0 0.0
    %2112 = vmatprep.subr.mxu0 0.0
    %2113 = vmatpush1.msra.mxu0 0.0
    %2114 = vmatprep.subr.mxu0 0.0
    %2115 = vmatpush1.msra.mxu0 0.0
    %2116 = vmatprep.subr.mxu0 0.0
    %2117 = vmatpush1.msra.mxu0 0.0
    %2118 = vmatprep.subr.mxu0 0.0
    %2119 = vmatpush1.msra.mxu0 0.0
    %2120 = vmatprep.subr.mxu0 0.0
    %2121 = vmatpush1.msra.mxu0 0.0
    %2122 = vmatprep.subr.mxu0 0.0
    %2123 = vmatpush1.msra.mxu0 0.0
    %2124 = vmatprep.subr.mxu0 0.0
    %2125 = vmatpush1.msra.mxu0 0.0
    %2126 = vmatprep.subr.mxu0 0.0
    %2127 = vmatpush1.msra.mxu0 0.0
    %2128 = vmatprep.subr.mxu0 0.0
    %2129 = vmatpush1.msra.mxu0 0.0
    %2130 = vmatprep.subr.mxu0 0.0
    %2131 = vmatpush1.msra.mxu0 0.0
    %2132 = vmatprep.subr.mxu0 0.0
    %2133 = vmatpush1.msra.mxu0 0.0
    %2134 = vmatprep.subr.mxu0 0.0
    %2135 = vmatpush1.msra.mxu0 0.0
    %2136 = vmatprep.subr.mxu0 0.0
    %2137 = vmatpush1.msra.mxu0 0.0
    %2138 = vmatprep.subr.mxu0 0.0
    %2139 = vmatpush1.msra.mxu0 0.0
    %2140 = vmatprep.subr.mxu0 0.0
    %2141 = vmatpush1.msra.mxu0 0.0
    %2142 = vmatprep.subr.mxu0 0.0
    %2143 = vmatpush1.msra.mxu0 0.0
    %2144 = vmatprep.subr.mxu0 0.0
    %2145 = vmatpush1.msra.mxu0 0.0
    %2146 = vmatprep.subr.mxu0 0.0
    %2147 = vmatpush1.msra.mxu0 0.0
    %2148 = vmatprep.subr.mxu0 0.0
    %2149 = vmatpush1.msra.mxu0 0.0
    %2150 = vmatprep.subr.mxu0 0.0
    %2151 = vmatpush1.msra.mxu0 0.0
    %2152 = vmatprep.subr.mxu0 0.0
    %2153 = vmatpush1.msra.mxu0 0.0
    %2154 = vmatprep.subr.mxu0 0.0
    %2155 = vmatpush1.msra.mxu0 0.0
    %2156 = vmatprep.subr.mxu0 0.0
    %2157 = vmatpush1.msra.mxu0 0.0
    %2158 = vmatprep.subr.mxu0 0.0
    %2159 = vmatpush1.msra.mxu0 0.0
    %2160 = vmatprep.mubr.f32.mxu0 0.0
    %2161 = vmatmul.mubr.f32.gmra.mrb[0].mxu0 %v2094
    %v2162 = vpop.f32.mrb[0].mxu0
    %v2163 = vpop.f32.mrb[0].mxu0
    %v2164 = vadd.f32 0.0, %v2163
    %2165 = vdwg.mxu0
    %2166 = vmatprep.subr.mxu0 0.0
    %2167 = vmatpush1.msra.mxu0 %v65
    %2168 = vmatprep.subr.mxu0 0.0
    %2169 = vmatpush1.msra.mxu0 %v66
    %2170 = vmatprep.subr.mxu0 0.0
    %2171 = vmatpush1.msra.mxu0 %v67
    %2172 = vmatprep.subr.mxu0 0.0
    %2173 = vmatpush1.msra.mxu0 %v68
    %2174 = vmatprep.subr.mxu0 0.0
    %2175 = vmatpush1.msra.mxu0 %v69
    %2176 = vmatprep.subr.mxu0 0.0
    %2177 = vmatpush1.msra.mxu0 %v70
    %2178 = vmatprep.subr.mxu0 0.0
    %2179 = vmatpush1.msra.mxu0 %v71
    %2180 = vmatprep.subr.mxu0 0.0
    %2181 = vmatpush1.msra.mxu0 %v72
    %2182 = vmatprep.subr.mxu0 0.0
    %2183 = vmatpush1.msra.mxu0 %v73
    %2184 = vmatprep.subr.mxu0 0.0
    %2185 = vmatpush1.msra.mxu0 %v74
    %2186 = vmatprep.subr.mxu0 0.0
    %2187 = vmatpush1.msra.mxu0 %v75
    %2188 = vmatprep.subr.mxu0 0.0
    %2189 = vmatpush1.msra.mxu0 %v76
    %2190 = vmatprep.subr.mxu0 0.0
    %2191 = vmatpush1.msra.mxu0 %v77
    %2192 = vmatprep.subr.mxu0 0.0
    %2193 = vmatpush1.msra.mxu0 %v78
    %2194 = vmatprep.subr.mxu0 0.0
    %2195 = vmatpush1.msra.mxu0 %v79
    %2196 = vmatprep.subr.mxu0 0.0
    %2197 = vmatpush1.msra.mxu0 %v80
    %2198 = vmatprep.subr.mxu0 0.0
    %2199 = vmatpush1.msra.mxu0 0.0
    %2200 = vmatprep.subr.mxu0 0.0
    %2201 = vmatpush1.msra.mxu0 0.0
    %2202 = vmatprep.subr.mxu0 0.0
    %2203 = vmatpush1.msra.mxu0 0.0
    %2204 = vmatprep.subr.mxu0 0.0
    %2205 = vmatpush1.msra.mxu0 0.0
    %2206 = vmatprep.subr.mxu0 0.0
    %2207 = vmatpush1.msra.mxu0 0.0
    %2208 = vmatprep.subr.mxu0 0.0
    %2209 = vmatpush1.msra.mxu0 0.0
    %2210 = vmatprep.subr.mxu0 0.0
    %2211 = vmatpush1.msra.mxu0 0.0
    %2212 = vmatprep.subr.mxu0 0.0
    %2213 = vmatpush1.msra.mxu0 0.0
    %2214 = vmatprep.subr.mxu0 0.0
    %2215 = vmatpush1.msra.mxu0 0.0
    %2216 = vmatprep.subr.mxu0 0.0
    %2217 = vmatpush1.msra.mxu0 0.0
    %2218 = vmatprep.subr.mxu0 0.0
    %2219 = vmatpush1.msra.mxu0 0.0
    %2220 = vmatprep.subr.mxu0 0.0
    %2221 = vmatpush1.msra.mxu0 0.0
    %2222 = vmatprep.subr.mxu0 0.0
    %2223 = vmatpush1.msra.mxu0 0.0
    %2224 = vmatprep.subr.mxu0 0.0
    %2225 = vmatpush1.msra.mxu0 0.0
    %2226 = vmatprep.subr.mxu0 0.0
    %2227 = vmatpush1.msra.mxu0 0.0
    %2228 = vmatprep.subr.mxu0 0.0
    %2229 = vmatpush1.msra.mxu0 0.0
    %2230 = vmatprep.mubr.f32.mxu0 0.0
    %2231 = vmatmul.mubr.f32.gmra.mrb[0].mxu0 %v2164
    %v2232 = vpop.f32.mrb[0].mxu0
    %v2233 = vadd.f32 0.0, %v2232
    %v2234 = vpop.f32.mrb[0].mxu0
    %2235 = vdwg.mxu0
    %v2236 = vsel %vm573, %v2233, -inf
    %2237 = vmax.xlane.f32.xlu0 %v2236
    %v2238 = vpop.xlane.xlu0 %2237
    %v2239 = vsub.f32 %v2233, %v2238
    %v2240 = vmul.f32 %v2239, 1.442695
    %v2241 = vpow.pop %v2240
    %v2243 = vsel %vm573, %v2241, 0
    %2245 = vmatprep.subr.mxu0 0.0
    %2246 = vmatpush1.msra.mxu0 %v81
    %2247 = vmatprep.subr.mxu0 0.0
    %2248 = vmatpush1.msra.mxu0 %v82
    %2249 = vmatprep.subr.mxu0 0.0
    %2250 = vmatpush1.msra.mxu0 %v83
    %2251 = vmatprep.subr.mxu0 0.0
    %2252 = vmatpush1.msra.mxu0 %v84
    %2253 = vmatprep.subr.mxu0 0.0
    %2254 = vmatpush1.msra.mxu0 %v85
    %2255 = vmatprep.subr.mxu0 0.0
    %2256 = vmatpush1.msra.mxu0 %v86
    %2257 = vmatprep.subr.mxu0 0.0
    %2258 = vmatpush1.msra.mxu0 %v87
    %2259 = vmatprep.subr.mxu0 0.0
    %2260 = vmatpush1.msra.mxu0 %v88
    %2261 = vmatprep.subr.mxu0 0.0
    %2262 = vmatpush1.msra.mxu0 0.0
    %2263 = vmatprep.subr.mxu0 0.0
    %2264 = vmatpush1.msra.mxu0 0.0
    %2265 = vmatprep.subr.mxu0 0.0
    %2266 = vmatpush1.msra.mxu0 0.0
    %2267 = vmatprep.subr.mxu0 0.0
    %2268 = vmatpush1.msra.mxu0 0.0
    %2269 = vmatprep.subr.mxu0 0.0
    %2270 = vmatpush1.msra.mxu0 0.0
    %2271 = vmatprep.subr.mxu0 0.0
    %2272 = vmatpush1.msra.mxu0 0.0
    %2273 = vmatprep.subr.mxu0 0.0
    %2274 = vmatpush1.msra.mxu0 0.0
    %2275 = vmatprep.subr.mxu0 0.0
    %2276 = vmatpush1.msra.mxu0 0.0
    %2277 = vmatprep.subr.mxu0 0.0
    %2278 = vmatpush1.msra.mxu0 0.0
    %2279 = vmatprep.subr.mxu0 0.0
    %2280 = vmatpush1.msra.mxu0 0.0
    %2281 = vmatprep.subr.mxu0 0.0
    %2282 = vmatpush1.msra.mxu0 0.0
    %2283 = vmatprep.subr.mxu0 0.0
    %2284 = vmatpush1.msra.mxu0 0.0
    %2285 = vmatprep.subr.mxu0 0.0
    %2286 = vmatpush1.msra.mxu0 0.0
    %2287 = vmatprep.subr.mxu0 0.0
    %2288 = vmatpush1.msra.mxu0 0.0
    %2289 = vmatprep.subr.mxu0 0.0
    %2290 = vmatpush1.msra.mxu0 0.0
    %2291 = vmatprep.subr.mxu0 0.0
    %2292 = vmatpush1.msra.mxu0 0.0
    %2293 = vmatprep.subr.mxu0 0.0
    %2294 = vmatpush1.msra.mxu0 0.0
    %2295 = vmatprep.subr.mxu0 0.0
    %2296 = vmatpush1.msra.mxu0 0.0
    %2297 = vmatprep.subr.mxu0 0.0
    %2298 = vmatpush1.msra.mxu0 0.0
    %2299 = vmatprep.subr.mxu0 0.0
    %2300 = vmatpush1.msra.mxu0 0.0
    %2301 = vmatprep.subr.mxu0 0.0
    %2302 = vmatpush1.msra.mxu0 0.0
    %2303 = vmatprep.subr.mxu0 0.0
    %2304 = vmatpush1.msra.mxu0 0.0
    %2305 = vmatprep.subr.mxu0 0.0
    %2306 = vmatpush1.msra.mxu0 0.0
    %2307 = vmatprep.subr.mxu0 0.0
    %2308 = vmatpush1.msra.mxu0 0.0
    %2309 = vmatprep.mubr.f32.mxu0 0.0
    %2310 = vmatmul.mubr.f32.gmra.mrb[0].mxu0 %v2243
    %v2311 = vpop.f32.mrb[0].mxu0
    %v2312 = vadd.f32 0.0, %v2311
    %v2313 = vpop.f32.mrb[0].mxu0
    %2314 = vdwg.mxu0
    %v2315 = vrcp.pop %v2312
    %v2316 = vmul.f32 %v2241, %v2315
    %s2318 = scalar_lea.vmem [#allocation3], 40
    %2319 = vst.msk [vmem:[%s2318] sm:$0xff] %vm114, %v2093
    %s2320 = scalar_lea.vmem [#allocation4], 40
    %2321 = vst.msk [vmem:[%s2320] sm:$0xff] %vm573, %v2316
    %v2322 = vld [vmem:[#allocation3] sm:$0xff]
    %v2323 = vld [vmem:[#allocation3 + $0x8] sm:$0xff]
    %v2324 = vld [vmem:[#allocation3 + $0x10] sm:$0xff]
    %v2325 = vld [vmem:[#allocation3 + $0x18] sm:$0xff]
    %v2326 = vld [vmem:[#allocation3 + $0x20] sm:$0xff]
    %v2327 = vld [vmem:[#allocation3 + $0x28] sm:$0xff]
    %v2328 = vld [vmem:[%s9] sm:$0xff]
    %v2329 = vld [vmem:[%s9 + $0x8] sm:$0xff]
    %v2330 = vld [vmem:[%s9 + $0x10] sm:$0xff]
    %v2331 = vld [vmem:[%s9 + $0x18] sm:$0xff]
    %v2333 = vsel %vm114, %v2322, 0
    %v2336 = vsel %vm114, %v2323, 0
    %v2339 = vsel %vm114, %v2324, 0
    %v2342 = vsel %vm114, %v2325, 0
    %v2345 = vsel %vm114, %v2326, 0
    %v2348 = vsel %vm114, %v2327, 0
    %2350 = vmatprep.subr.mxu0 0.0
    %2351 = vmatpush1.msra.mxu0 %v2328
    %2352 = vmatprep.subr.mxu0 0.0
    %2353 = vmatpush1.msra.mxu0 %v2329
    %2354 = vmatprep.subr.mxu0 0.0
    %2355 = vmatpush1.msra.mxu0 %v2330
    %2356 = vmatprep.subr.mxu0 0.0
    %2357 = vmatpush1.msra.mxu0 %v2331
    %2358 = vmatprep.subr.mxu0 0.0
    %2359 = vmatpush1.msra.mxu0 0.0
    %2360 = vmatprep.subr.mxu0 0.0
    %2361 = vmatpush1.msra.mxu0 0.0
    %2362 = vmatprep.subr.mxu0 0.0
    %2363 = vmatpush1.msra.mxu0 0.0
    %2364 = vmatprep.subr.mxu0 0.0
    %2365 = vmatpush1.msra.mxu0 0.0
    %2366 = vmatprep.subr.mxu0 0.0
    %2367 = vmatpush1.msra.mxu0 0.0
    %2368 = vmatprep.subr.mxu0 0.0
    %2369 = vmatpush1.msra.mxu0 0.0
    %2370 = vmatprep.subr.mxu0 0.0
    %2371 = vmatpush1.msra.mxu0 0.0
    %2372 = vmatprep.subr.mxu0 0.0
    %2373 = vmatpush1.msra.mxu0 0.0
    %2374 = vmatprep.subr.mxu0 0.0
    %2375 = vmatpush1.msra.mxu0 0.0
    %2376 = vmatprep.subr.mxu0 0.0
    %2377 = vmatpush1.msra.mxu0 0.0
    %2378 = vmatprep.subr.mxu0 0.0
    %2379 = vmatpush1.msra.mxu0 0.0
    %2380 = vmatprep.subr.mxu0 0.0
    %2381 = vmatpush1.msra.mxu0 0.0
    %2382 = vmatprep.subr.mxu0 0.0
    %2383 = vmatpush1.msra.mxu0 0.0
    %2384 = vmatprep.subr.mxu0 0.0
    %2385 = vmatpush1.msra.mxu0 0.0
    %2386 = vmatprep.subr.mxu0 0.0
    %2387 = vmatpush1.msra.mxu0 0.0
    %2388 = vmatprep.subr.mxu0 0.0
    %2389 = vmatpush1.msra.mxu0 0.0
    %2390 = vmatprep.subr.mxu0 0.0
    %2391 = vmatpush1.msra.mxu0 0.0
    %2392 = vmatprep.subr.mxu0 0.0
    %2393 = vmatpush1.msra.mxu0 0.0
    %2394 = vmatprep.subr.mxu0 0.0
    %2395 = vmatpush1.msra.mxu0 0.0
    %2396 = vmatprep.subr.mxu0 0.0
    %2397 = vmatpush1.msra.mxu0 0.0
    %2398 = vmatprep.subr.mxu0 0.0
    %2399 = vmatpush1.msra.mxu0 0.0
    %2400 = vmatprep.subr.mxu0 0.0
    %2401 = vmatpush1.msra.mxu0 0.0
    %2402 = vmatprep.subr.mxu0 0.0
    %2403 = vmatpush1.msra.mxu0 0.0
    %2404 = vmatprep.subr.mxu0 0.0
    %2405 = vmatpush1.msra.mxu0 0.0
    %2406 = vmatprep.subr.mxu0 0.0
    %2407 = vmatpush1.msra.mxu0 0.0
    %2408 = vmatprep.subr.mxu0 0.0
    %2409 = vmatpush1.msra.mxu0 0.0
    %2410 = vmatprep.subr.mxu0 0.0
    %2411 = vmatpush1.msra.mxu0 0.0
    %2412 = vmatprep.subr.mxu0 0.0
    %2413 = vmatpush1.msra.mxu0 0.0
    %2414 = vmatprep.mubr.f32.mxu0 0.0
    %2415 = vmatmul.mubr.f32.gmra.mrb[0].mxu0 %v2333
    %v2416 = vpop.f32.mrb[0].mxu0
    %v2417 = vadd.f32 0.0, %v2416
    %v2418 = vpop.f32.mrb[0].mxu0
    %2419 = vmatprep.mubr.f32.mxu0 0.0
    %2420 = vmatmul.mubr.f32.gmra.mrb[0].mxu0 %v2336
    %v2421 = vpop.f32.mrb[0].mxu0
    %v2422 = vadd.f32 0.0, %v2421
    %v2423 = vpop.f32.mrb[0].mxu0
    %2424 = vmatprep.mubr.f32.mxu0 0.0
    %2425 = vmatmul.mubr.f32.gmra.mrb[0].mxu0 %v2339
    %v2426 = vpop.f32.mrb[0].mxu0
    %v2427 = vadd.f32 0.0, %v2426
    %v2428 = vpop.f32.mrb[0].mxu0
    %2429 = vmatprep.mubr.f32.mxu0 0.0
    %2430 = vmatmul.mubr.f32.gmra.mrb[0].mxu0 %v2342
    %v2431 = vpop.f32.mrb[0].mxu0
    %v2432 = vadd.f32 0.0, %v2431
    %v2433 = vpop.f32.mrb[0].mxu0
    %2434 = vmatprep.mubr.f32.mxu0 0.0
    %2435 = vmatmul.mubr.f32.gmra.mrb[0].mxu0 %v2345
    %v2436 = vpop.f32.mrb[0].mxu0
    %v2437 = vadd.f32 0.0, %v2436
    %v2438 = vpop.f32.mrb[0].mxu0
    %2439 = vmatprep.mubr.f32.mxu0 0.0
    %2440 = vmatmul.mubr.f32.gmra.mrb[0].mxu0 %v2348
    %v2441 = vpop.f32.mrb[0].mxu0
    %v2442 = vadd.f32 0.0, %v2441
    %v2443 = vpop.f32.mrb[0].mxu0
    %2444 = vdwg.mxu0
    %v2451 = vcombine.high %v2417, %v2417
    %v2453 = vunpack.c.l.s4 1966171168
    %v2454 = vunpack.c.0.s8 %v2453
    %v2455 = vlaneseq
    %v2456 = vshrl.u32 %v2455, 7
    %v2457 = vsub.s32 %v2454, %v2456
    %v2458 = vrot.slane %v2417, %v2457
    %v2460 = vunpack.c.l.s4 1966171168
    %v2461 = vunpack.c.0.s8 %v2460
    %v2462 = vlaneseq
    %v2463 = vshrl.u32 %v2462, 7
    %v2464 = vsub.s32 %v2461, %v2463
    %v2465 = vrot.slane %v2451, %v2464
    %v2466 = vcombine.high %v2458, %v2458
    %v2467 = vcombine.high %v2465, %v2465
    %v2469 = vunpack.c.l.s4 1966171168
    %v2470 = vunpack.c.0.s8 %v2469
    %v2471 = vlaneseq
    %v2472 = vshrl.u32 %v2471, 7
    %v2473 = vsub.s32 %v2470, %v2472
    %v2474 = vrot.slane %v2458, %v2473
    %v2476 = vunpack.c.l.s4 1966171168
    %v2477 = vunpack.c.0.s8 %v2476
    %v2478 = vlaneseq
    %v2479 = vshrl.u32 %v2478, 7
    %v2480 = vsub.s32 %v2477, %v2479
    %v2481 = vrot.slane %v2465, %v2480
    %v2483 = vunpack.c.l.s4 1966171168
    %v2484 = vunpack.c.0.s8 %v2483
    %v2485 = vlaneseq
    %v2486 = vshrl.u32 %v2485, 7
    %v2487 = vsub.s32 %v2484, %v2486
    %v2488 = vrot.slane %v2466, %v2487
    %v2490 = vunpack.c.l.s4 1966171168
    %v2491 = vunpack.c.0.s8 %v2490
    %v2492 = vlaneseq
    %v2493 = vshrl.u32 %v2492, 7
    %v2494 = vsub.s32 %v2491, %v2493
    %v2495 = vrot.slane %v2467, %v2494
    %v2496 = vcombine.high %v2474, %v2474
    %v2497 = vcombine.high %v2481, %v2481
    %v2498 = vcombine.high %v2488, %v2488
    %v2499 = vcombine.high %v2495, %v2495
    %v2500 = vcombine.high %v2422, %v2422
    %v2502 = vunpack.c.l.s4 1966171168
    %v2503 = vunpack.c.0.s8 %v2502
    %v2504 = vlaneseq
    %v2505 = vshrl.u32 %v2504, 7
    %v2506 = vsub.s32 %v2503, %v2505
    %v2507 = vrot.slane %v2422, %v2506
    %v2509 = vunpack.c.l.s4 1966171168
    %v2510 = vunpack.c.0.s8 %v2509
    %v2511 = vlaneseq
    %v2512 = vshrl.u32 %v2511, 7
    %v2513 = vsub.s32 %v2510, %v2512
    %v2514 = vrot.slane %v2500, %v2513
    %v2515 = vcombine.high %v2507, %v2507
    %v2516 = vcombine.high %v2514, %v2514
    %v2518 = vunpack.c.l.s4 1966171168
    %v2519 = vunpack.c.0.s8 %v2518
    %v2520 = vlaneseq
    %v2521 = vshrl.u32 %v2520, 7
    %v2522 = vsub.s32 %v2519, %v2521
    %v2523 = vrot.slane %v2507, %v2522
    %v2525 = vunpack.c.l.s4 1966171168
    %v2526 = vunpack.c.0.s8 %v2525
    %v2527 = vlaneseq
    %v2528 = vshrl.u32 %v2527, 7
    %v2529 = vsub.s32 %v2526, %v2528
    %v2530 = vrot.slane %v2514, %v2529
    %v2532 = vunpack.c.l.s4 1966171168
    %v2533 = vunpack.c.0.s8 %v2532
    %v2534 = vlaneseq
    %v2535 = vshrl.u32 %v2534, 7
    %v2536 = vsub.s32 %v2533, %v2535
    %v2537 = vrot.slane %v2515, %v2536
    %v2539 = vunpack.c.l.s4 1966171168
    %v2540 = vunpack.c.0.s8 %v2539
    %v2541 = vlaneseq
    %v2542 = vshrl.u32 %v2541, 7
    %v2543 = vsub.s32 %v2540, %v2542
    %v2544 = vrot.slane %v2516, %v2543
    %v2545 = vcombine.high %v2523, %v2523
    %v2546 = vcombine.high %v2530, %v2530
    %v2547 = vcombine.high %v2537, %v2537
    %v2548 = vcombine.high %v2544, %v2544
    %v2549 = vcombine.high %v2427, %v2427
    %v2551 = vunpack.c.l.s4 1966171168
    %v2552 = vunpack.c.0.s8 %v2551
    %v2553 = vlaneseq
    %v2554 = vshrl.u32 %v2553, 7
    %v2555 = vsub.s32 %v2552, %v2554
    %v2556 = vrot.slane %v2427, %v2555
    %v2558 = vunpack.c.l.s4 1966171168
    %v2559 = vunpack.c.0.s8 %v2558
    %v2560 = vlaneseq
    %v2561 = vshrl.u32 %v2560, 7
    %v2562 = vsub.s32 %v2559, %v2561
    %v2563 = vrot.slane %v2549, %v2562
    %v2564 = vcombine.high %v2556, %v2556
    %v2565 = vcombine.high %v2563, %v2563
    %v2567 = vunpack.c.l.s4 1966171168
    %v2568 = vunpack.c.0.s8 %v2567
    %v2569 = vlaneseq
    %v2570 = vshrl.u32 %v2569, 7
    %v2571 = vsub.s32 %v2568, %v2570
    %v2572 = vrot.slane %v2556, %v2571
    %v2574 = vunpack.c.l.s4 1966171168
    %v2575 = vunpack.c.0.s8 %v2574
    %v2576 = vlaneseq
    %v2577 = vshrl.u32 %v2576, 7
    %v2578 = vsub.s32 %v2575, %v2577
    %v2579 = vrot.slane %v2563, %v2578
    %v2581 = vunpack.c.l.s4 1966171168
    %v2582 = vunpack.c.0.s8 %v2581
    %v2583 = vlaneseq
    %v2584 = vshrl.u32 %v2583, 7
    %v2585 = vsub.s32 %v2582, %v2584
    %v2586 = vrot.slane %v2564, %v2585
    %v2588 = vunpack.c.l.s4 1966171168
    %v2589 = vunpack.c.0.s8 %v2588
    %v2590 = vlaneseq
    %v2591 = vshrl.u32 %v2590, 7
    %v2592 = vsub.s32 %v2589, %v2591
    %v2593 = vrot.slane %v2565, %v2592
    %v2594 = vcombine.high %v2572, %v2572
    %v2595 = vcombine.high %v2579, %v2579
    %v2596 = vcombine.high %v2586, %v2586
    %v2597 = vcombine.high %v2593, %v2593
    %v2598 = vcombine.high %v2432, %v2432
    %v2600 = vunpack.c.l.s4 1966171168
    %v2601 = vunpack.c.0.s8 %v2600
    %v2602 = vlaneseq
    %v2603 = vshrl.u32 %v2602, 7
    %v2604 = vsub.s32 %v2601, %v2603
    %v2605 = vrot.slane %v2432, %v2604
    %v2607 = vunpack.c.l.s4 1966171168
    %v2608 = vunpack.c.0.s8 %v2607
    %v2609 = vlaneseq
    %v2610 = vshrl.u32 %v2609, 7
    %v2611 = vsub.s32 %v2608, %v2610
    %v2612 = vrot.slane %v2598, %v2611
    %v2613 = vcombine.high %v2605, %v2605
    %v2614 = vcombine.high %v2612, %v2612
    %v2616 = vunpack.c.l.s4 1966171168
    %v2617 = vunpack.c.0.s8 %v2616
    %v2618 = vlaneseq
    %v2619 = vshrl.u32 %v2618, 7
    %v2620 = vsub.s32 %v2617, %v2619
    %v2621 = vrot.slane %v2605, %v2620
    %v2623 = vunpack.c.l.s4 1966171168
    %v2624 = vunpack.c.0.s8 %v2623
    %v2625 = vlaneseq
    %v2626 = vshrl.u32 %v2625, 7
    %v2627 = vsub.s32 %v2624, %v2626
    %v2628 = vrot.slane %v2612, %v2627
    %v2630 = vunpack.c.l.s4 1966171168
    %v2631 = vunpack.c.0.s8 %v2630
    %v2632 = vlaneseq
    %v2633 = vshrl.u32 %v2632, 7
    %v2634 = vsub.s32 %v2631, %v2633
    %v2635 = vrot.slane %v2613, %v2634
    %v2637 = vunpack.c.l.s4 1966171168
    %v2638 = vunpack.c.0.s8 %v2637
    %v2639 = vlaneseq
    %v2640 = vshrl.u32 %v2639, 7
    %v2641 = vsub.s32 %v2638, %v2640
    %v2642 = vrot.slane %v2614, %v2641
    %v2643 = vcombine.high %v2621, %v2621
    %v2644 = vcombine.high %v2628, %v2628
    %v2645 = vcombine.high %v2635, %v2635
    %v2646 = vcombine.high %v2642, %v2642
    %v2647 = vcombine.high %v2437, %v2437
    %v2649 = vunpack.c.l.s4 1966171168
    %v2650 = vunpack.c.0.s8 %v2649
    %v2651 = vlaneseq
    %v2652 = vshrl.u32 %v2651, 7
    %v2653 = vsub.s32 %v2650, %v2652
    %v2654 = vrot.slane %v2437, %v2653
    %v2656 = vunpack.c.l.s4 1966171168
    %v2657 = vunpack.c.0.s8 %v2656
    %v2658 = vlaneseq
    %v2659 = vshrl.u32 %v2658, 7
    %v2660 = vsub.s32 %v2657, %v2659
    %v2661 = vrot.slane %v2647, %v2660
    %v2662 = vcombine.high %v2654, %v2654
    %v2663 = vcombine.high %v2661, %v2661
    %v2665 = vunpack.c.l.s4 1966171168
    %v2666 = vunpack.c.0.s8 %v2665
    %v2667 = vlaneseq
    %v2668 = vshrl.u32 %v2667, 7
    %v2669 = vsub.s32 %v2666, %v2668
    %v2670 = vrot.slane %v2654, %v2669
    %v2672 = vunpack.c.l.s4 1966171168
    %v2673 = vunpack.c.0.s8 %v2672
    %v2674 = vlaneseq
    %v2675 = vshrl.u32 %v2674, 7
    %v2676 = vsub.s32 %v2673, %v2675
    %v2677 = vrot.slane %v2661, %v2676
    %v2679 = vunpack.c.l.s4 1966171168
    %v2680 = vunpack.c.0.s8 %v2679
    %v2681 = vlaneseq
    %v2682 = vshrl.u32 %v2681, 7
    %v2683 = vsub.s32 %v2680, %v2682
    %v2684 = vrot.slane %v2662, %v2683
    %v2686 = vunpack.c.l.s4 1966171168
    %v2687 = vunpack.c.0.s8 %v2686
    %v2688 = vlaneseq
    %v2689 = vshrl.u32 %v2688, 7
    %v2690 = vsub.s32 %v2687, %v2689
    %v2691 = vrot.slane %v2663, %v2690
    %v2692 = vcombine.high %v2670, %v2670
    %v2693 = vcombine.high %v2677, %v2677
    %v2694 = vcombine.high %v2684, %v2684
    %v2695 = vcombine.high %v2691, %v2691
    %v2696 = vcombine.high %v2442, %v2442
    %v2698 = vunpack.c.l.s4 1966171168
    %v2699 = vunpack.c.0.s8 %v2698
    %v2700 = vlaneseq
    %v2701 = vshrl.u32 %v2700, 7
    %v2702 = vsub.s32 %v2699, %v2701
    %v2703 = vrot.slane %v2442, %v2702
    %v2705 = vunpack.c.l.s4 1966171168
    %v2706 = vunpack.c.0.s8 %v2705
    %v2707 = vlaneseq
    %v2708 = vshrl.u32 %v2707, 7
    %v2709 = vsub.s32 %v2706, %v2708
    %v2710 = vrot.slane %v2696, %v2709
    %v2711 = vcombine.high %v2703, %v2703
    %v2712 = vcombine.high %v2710, %v2710
    %v2714 = vunpack.c.l.s4 1966171168
    %v2715 = vunpack.c.0.s8 %v2714
    %v2716 = vlaneseq
    %v2717 = vshrl.u32 %v2716, 7
    %v2718 = vsub.s32 %v2715, %v2717
    %v2719 = vrot.slane %v2703, %v2718
    %v2721 = vunpack.c.l.s4 1966171168
    %v2722 = vunpack.c.0.s8 %v2721
    %v2723 = vlaneseq
    %v2724 = vshrl.u32 %v2723, 7
    %v2725 = vsub.s32 %v2722, %v2724
    %v2726 = vrot.slane %v2710, %v2725
    %v2728 = vunpack.c.l.s4 1966171168
    %v2729 = vunpack.c.0.s8 %v2728
    %v2730 = vlaneseq
    %v2731 = vshrl.u32 %v2730, 7
    %v2732 = vsub.s32 %v2729, %v2731
    %v2733 = vrot.slane %v2711, %v2732
    %v2735 = vunpack.c.l.s4 1966171168
    %v2736 = vunpack.c.0.s8 %v2735
    %v2737 = vlaneseq
    %v2738 = vshrl.u32 %v2737, 7
    %v2739 = vsub.s32 %v2736, %v2738
    %v2740 = vrot.slane %v2712, %v2739
    %v2741 = vcombine.high %v2719, %v2719
    %v2742 = vcombine.high %v2726, %v2726
    %v2743 = vcombine.high %v2733, %v2733
    %v2744 = vcombine.high %v2740, %v2740
    %v2745 = vld [vmem:[%s1] sm:$0xff]
    %v2746 = vld [vmem:[%s1 + $0x8] sm:$0xff]
    %v2747 = vld [vmem:[%s1 + $0x10] sm:$0xff]
    %v2748 = vld [vmem:[%s1 + $0x18] sm:$0xff]
    %v2749 = vld [vmem:[%s1 + $0x20] sm:$0xff]
    %v2750 = vld [vmem:[%s1 + $0x28] sm:$0xff]
    %v2751 = vld [vmem:[%s1 + $0x30] sm:$0xff]
    %v2752 = vld [vmem:[%s1 + $0x38] sm:$0xff]
    %v2753 = vlaneseq
    %v2754 = vshrl.u32 %v2753, 7
    %v2755 = vsub.s32 0, %v2754
    %v2756 = vrot.slane %v2474, %v2755
    %v2757 = vlaneseq
    %v2758 = vshrl.u32 %v2757, 7
    %v2759 = vsub.s32 0, %v2758
    %v2760 = vrot.slane %v2488, %v2759
    %v2761 = vlaneseq
    %v2762 = vshrl.u32 %v2761, 7
    %v2763 = vsub.s32 0, %v2762
    %v2764 = vrot.slane %v2496, %v2763
    %v2765 = vlaneseq
    %v2766 = vshrl.u32 %v2765, 7
    %v2767 = vsub.s32 0, %v2766
    %v2768 = vrot.slane %v2498, %v2767
    %v2769 = vlaneseq
    %v2770 = vshrl.u32 %v2769, 7
    %v2771 = vsub.s32 0, %v2770
    %v2772 = vrot.slane %v2481, %v2771
    %v2773 = vlaneseq
    %v2774 = vshrl.u32 %v2773, 7
    %v2775 = vsub.s32 0, %v2774
    %v2776 = vrot.slane %v2495, %v2775
    %v2777 = vlaneseq
    %v2778 = vshrl.u32 %v2777, 7
    %v2779 = vsub.s32 0, %v2778
    %v2780 = vrot.slane %v2497, %v2779
    %v2781 = vlaneseq
    %v2782 = vshrl.u32 %v2781, 7
    %v2783 = vsub.s32 0, %v2782
    %v2784 = vrot.slane %v2499, %v2783
    %v2785 = vlaneseq
    %v2786 = vshrl.u32 %v2785, 7
    %v2787 = vsub.s32 0, %v2786
    %v2788 = vrot.slane %v2523, %v2787
    %v2789 = vlaneseq
    %v2790 = vshrl.u32 %v2789, 7
    %v2791 = vsub.s32 0, %v2790
    %v2792 = vrot.slane %v2537, %v2791
    %v2793 = vlaneseq
    %v2794 = vshrl.u32 %v2793, 7
    %v2795 = vsub.s32 0, %v2794
    %v2796 = vrot.slane %v2545, %v2795
    %v2797 = vlaneseq
    %v2798 = vshrl.u32 %v2797, 7
    %v2799 = vsub.s32 0, %v2798
    %v2800 = vrot.slane %v2547, %v2799
    %v2801 = vlaneseq
    %v2802 = vshrl.u32 %v2801, 7
    %v2803 = vsub.s32 0, %v2802
    %v2804 = vrot.slane %v2530, %v2803
    %v2805 = vlaneseq
    %v2806 = vshrl.u32 %v2805, 7
    %v2807 = vsub.s32 0, %v2806
    %v2808 = vrot.slane %v2544, %v2807
    %v2809 = vlaneseq
    %v2810 = vshrl.u32 %v2809, 7
    %v2811 = vsub.s32 0, %v2810
    %v2812 = vrot.slane %v2546, %v2811
    %v2813 = vlaneseq
    %v2814 = vshrl.u32 %v2813, 7
    %v2815 = vsub.s32 0, %v2814
    %v2816 = vrot.slane %v2548, %v2815
    %v2817 = vlaneseq
    %v2818 = vshrl.u32 %v2817, 7
    %v2819 = vsub.s32 0, %v2818
    %v2820 = vrot.slane %v2572, %v2819
    %v2821 = vlaneseq
    %v2822 = vshrl.u32 %v2821, 7
    %v2823 = vsub.s32 0, %v2822
    %v2824 = vrot.slane %v2586, %v2823
    %v2825 = vlaneseq
    %v2826 = vshrl.u32 %v2825, 7
    %v2827 = vsub.s32 0, %v2826
    %v2828 = vrot.slane %v2594, %v2827
    %v2829 = vlaneseq
    %v2830 = vshrl.u32 %v2829, 7
    %v2831 = vsub.s32 0, %v2830
    %v2832 = vrot.slane %v2596, %v2831
    %v2833 = vlaneseq
    %v2834 = vshrl.u32 %v2833, 7
    %v2835 = vsub.s32 0, %v2834
    %v2836 = vrot.slane %v2579, %v2835
    %v2837 = vlaneseq
    %v2838 = vshrl.u32 %v2837, 7
    %v2839 = vsub.s32 0, %v2838
    %v2840 = vrot.slane %v2593, %v2839
    %v2841 = vlaneseq
    %v2842 = vshrl.u32 %v2841, 7
    %v2843 = vsub.s32 0, %v2842
    %v2844 = vrot.slane %v2595, %v2843
    %v2845 = vlaneseq
    %v2846 = vshrl.u32 %v2845, 7
    %v2847 = vsub.s32 0, %v2846
    %v2848 = vrot.slane %v2597, %v2847
    %v2849 = vlaneseq
    %v2850 = vshrl.u32 %v2849, 7
    %v2851 = vsub.s32 0, %v2850
    %v2852 = vrot.slane %v2621, %v2851
    %v2853 = vlaneseq
    %v2854 = vshrl.u32 %v2853, 7
    %v2855 = vsub.s32 0, %v2854
    %v2856 = vrot.slane %v2635, %v2855
    %v2857 = vlaneseq
    %v2858 = vshrl.u32 %v2857, 7
    %v2859 = vsub.s32 0, %v2858
    %v2860 = vrot.slane %v2643, %v2859
    %v2861 = vlaneseq
    %v2862 = vshrl.u32 %v2861, 7
    %v2863 = vsub.s32 0, %v2862
    %v2864 = vrot.slane %v2645, %v2863
    %v2865 = vlaneseq
    %v2866 = vshrl.u32 %v2865, 7
    %v2867 = vsub.s32 0, %v2866
    %v2868 = vrot.slane %v2628, %v2867
    %v2869 = vlaneseq
    %v2870 = vshrl.u32 %v2869, 7
    %v2871 = vsub.s32 0, %v2870
    %v2872 = vrot.slane %v2642, %v2871
    %v2873 = vlaneseq
    %v2874 = vshrl.u32 %v2873, 7
    %v2875 = vsub.s32 0, %v2874
    %v2876 = vrot.slane %v2644, %v2875
    %v2877 = vlaneseq
    %v2878 = vshrl.u32 %v2877, 7
    %v2879 = vsub.s32 0, %v2878
    %v2880 = vrot.slane %v2646, %v2879
    %v2881 = vlaneseq
    %v2882 = vshrl.u32 %v2881, 7
    %v2883 = vsub.s32 0, %v2882
    %v2884 = vrot.slane %v2670, %v2883
    %v2885 = vlaneseq
    %v2886 = vshrl.u32 %v2885, 7
    %v2887 = vsub.s32 0, %v2886
    %v2888 = vrot.slane %v2684, %v2887
    %v2889 = vlaneseq
    %v2890 = vshrl.u32 %v2889, 7
    %v2891 = vsub.s32 0, %v2890
    %v2892 = vrot.slane %v2692, %v2891
    %v2893 = vlaneseq
    %v2894 = vshrl.u32 %v2893, 7
    %v2895 = vsub.s32 0, %v2894
    %v2896 = vrot.slane %v2694, %v2895
    %v2897 = vlaneseq
    %v2898 = vshrl.u32 %v2897, 7
    %v2899 = vsub.s32 0, %v2898
    %v2900 = vrot.slane %v2677, %v2899
    %v2901 = vlaneseq
    %v2902 = vshrl.u32 %v2901, 7
    %v2903 = vsub.s32 0, %v2902
    %v2904 = vrot.slane %v2691, %v2903
    %v2905 = vlaneseq
    %v2906 = vshrl.u32 %v2905, 7
    %v2907 = vsub.s32 0, %v2906
    %v2908 = vrot.slane %v2693, %v2907
    %v2909 = vlaneseq
    %v2910 = vshrl.u32 %v2909, 7
    %v2911 = vsub.s32 0, %v2910
    %v2912 = vrot.slane %v2695, %v2911
    %v2913 = vlaneseq
    %v2914 = vshrl.u32 %v2913, 7
    %v2915 = vsub.s32 0, %v2914
    %v2916 = vrot.slane %v2719, %v2915
    %v2917 = vlaneseq
    %v2918 = vshrl.u32 %v2917, 7
    %v2919 = vsub.s32 0, %v2918
    %v2920 = vrot.slane %v2733, %v2919
    %v2921 = vlaneseq
    %v2922 = vshrl.u32 %v2921, 7
    %v2923 = vsub.s32 0, %v2922
    %v2924 = vrot.slane %v2741, %v2923
    %v2925 = vlaneseq
    %v2926 = vshrl.u32 %v2925, 7
    %v2927 = vsub.s32 0, %v2926
    %v2928 = vrot.slane %v2743, %v2927
    %v2929 = vlaneseq
    %v2930 = vshrl.u32 %v2929, 7
    %v2931 = vsub.s32 0, %v2930
    %v2932 = vrot.slane %v2726, %v2931
    %v2933 = vlaneseq
    %v2934 = vshrl.u32 %v2933, 7
    %v2935 = vsub.s32 0, %v2934
    %v2936 = vrot.slane %v2740, %v2935
    %v2937 = vlaneseq
    %v2938 = vshrl.u32 %v2937, 7
    %v2939 = vsub.s32 0, %v2938
    %v2940 = vrot.slane %v2742, %v2939
    %v2941 = vlaneseq
    %v2942 = vshrl.u32 %v2941, 7
    %v2943 = vsub.s32 0, %v2942
    %v2944 = vrot.slane %v2744, %v2943
    %v2993 = vmul.f32 %v2756, %v2745
    %v2994 = vmul.f32 %v2760, %v2746
    %v2995 = vmul.f32 %v2764, %v2747
    %v2996 = vmul.f32 %v2768, %v2748
    %v2997 = vmul.f32 %v2772, %v2749
    %v2998 = vmul.f32 %v2776, %v2750
    %v2999 = vmul.f32 %v2780, %v2751
    %v3000 = vmul.f32 %v2784, %v2752
    %v3001 = vmul.f32 %v2788, %v2745
    %v3002 = vmul.f32 %v2792, %v2746
    %v3003 = vmul.f32 %v2796, %v2747
    %v3004 = vmul.f32 %v2800, %v2748
    %v3005 = vmul.f32 %v2804, %v2749
    %v3006 = vmul.f32 %v2808, %v2750
    %v3007 = vmul.f32 %v2812, %v2751
    %v3008 = vmul.f32 %v2816, %v2752
    %v3009 = vmul.f32 %v2820, %v2745
    %v3010 = vmul.f32 %v2824, %v2746
    %v3011 = vmul.f32 %v2828, %v2747
    %v3012 = vmul.f32 %v2832, %v2748
    %v3013 = vmul.f32 %v2836, %v2749
    %v3014 = vmul.f32 %v2840, %v2750
    %v3015 = vmul.f32 %v2844, %v2751
    %v3016 = vmul.f32 %v2848, %v2752
    %v3017 = vmul.f32 %v2852, %v2745
    %v3018 = vmul.f32 %v2856, %v2746
    %v3019 = vmul.f32 %v2860, %v2747
    %v3020 = vmul.f32 %v2864, %v2748
    %v3021 = vmul.f32 %v2868, %v2749
    %v3022 = vmul.f32 %v2872, %v2750
    %v3023 = vmul.f32 %v2876, %v2751
    %v3024 = vmul.f32 %v2880, %v2752
    %v3025 = vmul.f32 %v2884, %v2745
    %v3026 = vmul.f32 %v2888, %v2746
    %v3027 = vmul.f32 %v2892, %v2747
    %v3028 = vmul.f32 %v2896, %v2748
    %v3029 = vmul.f32 %v2900, %v2749
    %v3030 = vmul.f32 %v2904, %v2750
    %v3031 = vmul.f32 %v2908, %v2751
    %v3032 = vmul.f32 %v2912, %v2752
    %v3033 = vmul.f32 %v2916, %v2745
    %v3034 = vmul.f32 %v2920, %v2746
    %v3035 = vmul.f32 %v2924, %v2747
    %v3036 = vmul.f32 %v2928, %v2748
    %v3037 = vmul.f32 %v2932, %v2749
    %v3038 = vmul.f32 %v2936, %v2750
    %v3039 = vmul.f32 %v2940, %v2751
    %v3040 = vmul.f32 %v2944, %v2752
    %v3041 = vsel %vm114, %v2993, 0.0
    %3042 = vadd.xlane.f32.xlu0 %v3041
    %v3043 = vpop.xlane.xlu0 %3042
    %v3044 = vsel %vm114, %v2994, 0.0
    %3045 = vadd.xlane.f32.xlu0 %v3044
    %v3046 = vpop.xlane.xlu0 %3045
    %v3047 = vsel %vm114, %v2995, 0.0
    %3048 = vadd.xlane.f32.xlu0 %v3047
    %v3049 = vpop.xlane.xlu0 %3048
    %v3050 = vsel %vm114, %v2996, 0.0
    %3051 = vadd.xlane.f32.xlu0 %v3050
    %v3052 = vpop.xlane.xlu0 %3051
    %v3053 = vsel %vm114, %v2997, 0.0
    %3054 = vadd.xlane.f32.xlu0 %v3053
    %v3055 = vpop.xlane.xlu0 %3054
    %v3056 = vsel %vm114, %v2998, 0.0
    %3057 = vadd.xlane.f32.xlu0 %v3056
    %v3058 = vpop.xlane.xlu0 %3057
    %v3059 = vsel %vm114, %v2999, 0.0
    %3060 = vadd.xlane.f32.xlu0 %v3059
    %v3061 = vpop.xlane.xlu0 %3060
    %v3062 = vsel %vm114, %v3000, 0.0
    %3063 = vadd.xlane.f32.xlu0 %v3062
    %v3064 = vpop.xlane.xlu0 %3063
    %v3065 = vsel %vm114, %v3001, 0.0
    %3066 = vadd.xlane.f32.xlu0 %v3065
    %v3067 = vpop.xlane.xlu0 %3066
    %v3068 = vsel %vm114, %v3002, 0.0
    %3069 = vadd.xlane.f32.xlu0 %v3068
    %v3070 = vpop.xlane.xlu0 %3069
    %v3071 = vsel %vm114, %v3003, 0.0
    %3072 = vadd.xlane.f32.xlu0 %v3071
    %v3073 = vpop.xlane.xlu0 %3072
    %v3074 = vsel %vm114, %v3004, 0.0
    %3075 = vadd.xlane.f32.xlu0 %v3074
    %v3076 = vpop.xlane.xlu0 %3075
    %v3077 = vsel %vm114, %v3005, 0.0
    %3078 = vadd.xlane.f32.xlu0 %v3077
    %v3079 = vpop.xlane.xlu0 %3078
    %v3080 = vsel %vm114, %v3006, 0.0
    %3081 = vadd.xlane.f32.xlu0 %v3080
    %v3082 = vpop.xlane.xlu0 %3081
    %v3083 = vsel %vm114, %v3007, 0.0
    %3084 = vadd.xlane.f32.xlu0 %v3083
    %v3085 = vpop.xlane.xlu0 %3084
    %v3086 = vsel %vm114, %v3008, 0.0
    %3087 = vadd.xlane.f32.xlu0 %v3086
    %v3088 = vpop.xlane.xlu0 %3087
    %v3089 = vsel %vm114, %v3009, 0.0
    %3090 = vadd.xlane.f32.xlu0 %v3089
    %v3091 = vpop.xlane.xlu0 %3090
    %v3092 = vsel %vm114, %v3010, 0.0
    %3093 = vadd.xlane.f32.xlu0 %v3092
    %v3094 = vpop.xlane.xlu0 %3093
    %v3095 = vsel %vm114, %v3011, 0.0
    %3096 = vadd.xlane.f32.xlu0 %v3095
    %v3097 = vpop.xlane.xlu0 %3096
    %v3098 = vsel %vm114, %v3012, 0.0
    %3099 = vadd.xlane.f32.xlu0 %v3098
    %v3100 = vpop.xlane.xlu0 %3099
    %v3101 = vsel %vm114, %v3013, 0.0
    %3102 = vadd.xlane.f32.xlu0 %v3101
    %v3103 = vpop.xlane.xlu0 %3102
    %v3104 = vsel %vm114, %v3014, 0.0
    %3105 = vadd.xlane.f32.xlu0 %v3104
    %v3106 = vpop.xlane.xlu0 %3105
    %v3107 = vsel %vm114, %v3015, 0.0
    %3108 = vadd.xlane.f32.xlu0 %v3107
    %v3109 = vpop.xlane.xlu0 %3108
    %v3110 = vsel %vm114, %v3016, 0.0
    %3111 = vadd.xlane.f32.xlu0 %v3110
    %v3112 = vpop.xlane.xlu0 %3111
    %v3113 = vsel %vm114, %v3017, 0.0
    %3114 = vadd.xlane.f32.xlu0 %v3113
    %v3115 = vpop.xlane.xlu0 %3114
    %v3116 = vsel %vm114, %v3018, 0.0
    %3117 = vadd.xlane.f32.xlu0 %v3116
    %v3118 = vpop.xlane.xlu0 %3117
    %v3119 = vsel %vm114, %v3019, 0.0
    %3120 = vadd.xlane.f32.xlu0 %v3119
    %v3121 = vpop.xlane.xlu0 %3120
    %v3122 = vsel %vm114, %v3020, 0.0
    %3123 = vadd.xlane.f32.xlu0 %v3122
    %v3124 = vpop.xlane.xlu0 %3123
    %v3125 = vsel %vm114, %v3021, 0.0
    %3126 = vadd.xlane.f32.xlu0 %v3125
    %v3127 = vpop.xlane.xlu0 %3126
    %v3128 = vsel %vm114, %v3022, 0.0
    %3129 = vadd.xlane.f32.xlu0 %v3128
    %v3130 = vpop.xlane.xlu0 %3129
    %v3131 = vsel %vm114, %v3023, 0.0
    %3132 = vadd.xlane.f32.xlu0 %v3131
    %v3133 = vpop.xlane.xlu0 %3132
    %v3134 = vsel %vm114, %v3024, 0.0
    %3135 = vadd.xlane.f32.xlu0 %v3134
    %v3136 = vpop.xlane.xlu0 %3135
    %v3137 = vsel %vm114, %v3025, 0.0
    %3138 = vadd.xlane.f32.xlu0 %v3137
    %v3139 = vpop.xlane.xlu0 %3138
    %v3140 = vsel %vm114, %v3026, 0.0
    %3141 = vadd.xlane.f32.xlu0 %v3140
    %v3142 = vpop.xlane.xlu0 %3141
    %v3143 = vsel %vm114, %v3027, 0.0
    %3144 = vadd.xlane.f32.xlu0 %v3143
    %v3145 = vpop.xlane.xlu0 %3144
    %v3146 = vsel %vm114, %v3028, 0.0
    %3147 = vadd.xlane.f32.xlu0 %v3146
    %v3148 = vpop.xlane.xlu0 %3147
    %v3149 = vsel %vm114, %v3029, 0.0
    %3150 = vadd.xlane.f32.xlu0 %v3149
    %v3151 = vpop.xlane.xlu0 %3150
    %v3152 = vsel %vm114, %v3030, 0.0
    %3153 = vadd.xlane.f32.xlu0 %v3152
    %v3154 = vpop.xlane.xlu0 %3153
    %v3155 = vsel %vm114, %v3031, 0.0
    %3156 = vadd.xlane.f32.xlu0 %v3155
    %v3157 = vpop.xlane.xlu0 %3156
    %v3158 = vsel %vm114, %v3032, 0.0
    %3159 = vadd.xlane.f32.xlu0 %v3158
    %v3160 = vpop.xlane.xlu0 %3159
    %v3161 = vsel %vm114, %v3033, 0.0
    %3162 = vadd.xlane.f32.xlu0 %v3161
    %v3163 = vpop.xlane.xlu0 %3162
    %v3164 = vsel %vm114, %v3034, 0.0
    %3165 = vadd.xlane.f32.xlu0 %v3164
    %v3166 = vpop.xlane.xlu0 %3165
    %v3167 = vsel %vm114, %v3035, 0.0
    %3168 = vadd.xlane.f32.xlu0 %v3167
    %v3169 = vpop.xlane.xlu0 %3168
    %v3170 = vsel %vm114, %v3036, 0.0
    %3171 = vadd.xlane.f32.xlu0 %v3170
    %v3172 = vpop.xlane.xlu0 %3171
    %v3173 = vsel %vm114, %v3037, 0.0
    %3174 = vadd.xlane.f32.xlu0 %v3173
    %v3175 = vpop.xlane.xlu0 %3174
    %v3176 = vsel %vm114, %v3038, 0.0
    %3177 = vadd.xlane.f32.xlu0 %v3176
    %v3178 = vpop.xlane.xlu0 %3177
    %v3179 = vsel %vm114, %v3039, 0.0
    %3180 = vadd.xlane.f32.xlu0 %v3179
    %v3181 = vpop.xlane.xlu0 %3180
    %v3182 = vsel %vm114, %v3040, 0.0
    %3183 = vadd.xlane.f32.xlu0 %v3182
    %v3184 = vpop.xlane.xlu0 %3183
    %v3233 = vlaneseq
    %v3234 = vand.u32 %v3233, 127
    %v3235 = vlaneseq
    %v3236 = vshrl.u32 %v3235, 7
    %v3237 = vsub.s32 %v3234, %v3236
    %v3238 = vrot.slane %v3043, %v3237
    %v3239 = vlaneseq
    %v3240 = vshrl.u32 %v3239, 7
    %v3241 = vsub.s32 %v3234, %v3240
    %v3242 = vrot.slane %v3046, %v3241
    %v3243 = vlaneseq
    %v3244 = vshrl.u32 %v3243, 7
    %v3245 = vsub.s32 %v3234, %v3244
    %v3246 = vrot.slane %v3049, %v3245
    %v3247 = vlaneseq
    %v3248 = vshrl.u32 %v3247, 7
    %v3249 = vsub.s32 %v3234, %v3248
    %v3250 = vrot.slane %v3052, %v3249
    %v3251 = vlaneseq
    %v3252 = vshrl.u32 %v3251, 7
    %v3253 = vsub.s32 %v3234, %v3252
    %v3254 = vrot.slane %v3055, %v3253
    %v3255 = vlaneseq
    %v3256 = vshrl.u32 %v3255, 7
    %v3257 = vsub.s32 %v3234, %v3256
    %v3258 = vrot.slane %v3058, %v3257
    %v3259 = vlaneseq
    %v3260 = vshrl.u32 %v3259, 7
    %v3261 = vsub.s32 %v3234, %v3260
    %v3262 = vrot.slane %v3061, %v3261
    %v3263 = vlaneseq
    %v3264 = vshrl.u32 %v3263, 7
    %v3265 = vsub.s32 %v3234, %v3264
    %v3266 = vrot.slane %v3064, %v3265
    %v3267 = vlaneseq
    %v3268 = vshrl.u32 %v3267, 7
    %v3269 = vsub.s32 %v3234, %v3268
    %v3270 = vrot.slane %v3067, %v3269
    %v3271 = vlaneseq
    %v3272 = vshrl.u32 %v3271, 7
    %v3273 = vsub.s32 %v3234, %v3272
    %v3274 = vrot.slane %v3070, %v3273
    %v3275 = vlaneseq
    %v3276 = vshrl.u32 %v3275, 7
    %v3277 = vsub.s32 %v3234, %v3276
    %v3278 = vrot.slane %v3073, %v3277
    %v3279 = vlaneseq
    %v3280 = vshrl.u32 %v3279, 7
    %v3281 = vsub.s32 %v3234, %v3280
    %v3282 = vrot.slane %v3076, %v3281
    %v3283 = vlaneseq
    %v3284 = vshrl.u32 %v3283, 7
    %v3285 = vsub.s32 %v3234, %v3284
    %v3286 = vrot.slane %v3079, %v3285
    %v3287 = vlaneseq
    %v3288 = vshrl.u32 %v3287, 7
    %v3289 = vsub.s32 %v3234, %v3288
    %v3290 = vrot.slane %v3082, %v3289
    %v3291 = vlaneseq
    %v3292 = vshrl.u32 %v3291, 7
    %v3293 = vsub.s32 %v3234, %v3292
    %v3294 = vrot.slane %v3085, %v3293
    %v3295 = vlaneseq
    %v3296 = vshrl.u32 %v3295, 7
    %v3297 = vsub.s32 %v3234, %v3296
    %v3298 = vrot.slane %v3088, %v3297
    %v3299 = vlaneseq
    %v3300 = vshrl.u32 %v3299, 7
    %v3301 = vsub.s32 %v3234, %v3300
    %v3302 = vrot.slane %v3091, %v3301
    %v3303 = vlaneseq
    %v3304 = vshrl.u32 %v3303, 7
    %v3305 = vsub.s32 %v3234, %v3304
    %v3306 = vrot.slane %v3094, %v3305
    %v3307 = vlaneseq
    %v3308 = vshrl.u32 %v3307, 7
    %v3309 = vsub.s32 %v3234, %v3308
    %v3310 = vrot.slane %v3097, %v3309
    %v3311 = vlaneseq
    %v3312 = vshrl.u32 %v3311, 7
    %v3313 = vsub.s32 %v3234, %v3312
    %v3314 = vrot.slane %v3100, %v3313
    %v3315 = vlaneseq
    %v3316 = vshrl.u32 %v3315, 7
    %v3317 = vsub.s32 %v3234, %v3316
    %v3318 = vrot.slane %v3103, %v3317
    %v3319 = vlaneseq
    %v3320 = vshrl.u32 %v3319, 7
    %v3321 = vsub.s32 %v3234, %v3320
    %v3322 = vrot.slane %v3106, %v3321
    %v3323 = vlaneseq
    %v3324 = vshrl.u32 %v3323, 7
    %v3325 = vsub.s32 %v3234, %v3324
    %v3326 = vrot.slane %v3109, %v3325
    %v3327 = vlaneseq
    %v3328 = vshrl.u32 %v3327, 7
    %v3329 = vsub.s32 %v3234, %v3328
    %v3330 = vrot.slane %v3112, %v3329
    %v3331 = vlaneseq
    %v3332 = vshrl.u32 %v3331, 7
    %v3333 = vsub.s32 %v3234, %v3332
    %v3334 = vrot.slane %v3115, %v3333
    %v3335 = vlaneseq
    %v3336 = vshrl.u32 %v3335, 7
    %v3337 = vsub.s32 %v3234, %v3336
    %v3338 = vrot.slane %v3118, %v3337
    %v3339 = vlaneseq
    %v3340 = vshrl.u32 %v3339, 7
    %v3341 = vsub.s32 %v3234, %v3340
    %v3342 = vrot.slane %v3121, %v3341
    %v3343 = vlaneseq
    %v3344 = vshrl.u32 %v3343, 7
    %v3345 = vsub.s32 %v3234, %v3344
    %v3346 = vrot.slane %v3124, %v3345
    %v3347 = vlaneseq
    %v3348 = vshrl.u32 %v3347, 7
    %v3349 = vsub.s32 %v3234, %v3348
    %v3350 = vrot.slane %v3127, %v3349
    %v3351 = vlaneseq
    %v3352 = vshrl.u32 %v3351, 7
    %v3353 = vsub.s32 %v3234, %v3352
    %v3354 = vrot.slane %v3130, %v3353
    %v3355 = vlaneseq
    %v3356 = vshrl.u32 %v3355, 7
    %v3357 = vsub.s32 %v3234, %v3356
    %v3358 = vrot.slane %v3133, %v3357
    %v3359 = vlaneseq
    %v3360 = vshrl.u32 %v3359, 7
    %v3361 = vsub.s32 %v3234, %v3360
    %v3362 = vrot.slane %v3136, %v3361
    %v3363 = vlaneseq
    %v3364 = vshrl.u32 %v3363, 7
    %v3365 = vsub.s32 %v3234, %v3364
    %v3366 = vrot.slane %v3139, %v3365
    %v3367 = vlaneseq
    %v3368 = vshrl.u32 %v3367, 7
    %v3369 = vsub.s32 %v3234, %v3368
    %v3370 = vrot.slane %v3142, %v3369
    %v3371 = vlaneseq
    %v3372 = vshrl.u32 %v3371, 7
    %v3373 = vsub.s32 %v3234, %v3372
    %v3374 = vrot.slane %v3145, %v3373
    %v3375 = vlaneseq
    %v3376 = vshrl.u32 %v3375, 7
    %v3377 = vsub.s32 %v3234, %v3376
    %v3378 = vrot.slane %v3148, %v3377
    %v3379 = vlaneseq
    %v3380 = vshrl.u32 %v3379, 7
    %v3381 = vsub.s32 %v3234, %v3380
    %v3382 = vrot.slane %v3151, %v3381
    %v3383 = vlaneseq
    %v3384 = vshrl.u32 %v3383, 7
    %v3385 = vsub.s32 %v3234, %v3384
    %v3386 = vrot.slane %v3154, %v3385
    %v3387 = vlaneseq
    %v3388 = vshrl.u32 %v3387, 7
    %v3389 = vsub.s32 %v3234, %v3388
    %v3390 = vrot.slane %v3157, %v3389
    %v3391 = vlaneseq
    %v3392 = vshrl.u32 %v3391, 7
    %v3393 = vsub.s32 %v3234, %v3392
    %v3394 = vrot.slane %v3160, %v3393
    %v3395 = vlaneseq
    %v3396 = vshrl.u32 %v3395, 7
    %v3397 = vsub.s32 %v3234, %v3396
    %v3398 = vrot.slane %v3163, %v3397
    %v3399 = vlaneseq
    %v3400 = vshrl.u32 %v3399, 7
    %v3401 = vsub.s32 %v3234, %v3400
    %v3402 = vrot.slane %v3166, %v3401
    %v3403 = vlaneseq
    %v3404 = vshrl.u32 %v3403, 7
    %v3405 = vsub.s32 %v3234, %v3404
    %v3406 = vrot.slane %v3169, %v3405
    %v3407 = vlaneseq
    %v3408 = vshrl.u32 %v3407, 7
    %v3409 = vsub.s32 %v3234, %v3408
    %v3410 = vrot.slane %v3172, %v3409
    %v3411 = vlaneseq
    %v3412 = vshrl.u32 %v3411, 7
    %v3413 = vsub.s32 %v3234, %v3412
    %v3414 = vrot.slane %v3175, %v3413
    %v3415 = vlaneseq
    %v3416 = vshrl.u32 %v3415, 7
    %v3417 = vsub.s32 %v3234, %v3416
    %v3418 = vrot.slane %v3178, %v3417
    %v3419 = vlaneseq
    %v3420 = vshrl.u32 %v3419, 7
    %v3421 = vsub.s32 %v3234, %v3420
    %v3422 = vrot.slane %v3181, %v3421
    %v3423 = vlaneseq
    %v3424 = vshrl.u32 %v3423, 7
    %v3425 = vsub.s32 %v3234, %v3424
    %v3426 = vrot.slane %v3184, %v3425
    %vm3427 = vcmask 1041409
    %v3428 = vsel %vm3427, %v3242, %v3238
    %vm3429 = vcmask 1042434
    %v3430 = vsel %vm3429, %v3246, %v3428
    %vm3431 = vcmask 1043459
    %v3432 = vsel %vm3431, %v3250, %v3430
    %vm3433 = vcmask 1044484
    %v3434 = vsel %vm3433, %v3254, %v3432
    %vm3435 = vcmask 1045509
    %v3436 = vsel %vm3435, %v3258, %v3434
    %vm3437 = vcmask 1046534
    %v3438 = vsel %vm3437, %v3262, %v3436
    %vm3439 = vcmask 1047559
    %v3440 = vsel %vm3439, %v3266, %v3438
    %v3441 = vsel %vm3427, %v3274, %v3270
    %v3442 = vsel %vm3429, %v3278, %v3441
    %v3443 = vsel %vm3431, %v3282, %v3442
    %v3444 = vsel %vm3433, %v3286, %v3443
    %v3445 = vsel %vm3435, %v3290, %v3444
    %v3446 = vsel %vm3437, %v3294, %v3445
    %v3447 = vsel %vm3439, %v3298, %v3446
    %v3448 = vsel %vm3427, %v3306, %v3302
    %v3449 = vsel %vm3429, %v3310, %v3448
    %v3450 = vsel %vm3431, %v3314, %v3449
    %v3451 = vsel %vm3433, %v3318, %v3450
    %v3452 = vsel %vm3435, %v3322, %v3451
    %v3453 = vsel %vm3437, %v3326, %v3452
    %v3454 = vsel %vm3439, %v3330, %v3453
    %v3455 = vsel %vm3427, %v3338, %v3334
    %v3456 = vsel %vm3429, %v3342, %v3455
    %v3457 = vsel %vm3431, %v3346, %v3456
    %v3458 = vsel %vm3433, %v3350, %v3457
    %v3459 = vsel %vm3435, %v3354, %v3458
    %v3460 = vsel %vm3437, %v3358, %v3459
    %v3461 = vsel %vm3439, %v3362, %v3460
    %v3462 = vsel %vm3427, %v3370, %v3366
    %v3463 = vsel %vm3429, %v3374, %v3462
    %v3464 = vsel %vm3431, %v3378, %v3463
    %v3465 = vsel %vm3433, %v3382, %v3464
    %v3466 = vsel %vm3435, %v3386, %v3465
    %v3467 = vsel %vm3437, %v3390, %v3466
    %v3468 = vsel %vm3439, %v3394, %v3467
    %v3469 = vsel %vm3427, %v3402, %v3398
    %v3470 = vsel %vm3429, %v3406, %v3469
    %v3471 = vsel %vm3431, %v3410, %v3470
    %v3472 = vsel %vm3433, %v3414, %v3471
    %v3473 = vsel %vm3435, %v3418, %v3472
    %v3474 = vsel %vm3437, %v3422, %v3473
    %v3475 = vsel %vm3439, %v3426, %v3474
    %vm3482 = vcmask 64512
    %v3483 = vsel %vm3482, %v3440, -inf
    %3484 = vmax.xlane.f32.xlu0 %v3483
    %v3485 = vpop.xlane.xlu0 %3484
    %v3486 = vsel %vm3482, %v3447, -inf
    %3487 = vmax.xlane.f32.xlu0 %v3486
    %v3488 = vpop.xlane.xlu0 %3487
    %v3489 = vsel %vm3482, %v3454, -inf
    %3490 = vmax.xlane.f32.xlu0 %v3489
    %v3491 = vpop.xlane.xlu0 %3490
    %v3492 = vsel %vm3482, %v3461, -inf
    %3493 = vmax.xlane.f32.xlu0 %v3492
    %v3494 = vpop.xlane.xlu0 %3493
    %v3495 = vsel %vm3482, %v3468, -inf
    %3496 = vmax.xlane.f32.xlu0 %v3495
    %v3497 = vpop.xlane.xlu0 %3496
    %v3498 = vsel %vm3482, %v3475, -inf
    %3499 = vmax.xlane.f32.xlu0 %v3498
    %v3500 = vpop.xlane.xlu0 %3499
    %v3507 = vlaneseq
    %v3508 = vshrl.u32 %v3507, 7
    %v3509 = vsub.s32 0, %v3508
    %v3510 = vrot.slane %v3485, %v3509
    %v3511 = vlaneseq
    %v3512 = vshrl.u32 %v3511, 7
    %v3513 = vsub.s32 1, %v3512
    %v3514 = vrot.slane %v3485, %v3513
    %v3515 = vlaneseq
    %v3516 = vshrl.u32 %v3515, 7
    %v3517 = vsub.s32 2, %v3516
    %v3518 = vrot.slane %v3485, %v3517
    %v3519 = vlaneseq
    %v3520 = vshrl.u32 %v3519, 7
    %v3521 = vsub.s32 3, %v3520
    %v3522 = vrot.slane %v3485, %v3521
    %v3523 = vlaneseq
    %v3524 = vshrl.u32 %v3523, 7
    %v3525 = vsub.s32 4, %v3524
    %v3526 = vrot.slane %v3485, %v3525
    %v3527 = vlaneseq
    %v3528 = vshrl.u32 %v3527, 7
    %v3529 = vsub.s32 5, %v3528
    %v3530 = vrot.slane %v3485, %v3529
    %v3531 = vlaneseq
    %v3532 = vshrl.u32 %v3531, 7
    %v3533 = vsub.s32 6, %v3532
    %v3534 = vrot.slane %v3485, %v3533
    %v3535 = vlaneseq
    %v3536 = vshrl.u32 %v3535, 7
    %v3537 = vsub.s32 7, %v3536
    %v3538 = vrot.slane %v3485, %v3537
    %v3539 = vlaneseq
    %v3540 = vshrl.u32 %v3539, 7
    %v3541 = vsub.s32 0, %v3540
    %v3542 = vrot.slane %v3488, %v3541
    %v3543 = vlaneseq
    %v3544 = vshrl.u32 %v3543, 7
    %v3545 = vsub.s32 1, %v3544
    %v3546 = vrot.slane %v3488, %v3545
    %v3547 = vlaneseq
    %v3548 = vshrl.u32 %v3547, 7
    %v3549 = vsub.s32 2, %v3548
    %v3550 = vrot.slane %v3488, %v3549
    %v3551 = vlaneseq
    %v3552 = vshrl.u32 %v3551, 7
    %v3553 = vsub.s32 3, %v3552
    %v3554 = vrot.slane %v3488, %v3553
    %v3555 = vlaneseq
    %v3556 = vshrl.u32 %v3555, 7
    %v3557 = vsub.s32 4, %v3556
    %v3558 = vrot.slane %v3488, %v3557
    %v3559 = vlaneseq
    %v3560 = vshrl.u32 %v3559, 7
    %v3561 = vsub.s32 5, %v3560
    %v3562 = vrot.slane %v3488, %v3561
    %v3563 = vlaneseq
    %v3564 = vshrl.u32 %v3563, 7
    %v3565 = vsub.s32 6, %v3564
    %v3566 = vrot.slane %v3488, %v3565
    %v3567 = vlaneseq
    %v3568 = vshrl.u32 %v3567, 7
    %v3569 = vsub.s32 7, %v3568
    %v3570 = vrot.slane %v3488, %v3569
    %v3571 = vlaneseq
    %v3572 = vshrl.u32 %v3571, 7
    %v3573 = vsub.s32 0, %v3572
    %v3574 = vrot.slane %v3491, %v3573
    %v3575 = vlaneseq
    %v3576 = vshrl.u32 %v3575, 7
    %v3577 = vsub.s32 1, %v3576
    %v3578 = vrot.slane %v3491, %v3577
    %v3579 = vlaneseq
    %v3580 = vshrl.u32 %v3579, 7
    %v3581 = vsub.s32 2, %v3580
    %v3582 = vrot.slane %v3491, %v3581
    %v3583 = vlaneseq
    %v3584 = vshrl.u32 %v3583, 7
    %v3585 = vsub.s32 3, %v3584
    %v3586 = vrot.slane %v3491, %v3585
    %v3587 = vlaneseq
    %v3588 = vshrl.u32 %v3587, 7
    %v3589 = vsub.s32 4, %v3588
    %v3590 = vrot.slane %v3491, %v3589
    %v3591 = vlaneseq
    %v3592 = vshrl.u32 %v3591, 7
    %v3593 = vsub.s32 5, %v3592
    %v3594 = vrot.slane %v3491, %v3593
    %v3595 = vlaneseq
    %v3596 = vshrl.u32 %v3595, 7
    %v3597 = vsub.s32 6, %v3596
    %v3598 = vrot.slane %v3491, %v3597
    %v3599 = vlaneseq
    %v3600 = vshrl.u32 %v3599, 7
    %v3601 = vsub.s32 7, %v3600
    %v3602 = vrot.slane %v3491, %v3601
    %v3603 = vlaneseq
    %v3604 = vshrl.u32 %v3603, 7
    %v3605 = vsub.s32 0, %v3604
    %v3606 = vrot.slane %v3494, %v3605
    %v3607 = vlaneseq
    %v3608 = vshrl.u32 %v3607, 7
    %v3609 = vsub.s32 1, %v3608
    %v3610 = vrot.slane %v3494, %v3609
    %v3611 = vlaneseq
    %v3612 = vshrl.u32 %v3611, 7
    %v3613 = vsub.s32 2, %v3612
    %v3614 = vrot.slane %v3494, %v3613
    %v3615 = vlaneseq
    %v3616 = vshrl.u32 %v3615, 7
    %v3617 = vsub.s32 3, %v3616
    %v3618 = vrot.slane %v3494, %v3617
    %v3619 = vlaneseq
    %v3620 = vshrl.u32 %v3619, 7
    %v3621 = vsub.s32 4, %v3620
    %v3622 = vrot.slane %v3494, %v3621
    %v3623 = vlaneseq
    %v3624 = vshrl.u32 %v3623, 7
    %v3625 = vsub.s32 5, %v3624
    %v3626 = vrot.slane %v3494, %v3625
    %v3627 = vlaneseq
    %v3628 = vshrl.u32 %v3627, 7
    %v3629 = vsub.s32 6, %v3628
    %v3630 = vrot.slane %v3494, %v3629
    %v3631 = vlaneseq
    %v3632 = vshrl.u32 %v3631, 7
    %v3633 = vsub.s32 7, %v3632
    %v3634 = vrot.slane %v3494, %v3633
    %v3635 = vlaneseq
    %v3636 = vshrl.u32 %v3635, 7
    %v3637 = vsub.s32 0, %v3636
    %v3638 = vrot.slane %v3497, %v3637
    %v3639 = vlaneseq
    %v3640 = vshrl.u32 %v3639, 7
    %v3641 = vsub.s32 1, %v3640
    %v3642 = vrot.slane %v3497, %v3641
    %v3643 = vlaneseq
    %v3644 = vshrl.u32 %v3643, 7
    %v3645 = vsub.s32 2, %v3644
    %v3646 = vrot.slane %v3497, %v3645
    %v3647 = vlaneseq
    %v3648 = vshrl.u32 %v3647, 7
    %v3649 = vsub.s32 3, %v3648
    %v3650 = vrot.slane %v3497, %v3649
    %v3651 = vlaneseq
    %v3652 = vshrl.u32 %v3651, 7
    %v3653 = vsub.s32 4, %v3652
    %v3654 = vrot.slane %v3497, %v3653
    %v3655 = vlaneseq
    %v3656 = vshrl.u32 %v3655, 7
    %v3657 = vsub.s32 5, %v3656
    %v3658 = vrot.slane %v3497, %v3657
    %v3659 = vlaneseq
    %v3660 = vshrl.u32 %v3659, 7
    %v3661 = vsub.s32 6, %v3660
    %v3662 = vrot.slane %v3497, %v3661
    %v3663 = vlaneseq
    %v3664 = vshrl.u32 %v3663, 7
    %v3665 = vsub.s32 7, %v3664
    %v3666 = vrot.slane %v3497, %v3665
    %v3667 = vlaneseq
    %v3668 = vshrl.u32 %v3667, 7
    %v3669 = vsub.s32 0, %v3668
    %v3670 = vrot.slane %v3500, %v3669
    %v3671 = vlaneseq
    %v3672 = vshrl.u32 %v3671, 7
    %v3673 = vsub.s32 1, %v3672
    %v3674 = vrot.slane %v3500, %v3673
    %v3675 = vlaneseq
    %v3676 = vshrl.u32 %v3675, 7
    %v3677 = vsub.s32 2, %v3676
    %v3678 = vrot.slane %v3500, %v3677
    %v3679 = vlaneseq
    %v3680 = vshrl.u32 %v3679, 7
    %v3681 = vsub.s32 3, %v3680
    %v3682 = vrot.slane %v3500, %v3681
    %v3683 = vlaneseq
    %v3684 = vshrl.u32 %v3683, 7
    %v3685 = vsub.s32 4, %v3684
    %v3686 = vrot.slane %v3500, %v3685
    %v3687 = vlaneseq
    %v3688 = vshrl.u32 %v3687, 7
    %v3689 = vsub.s32 5, %v3688
    %v3690 = vrot.slane %v3500, %v3689
    %v3691 = vlaneseq
    %v3692 = vshrl.u32 %v3691, 7
    %v3693 = vsub.s32 6, %v3692
    %v3694 = vrot.slane %v3500, %v3693
    %v3695 = vlaneseq
    %v3696 = vshrl.u32 %v3695, 7
    %v3697 = vsub.s32 7, %v3696
    %v3698 = vrot.slane %v3500, %v3697
    %v3747 = vsub.f32 %v3043, %v3510
    %v3748 = vsub.f32 %v3046, %v3514
    %v3749 = vsub.f32 %v3049, %v3518
    %v3750 = vsub.f32 %v3052, %v3522
    %v3751 = vsub.f32 %v3055, %v3526
    %v3752 = vsub.f32 %v3058, %v3530
    %v3753 = vsub.f32 %v3061, %v3534
    %v3754 = vsub.f32 %v3064, %v3538
    %v3755 = vsub.f32 %v3067, %v3542
    %v3756 = vsub.f32 %v3070, %v3546
    %v3757 = vsub.f32 %v3073, %v3550
    %v3758 = vsub.f32 %v3076, %v3554
    %v3759 = vsub.f32 %v3079, %v3558
    %v3760 = vsub.f32 %v3082, %v3562
    %v3761 = vsub.f32 %v3085, %v3566
    %v3762 = vsub.f32 %v3088, %v3570
    %v3763 = vsub.f32 %v3091, %v3574
    %v3764 = vsub.f32 %v3094, %v3578
    %v3765 = vsub.f32 %v3097, %v3582
    %v3766 = vsub.f32 %v3100, %v3586
    %v3767 = vsub.f32 %v3103, %v3590
    %v3768 = vsub.f32 %v3106, %v3594
    %v3769 = vsub.f32 %v3109, %v3598
    %v3770 = vsub.f32 %v3112, %v3602
    %v3771 = vsub.f32 %v3115, %v3606
    %v3772 = vsub.f32 %v3118, %v3610
    %v3773 = vsub.f32 %v3121, %v3614
    %v3774 = vsub.f32 %v3124, %v3618
    %v3775 = vsub.f32 %v3127, %v3622
    %v3776 = vsub.f32 %v3130, %v3626
    %v3777 = vsub.f32 %v3133, %v3630
    %v3778 = vsub.f32 %v3136, %v3634
    %v3779 = vsub.f32 %v3139, %v3638
    %v3780 = vsub.f32 %v3142, %v3642
    %v3781 = vsub.f32 %v3145, %v3646
    %v3782 = vsub.f32 %v3148, %v3650
    %v3783 = vsub.f32 %v3151, %v3654
    %v3784 = vsub.f32 %v3154, %v3658
    %v3785 = vsub.f32 %v3157, %v3662
    %v3786 = vsub.f32 %v3160, %v3666
    %v3787 = vsub.f32 %v3163, %v3670
    %v3788 = vsub.f32 %v3166, %v3674
    %v3789 = vsub.f32 %v3169, %v3678
    %v3790 = vsub.f32 %v3172, %v3682
    %v3791 = vsub.f32 %v3175, %v3686
    %v3792 = vsub.f32 %v3178, %v3690
    %v3793 = vsub.f32 %v3181, %v3694
    %v3794 = vsub.f32 %v3184, %v3698
    %v3795 = vmul.f32 %v3747, 1.442695
    %v3796 = vpow.pop %v3795
    %v3797 = vmul.f32 %v3748, 1.442695
    %v3798 = vpow.pop %v3797
    %v3799 = vmul.f32 %v3749, 1.442695
    %v3800 = vpow.pop %v3799
    %v3801 = vmul.f32 %v3750, 1.442695
    %v3802 = vpow.pop %v3801
    %v3803 = vmul.f32 %v3751, 1.442695
    %v3804 = vpow.pop %v3803
    %v3805 = vmul.f32 %v3752, 1.442695
    %v3806 = vpow.pop %v3805
    %v3807 = vmul.f32 %v3753, 1.442695
    %v3808 = vpow.pop %v3807
    %v3809 = vmul.f32 %v3754, 1.442695
    %v3810 = vpow.pop %v3809
    %v3811 = vmul.f32 %v3755, 1.442695
    %v3812 = vpow.pop %v3811
    %v3813 = vmul.f32 %v3756, 1.442695
    %v3814 = vpow.pop %v3813
    %v3815 = vmul.f32 %v3757, 1.442695
    %v3816 = vpow.pop %v3815
    %v3817 = vmul.f32 %v3758, 1.442695
    %v3818 = vpow.pop %v3817
    %v3819 = vmul.f32 %v3759, 1.442695
    %v3820 = vpow.pop %v3819
    %v3821 = vmul.f32 %v3760, 1.442695
    %v3822 = vpow.pop %v3821
    %v3823 = vmul.f32 %v3761, 1.442695
    %v3824 = vpow.pop %v3823
    %v3825 = vmul.f32 %v3762, 1.442695
    %v3826 = vpow.pop %v3825
    %v3827 = vmul.f32 %v3763, 1.442695
    %v3828 = vpow.pop %v3827
    %v3829 = vmul.f32 %v3764, 1.442695
    %v3830 = vpow.pop %v3829
    %v3831 = vmul.f32 %v3765, 1.442695
    %v3832 = vpow.pop %v3831
    %v3833 = vmul.f32 %v3766, 1.442695
    %v3834 = vpow.pop %v3833
    %v3835 = vmul.f32 %v3767, 1.442695
    %v3836 = vpow.pop %v3835
    %v3837 = vmul.f32 %v3768, 1.442695
    %v3838 = vpow.pop %v3837
    %v3839 = vmul.f32 %v3769, 1.442695
    %v3840 = vpow.pop %v3839
    %v3841 = vmul.f32 %v3770, 1.442695
    %v3842 = vpow.pop %v3841
    %v3843 = vmul.f32 %v3771, 1.442695
    %v3844 = vpow.pop %v3843
    %v3845 = vmul.f32 %v3772, 1.442695
    %v3846 = vpow.pop %v3845
    %v3847 = vmul.f32 %v3773, 1.442695
    %v3848 = vpow.pop %v3847
    %v3849 = vmul.f32 %v3774, 1.442695
    %v3850 = vpow.pop %v3849
    %v3851 = vmul.f32 %v3775, 1.442695
    %v3852 = vpow.pop %v3851
    %v3853 = vmul.f32 %v3776, 1.442695
    %v3854 = vpow.pop %v3853
    %v3855 = vmul.f32 %v3777, 1.442695
    %v3856 = vpow.pop %v3855
    %v3857 = vmul.f32 %v3778, 1.442695
    %v3858 = vpow.pop %v3857
    %v3859 = vmul.f32 %v3779, 1.442695
    %v3860 = vpow.pop %v3859
    %v3861 = vmul.f32 %v3780, 1.442695
    %v3862 = vpow.pop %v3861
    %v3863 = vmul.f32 %v3781, 1.442695
    %v3864 = vpow.pop %v3863
    %v3865 = vmul.f32 %v3782, 1.442695
    %v3866 = vpow.pop %v3865
    %v3867 = vmul.f32 %v3783, 1.442695
    %v3868 = vpow.pop %v3867
    %v3869 = vmul.f32 %v3784, 1.442695
    %v3870 = vpow.pop %v3869
    %v3871 = vmul.f32 %v3785, 1.442695
    %v3872 = vpow.pop %v3871
    %v3873 = vmul.f32 %v3786, 1.442695
    %v3874 = vpow.pop %v3873
    %v3875 = vmul.f32 %v3787, 1.442695
    %v3876 = vpow.pop %v3875
    %v3877 = vmul.f32 %v3788, 1.442695
    %v3878 = vpow.pop %v3877
    %v3879 = vmul.f32 %v3789, 1.442695
    %v3880 = vpow.pop %v3879
    %v3881 = vmul.f32 %v3790, 1.442695
    %v3882 = vpow.pop %v3881
    %v3883 = vmul.f32 %v3791, 1.442695
    %v3884 = vpow.pop %v3883
    %v3885 = vmul.f32 %v3792, 1.442695
    %v3886 = vpow.pop %v3885
    %v3887 = vmul.f32 %v3793, 1.442695
    %v3888 = vpow.pop %v3887
    %v3889 = vmul.f32 %v3794, 1.442695
    %v3890 = vpow.pop %v3889
    %3939 = vset.pattern.permute.xlu0 0
    %3940 = vperm.xlu0 %3939, %v3796
    %v3941 = vpop.permute.xlu0 %3940
    %3942 = vset.pattern.permute.xlu0 0
    %3943 = vperm.xlu0 %3942, %v3798
    %v3944 = vpop.permute.xlu0 %3943
    %3945 = vset.pattern.permute.xlu0 0
    %3946 = vperm.xlu0 %3945, %v3800
    %v3947 = vpop.permute.xlu0 %3946
    %3948 = vset.pattern.permute.xlu0 0
    %3949 = vperm.xlu0 %3948, %v3802
    %v3950 = vpop.permute.xlu0 %3949
    %3951 = vset.pattern.permute.xlu0 0
    %3952 = vperm.xlu0 %3951, %v3804
    %v3953 = vpop.permute.xlu0 %3952
    %3954 = vset.pattern.permute.xlu0 0
    %3955 = vperm.xlu0 %3954, %v3806
    %v3956 = vpop.permute.xlu0 %3955
    %3957 = vset.pattern.permute.xlu0 0
    %3958 = vperm.xlu0 %3957, %v3808
    %v3959 = vpop.permute.xlu0 %3958
    %3960 = vset.pattern.permute.xlu0 0
    %3961 = vperm.xlu0 %3960, %v3810
    %v3962 = vpop.permute.xlu0 %3961
    %3963 = vset.pattern.permute.xlu0 0
    %3964 = vperm.xlu0 %3963, %v3812
    %v3965 = vpop.permute.xlu0 %3964
    %3966 = vset.pattern.permute.xlu0 0
    %3967 = vperm.xlu0 %3966, %v3814
    %v3968 = vpop.permute.xlu0 %3967
    %3969 = vset.pattern.permute.xlu0 0
    %3970 = vperm.xlu0 %3969, %v3816
    %v3971 = vpop.permute.xlu0 %3970
    %3972 = vset.pattern.permute.xlu0 0
    %3973 = vperm.xlu0 %3972, %v3818
    %v3974 = vpop.permute.xlu0 %3973
    %3975 = vset.pattern.permute.xlu0 0
    %3976 = vperm.xlu0 %3975, %v3820
    %v3977 = vpop.permute.xlu0 %3976
    %3978 = vset.pattern.permute.xlu0 0
    %3979 = vperm.xlu0 %3978, %v3822
    %v3980 = vpop.permute.xlu0 %3979
    %3981 = vset.pattern.permute.xlu0 0
    %3982 = vperm.xlu0 %3981, %v3824
    %v3983 = vpop.permute.xlu0 %3982
    %3984 = vset.pattern.permute.xlu0 0
    %3985 = vperm.xlu0 %3984, %v3826
    %v3986 = vpop.permute.xlu0 %3985
    %3987 = vset.pattern.permute.xlu0 0
    %3988 = vperm.xlu0 %3987, %v3828
    %v3989 = vpop.permute.xlu0 %3988
    %3990 = vset.pattern.permute.xlu0 0
    %3991 = vperm.xlu0 %3990, %v3830
    %v3992 = vpop.permute.xlu0 %3991
    %3993 = vset.pattern.permute.xlu0 0
    %3994 = vperm.xlu0 %3993, %v3832
    %v3995 = vpop.permute.xlu0 %3994
    %3996 = vset.pattern.permute.xlu0 0
    %3997 = vperm.xlu0 %3996, %v3834
    %v3998 = vpop.permute.xlu0 %3997
    %3999 = vset.pattern.permute.xlu0 0
    %4000 = vperm.xlu0 %3999, %v3836
    %v4001 = vpop.permute.xlu0 %4000
    %4002 = vset.pattern.permute.xlu0 0
    %4003 = vperm.xlu0 %4002, %v3838
    %v4004 = vpop.permute.xlu0 %4003
    %4005 = vset.pattern.permute.xlu0 0
    %4006 = vperm.xlu0 %4005, %v3840
    %v4007 = vpop.permute.xlu0 %4006
    %4008 = vset.pattern.permute.xlu0 0
    %4009 = vperm.xlu0 %4008, %v3842
    %v4010 = vpop.permute.xlu0 %4009
    %4011 = vset.pattern.permute.xlu0 0
    %4012 = vperm.xlu0 %4011, %v3844
    %v4013 = vpop.permute.xlu0 %4012
    %4014 = vset.pattern.permute.xlu0 0
    %4015 = vperm.xlu0 %4014, %v3846
    %v4016 = vpop.permute.xlu0 %4015
    %4017 = vset.pattern.permute.xlu0 0
    %4018 = vperm.xlu0 %4017, %v3848
    %v4019 = vpop.permute.xlu0 %4018
    %4020 = vset.pattern.permute.xlu0 0
    %4021 = vperm.xlu0 %4020, %v3850
    %v4022 = vpop.permute.xlu0 %4021
    %4023 = vset.pattern.permute.xlu0 0
    %4024 = vperm.xlu0 %4023, %v3852
    %v4025 = vpop.permute.xlu0 %4024
    %4026 = vset.pattern.permute.xlu0 0
    %4027 = vperm.xlu0 %4026, %v3854
    %v4028 = vpop.permute.xlu0 %4027
    %4029 = vset.pattern.permute.xlu0 0
    %4030 = vperm.xlu0 %4029, %v3856
    %v4031 = vpop.permute.xlu0 %4030
    %4032 = vset.pattern.permute.xlu0 0
    %4033 = vperm.xlu0 %4032, %v3858
    %v4034 = vpop.permute.xlu0 %4033
    %4035 = vset.pattern.permute.xlu0 0
    %4036 = vperm.xlu0 %4035, %v3860
    %v4037 = vpop.permute.xlu0 %4036
    %4038 = vset.pattern.permute.xlu0 0
    %4039 = vperm.xlu0 %4038, %v3862
    %v4040 = vpop.permute.xlu0 %4039
    %4041 = vset.pattern.permute.xlu0 0
    %4042 = vperm.xlu0 %4041, %v3864
    %v4043 = vpop.permute.xlu0 %4042
    %4044 = vset.pattern.permute.xlu0 0
    %4045 = vperm.xlu0 %4044, %v3866
    %v4046 = vpop.permute.xlu0 %4045
    %4047 = vset.pattern.permute.xlu0 0
    %4048 = vperm.xlu0 %4047, %v3868
    %v4049 = vpop.permute.xlu0 %4048
    %4050 = vset.pattern.permute.xlu0 0
    %4051 = vperm.xlu0 %4050, %v3870
    %v4052 = vpop.permute.xlu0 %4051
    %4053 = vset.pattern.permute.xlu0 0
    %4054 = vperm.xlu0 %4053, %v3872
    %v4055 = vpop.permute.xlu0 %4054
    %4056 = vset.pattern.permute.xlu0 0
    %4057 = vperm.xlu0 %4056, %v3874
    %v4058 = vpop.permute.xlu0 %4057
    %4059 = vset.pattern.permute.xlu0 0
    %4060 = vperm.xlu0 %4059, %v3876
    %v4061 = vpop.permute.xlu0 %4060
    %4062 = vset.pattern.permute.xlu0 0
    %4063 = vperm.xlu0 %4062, %v3878
    %v4064 = vpop.permute.xlu0 %4063
    %4065 = vset.pattern.permute.xlu0 0
    %4066 = vperm.xlu0 %4065, %v3880
    %v4067 = vpop.permute.xlu0 %4066
    %4068 = vset.pattern.permute.xlu0 0
    %4069 = vperm.xlu0 %4068, %v3882
    %v4070 = vpop.permute.xlu0 %4069
    %4071 = vset.pattern.permute.xlu0 0
    %4072 = vperm.xlu0 %4071, %v3884
    %v4073 = vpop.permute.xlu0 %4072
    %4074 = vset.pattern.permute.xlu0 0
    %4075 = vperm.xlu0 %4074, %v3886
    %v4076 = vpop.permute.xlu0 %4075
    %4077 = vset.pattern.permute.xlu0 0
    %4078 = vperm.xlu0 %4077, %v3888
    %v4079 = vpop.permute.xlu0 %4078
    %4080 = vset.pattern.permute.xlu0 0
    %4081 = vperm.xlu0 %4080, %v3890
    %v4082 = vpop.permute.xlu0 %4081
    %v4083 = vlaneseq
    %v4084 = vshrl.u32 %v4083, 7
    %v4085 = vsub.s32 %v3234, %v4084
    %v4086 = vrot.slane %v3941, %v4085
    %v4087 = vlaneseq
    %v4088 = vshrl.u32 %v4087, 7
    %v4089 = vsub.s32 %v3234, %v4088
    %v4090 = vrot.slane %v3944, %v4089
    %v4091 = vlaneseq
    %v4092 = vshrl.u32 %v4091, 7
    %v4093 = vsub.s32 %v3234, %v4092
    %v4094 = vrot.slane %v3947, %v4093
    %v4095 = vlaneseq
    %v4096 = vshrl.u32 %v4095, 7
    %v4097 = vsub.s32 %v3234, %v4096
    %v4098 = vrot.slane %v3950, %v4097
    %v4099 = vlaneseq
    %v4100 = vshrl.u32 %v4099, 7
    %v4101 = vsub.s32 %v3234, %v4100
    %v4102 = vrot.slane %v3953, %v4101
    %v4103 = vlaneseq
    %v4104 = vshrl.u32 %v4103, 7
    %v4105 = vsub.s32 %v3234, %v4104
    %v4106 = vrot.slane %v3956, %v4105
    %v4107 = vlaneseq
    %v4108 = vshrl.u32 %v4107, 7
    %v4109 = vsub.s32 %v3234, %v4108
    %v4110 = vrot.slane %v3959, %v4109
    %v4111 = vlaneseq
    %v4112 = vshrl.u32 %v4111, 7
    %v4113 = vsub.s32 %v3234, %v4112
    %v4114 = vrot.slane %v3962, %v4113
    %v4115 = vlaneseq
    %v4116 = vshrl.u32 %v4115, 7
    %v4117 = vsub.s32 %v3234, %v4116
    %v4118 = vrot.slane %v3965, %v4117
    %v4119 = vlaneseq
    %v4120 = vshrl.u32 %v4119, 7
    %v4121 = vsub.s32 %v3234, %v4120
    %v4122 = vrot.slane %v3968, %v4121
    %v4123 = vlaneseq
    %v4124 = vshrl.u32 %v4123, 7
    %v4125 = vsub.s32 %v3234, %v4124
    %v4126 = vrot.slane %v3971, %v4125
    %v4127 = vlaneseq
    %v4128 = vshrl.u32 %v4127, 7
    %v4129 = vsub.s32 %v3234, %v4128
    %v4130 = vrot.slane %v3974, %v4129
    %v4131 = vlaneseq
    %v4132 = vshrl.u32 %v4131, 7
    %v4133 = vsub.s32 %v3234, %v4132
    %v4134 = vrot.slane %v3977, %v4133
    %v4135 = vlaneseq
    %v4136 = vshrl.u32 %v4135, 7
    %v4137 = vsub.s32 %v3234, %v4136
    %v4138 = vrot.slane %v3980, %v4137
    %v4139 = vlaneseq
    %v4140 = vshrl.u32 %v4139, 7
    %v4141 = vsub.s32 %v3234, %v4140
    %v4142 = vrot.slane %v3983, %v4141
    %v4143 = vlaneseq
    %v4144 = vshrl.u32 %v4143, 7
    %v4145 = vsub.s32 %v3234, %v4144
    %v4146 = vrot.slane %v3986, %v4145
    %v4147 = vlaneseq
    %v4148 = vshrl.u32 %v4147, 7
    %v4149 = vsub.s32 %v3234, %v4148
    %v4150 = vrot.slane %v3989, %v4149
    %v4151 = vlaneseq
    %v4152 = vshrl.u32 %v4151, 7
    %v4153 = vsub.s32 %v3234, %v4152
    %v4154 = vrot.slane %v3992, %v4153
    %v4155 = vlaneseq
    %v4156 = vshrl.u32 %v4155, 7
    %v4157 = vsub.s32 %v3234, %v4156
    %v4158 = vrot.slane %v3995, %v4157
    %v4159 = vlaneseq
    %v4160 = vshrl.u32 %v4159, 7
    %v4161 = vsub.s32 %v3234, %v4160
    %v4162 = vrot.slane %v3998, %v4161
    %v4163 = vlaneseq
    %v4164 = vshrl.u32 %v4163, 7
    %v4165 = vsub.s32 %v3234, %v4164
    %v4166 = vrot.slane %v4001, %v4165
    %v4167 = vlaneseq
    %v4168 = vshrl.u32 %v4167, 7
    %v4169 = vsub.s32 %v3234, %v4168
    %v4170 = vrot.slane %v4004, %v4169
    %v4171 = vlaneseq
    %v4172 = vshrl.u32 %v4171, 7
    %v4173 = vsub.s32 %v3234, %v4172
    %v4174 = vrot.slane %v4007, %v4173
    %v4175 = vlaneseq
    %v4176 = vshrl.u32 %v4175, 7
    %v4177 = vsub.s32 %v3234, %v4176
    %v4178 = vrot.slane %v4010, %v4177
    %v4179 = vlaneseq
    %v4180 = vshrl.u32 %v4179, 7
    %v4181 = vsub.s32 %v3234, %v4180
    %v4182 = vrot.slane %v4013, %v4181
    %v4183 = vlaneseq
    %v4184 = vshrl.u32 %v4183, 7
    %v4185 = vsub.s32 %v3234, %v4184
    %v4186 = vrot.slane %v4016, %v4185
    %v4187 = vlaneseq
    %v4188 = vshrl.u32 %v4187, 7
    %v4189 = vsub.s32 %v3234, %v4188
    %v4190 = vrot.slane %v4019, %v4189
    %v4191 = vlaneseq
    %v4192 = vshrl.u32 %v4191, 7
    %v4193 = vsub.s32 %v3234, %v4192
    %v4194 = vrot.slane %v4022, %v4193
    %v4195 = vlaneseq
    %v4196 = vshrl.u32 %v4195, 7
    %v4197 = vsub.s32 %v3234, %v4196
    %v4198 = vrot.slane %v4025, %v4197
    %v4199 = vlaneseq
    %v4200 = vshrl.u32 %v4199, 7
    %v4201 = vsub.s32 %v3234, %v4200
    %v4202 = vrot.slane %v4028, %v4201
    %v4203 = vlaneseq
    %v4204 = vshrl.u32 %v4203, 7
    %v4205 = vsub.s32 %v3234, %v4204
    %v4206 = vrot.slane %v4031, %v4205
    %v4207 = vlaneseq
    %v4208 = vshrl.u32 %v4207, 7
    %v4209 = vsub.s32 %v3234, %v4208
    %v4210 = vrot.slane %v4034, %v4209
    %v4211 = vlaneseq
    %v4212 = vshrl.u32 %v4211, 7
    %v4213 = vsub.s32 %v3234, %v4212
    %v4214 = vrot.slane %v4037, %v4213
    %v4215 = vlaneseq
    %v4216 = vshrl.u32 %v4215, 7
    %v4217 = vsub.s32 %v3234, %v4216
    %v4218 = vrot.slane %v4040, %v4217
    %v4219 = vlaneseq
    %v4220 = vshrl.u32 %v4219, 7
    %v4221 = vsub.s32 %v3234, %v4220
    %v4222 = vrot.slane %v4043, %v4221
    %v4223 = vlaneseq
    %v4224 = vshrl.u32 %v4223, 7
    %v4225 = vsub.s32 %v3234, %v4224
    %v4226 = vrot.slane %v4046, %v4225
    %v4227 = vlaneseq
    %v4228 = vshrl.u32 %v4227, 7
    %v4229 = vsub.s32 %v3234, %v4228
    %v4230 = vrot.slane %v4049, %v4229
    %v4231 = vlaneseq
    %v4232 = vshrl.u32 %v4231, 7
    %v4233 = vsub.s32 %v3234, %v4232
    %v4234 = vrot.slane %v4052, %v4233
    %v4235 = vlaneseq
    %v4236 = vshrl.u32 %v4235, 7
    %v4237 = vsub.s32 %v3234, %v4236
    %v4238 = vrot.slane %v4055, %v4237
    %v4239 = vlaneseq
    %v4240 = vshrl.u32 %v4239, 7
    %v4241 = vsub.s32 %v3234, %v4240
    %v4242 = vrot.slane %v4058, %v4241
    %v4243 = vlaneseq
    %v4244 = vshrl.u32 %v4243, 7
    %v4245 = vsub.s32 %v3234, %v4244
    %v4246 = vrot.slane %v4061, %v4245
    %v4247 = vlaneseq
    %v4248 = vshrl.u32 %v4247, 7
    %v4249 = vsub.s32 %v3234, %v4248
    %v4250 = vrot.slane %v4064, %v4249
    %v4251 = vlaneseq
    %v4252 = vshrl.u32 %v4251, 7
    %v4253 = vsub.s32 %v3234, %v4252
    %v4254 = vrot.slane %v4067, %v4253
    %v4255 = vlaneseq
    %v4256 = vshrl.u32 %v4255, 7
    %v4257 = vsub.s32 %v3234, %v4256
    %v4258 = vrot.slane %v4070, %v4257
    %v4259 = vlaneseq
    %v4260 = vshrl.u32 %v4259, 7
    %v4261 = vsub.s32 %v3234, %v4260
    %v4262 = vrot.slane %v4073, %v4261
    %v4263 = vlaneseq
    %v4264 = vshrl.u32 %v4263, 7
    %v4265 = vsub.s32 %v3234, %v4264
    %v4266 = vrot.slane %v4076, %v4265
    %v4267 = vlaneseq
    %v4268 = vshrl.u32 %v4267, 7
    %v4269 = vsub.s32 %v3234, %v4268
    %v4270 = vrot.slane %v4079, %v4269
    %v4271 = vlaneseq
    %v4272 = vshrl.u32 %v4271, 7
    %v4273 = vsub.s32 %v3234, %v4272
    %v4274 = vrot.slane %v4082, %v4273
    %v4275 = vsel %vm3427, %v4090, %v4086
    %v4276 = vsel %vm3429, %v4094, %v4275
    %v4277 = vsel %vm3431, %v4098, %v4276
    %v4278 = vsel %vm3433, %v4102, %v4277
    %v4279 = vsel %vm3435, %v4106, %v4278
    %v4280 = vsel %vm3437, %v4110, %v4279
    %v4281 = vsel %vm3439, %v4114, %v4280
    %v4282 = vsel %vm3427, %v4122, %v4118
    %v4283 = vsel %vm3429, %v4126, %v4282
    %v4284 = vsel %vm3431, %v4130, %v4283
    %v4285 = vsel %vm3433, %v4134, %v4284
    %v4286 = vsel %vm3435, %v4138, %v4285
    %v4287 = vsel %vm3437, %v4142, %v4286
    %v4288 = vsel %vm3439, %v4146, %v4287
    %v4289 = vsel %vm3427, %v4154, %v4150
    %v4290 = vsel %vm3429, %v4158, %v4289
    %v4291 = vsel %vm3431, %v4162, %v4290
    %v4292 = vsel %vm3433, %v4166, %v4291
    %v4293 = vsel %vm3435, %v4170, %v4292
    %v4294 = vsel %vm3437, %v4174, %v4293
    %v4295 = vsel %vm3439, %v4178, %v4294
    %v4296 = vsel %vm3427, %v4186, %v4182
    %v4297 = vsel %vm3429, %v4190, %v4296
    %v4298 = vsel %vm3431, %v4194, %v4297
    %v4299 = vsel %vm3433, %v4198, %v4298
    %v4300 = vsel %vm3435, %v4202, %v4299
    %v4301 = vsel %vm3437, %v4206, %v4300
    %v4302 = vsel %vm3439, %v4210, %v4301
    %v4303 = vsel %vm3427, %v4218, %v4214
    %v4304 = vsel %vm3429, %v4222, %v4303
    %v4305 = vsel %vm3431, %v4226, %v4304
    %v4306 = vsel %vm3433, %v4230, %v4305
    %v4307 = vsel %vm3435, %v4234, %v4306
    %v4308 = vsel %vm3437, %v4238, %v4307
    %v4309 = vsel %vm3439, %v4242, %v4308
    %v4310 = vsel %vm3427, %v4250, %v4246
    %v4311 = vsel %vm3429, %v4254, %v4310
    %v4312 = vsel %vm3431, %v4258, %v4311
    %v4313 = vsel %vm3433, %v4262, %v4312
    %v4314 = vsel %vm3435, %v4266, %v4313
    %v4315 = vsel %vm3437, %v4270, %v4314
    %v4316 = vsel %vm3439, %v4274, %v4315
    %v4323 = vsel %vm3482, %v4281, 0.0
    %4324 = vadd.xlane.f32.xlu0 %v4323
    %v4325 = vpop.xlane.xlu0 %4324
    %v4326 = vsel %vm3482, %v4288, 0.0
    %4327 = vadd.xlane.f32.xlu0 %v4326
    %v4328 = vpop.xlane.xlu0 %4327
    %v4329 = vsel %vm3482, %v4295, 0.0
    %4330 = vadd.xlane.f32.xlu0 %v4329
    %v4331 = vpop.xlane.xlu0 %4330
    %v4332 = vsel %vm3482, %v4302, 0.0
    %4333 = vadd.xlane.f32.xlu0 %v4332
    %v4334 = vpop.xlane.xlu0 %4333
    %v4335 = vsel %vm3482, %v4309, 0.0
    %4336 = vadd.xlane.f32.xlu0 %v4335
    %v4337 = vpop.xlane.xlu0 %4336
    %v4338 = vsel %vm3482, %v4316, 0.0
    %4339 = vadd.xlane.f32.xlu0 %v4338
    %v4340 = vpop.xlane.xlu0 %4339
    %v4341 = vrcp.pop %v4325
    %v4342 = vrcp.pop %v4328
    %v4343 = vrcp.pop %v4331
    %v4344 = vrcp.pop %v4334
    %v4345 = vrcp.pop %v4337
    %v4346 = vrcp.pop %v4340
    %v4353 = vlaneseq
    %v4354 = vshrl.u32 %v4353, 7
    %v4355 = vsub.s32 0, %v4354
    %v4356 = vrot.slane %v4341, %v4355
    %v4357 = vlaneseq
    %v4358 = vshrl.u32 %v4357, 7
    %v4359 = vsub.s32 1, %v4358
    %v4360 = vrot.slane %v4341, %v4359
    %v4361 = vlaneseq
    %v4362 = vshrl.u32 %v4361, 7
    %v4363 = vsub.s32 2, %v4362
    %v4364 = vrot.slane %v4341, %v4363
    %v4365 = vlaneseq
    %v4366 = vshrl.u32 %v4365, 7
    %v4367 = vsub.s32 3, %v4366
    %v4368 = vrot.slane %v4341, %v4367
    %v4369 = vlaneseq
    %v4370 = vshrl.u32 %v4369, 7
    %v4371 = vsub.s32 4, %v4370
    %v4372 = vrot.slane %v4341, %v4371
    %v4373 = vlaneseq
    %v4374 = vshrl.u32 %v4373, 7
    %v4375 = vsub.s32 5, %v4374
    %v4376 = vrot.slane %v4341, %v4375
    %v4377 = vlaneseq
    %v4378 = vshrl.u32 %v4377, 7
    %v4379 = vsub.s32 6, %v4378
    %v4380 = vrot.slane %v4341, %v4379
    %v4381 = vlaneseq
    %v4382 = vshrl.u32 %v4381, 7
    %v4383 = vsub.s32 7, %v4382
    %v4384 = vrot.slane %v4341, %v4383
    %v4385 = vlaneseq
    %v4386 = vshrl.u32 %v4385, 7
    %v4387 = vsub.s32 0, %v4386
    %v4388 = vrot.slane %v4342, %v4387
    %v4389 = vlaneseq
    %v4390 = vshrl.u32 %v4389, 7
    %v4391 = vsub.s32 1, %v4390
    %v4392 = vrot.slane %v4342, %v4391
    %v4393 = vlaneseq
    %v4394 = vshrl.u32 %v4393, 7
    %v4395 = vsub.s32 2, %v4394
    %v4396 = vrot.slane %v4342, %v4395
    %v4397 = vlaneseq
    %v4398 = vshrl.u32 %v4397, 7
    %v4399 = vsub.s32 3, %v4398
    %v4400 = vrot.slane %v4342, %v4399
    %v4401 = vlaneseq
    %v4402 = vshrl.u32 %v4401, 7
    %v4403 = vsub.s32 4, %v4402
    %v4404 = vrot.slane %v4342, %v4403
    %v4405 = vlaneseq
    %v4406 = vshrl.u32 %v4405, 7
    %v4407 = vsub.s32 5, %v4406
    %v4408 = vrot.slane %v4342, %v4407
    %v4409 = vlaneseq
    %v4410 = vshrl.u32 %v4409, 7
    %v4411 = vsub.s32 6, %v4410
    %v4412 = vrot.slane %v4342, %v4411
    %v4413 = vlaneseq
    %v4414 = vshrl.u32 %v4413, 7
    %v4415 = vsub.s32 7, %v4414
    %v4416 = vrot.slane %v4342, %v4415
    %v4417 = vlaneseq
    %v4418 = vshrl.u32 %v4417, 7
    %v4419 = vsub.s32 0, %v4418
    %v4420 = vrot.slane %v4343, %v4419
    %v4421 = vlaneseq
    %v4422 = vshrl.u32 %v4421, 7
    %v4423 = vsub.s32 1, %v4422
    %v4424 = vrot.slane %v4343, %v4423
    %v4425 = vlaneseq
    %v4426 = vshrl.u32 %v4425, 7
    %v4427 = vsub.s32 2, %v4426
    %v4428 = vrot.slane %v4343, %v4427
    %v4429 = vlaneseq
    %v4430 = vshrl.u32 %v4429, 7
    %v4431 = vsub.s32 3, %v4430
    %v4432 = vrot.slane %v4343, %v4431
    %v4433 = vlaneseq
    %v4434 = vshrl.u32 %v4433, 7
    %v4435 = vsub.s32 4, %v4434
    %v4436 = vrot.slane %v4343, %v4435
    %v4437 = vlaneseq
    %v4438 = vshrl.u32 %v4437, 7
    %v4439 = vsub.s32 5, %v4438
    %v4440 = vrot.slane %v4343, %v4439
    %v4441 = vlaneseq
    %v4442 = vshrl.u32 %v4441, 7
    %v4443 = vsub.s32 6, %v4442
    %v4444 = vrot.slane %v4343, %v4443
    %v4445 = vlaneseq
    %v4446 = vshrl.u32 %v4445, 7
    %v4447 = vsub.s32 7, %v4446
    %v4448 = vrot.slane %v4343, %v4447
    %v4449 = vlaneseq
    %v4450 = vshrl.u32 %v4449, 7
    %v4451 = vsub.s32 0, %v4450
    %v4452 = vrot.slane %v4344, %v4451
    %v4453 = vlaneseq
    %v4454 = vshrl.u32 %v4453, 7
    %v4455 = vsub.s32 1, %v4454
    %v4456 = vrot.slane %v4344, %v4455
    %v4457 = vlaneseq
    %v4458 = vshrl.u32 %v4457, 7
    %v4459 = vsub.s32 2, %v4458
    %v4460 = vrot.slane %v4344, %v4459
    %v4461 = vlaneseq
    %v4462 = vshrl.u32 %v4461, 7
    %v4463 = vsub.s32 3, %v4462
    %v4464 = vrot.slane %v4344, %v4463
    %v4465 = vlaneseq
    %v4466 = vshrl.u32 %v4465, 7
    %v4467 = vsub.s32 4, %v4466
    %v4468 = vrot.slane %v4344, %v4467
    %v4469 = vlaneseq
    %v4470 = vshrl.u32 %v4469, 7
    %v4471 = vsub.s32 5, %v4470
    %v4472 = vrot.slane %v4344, %v4471
    %v4473 = vlaneseq
    %v4474 = vshrl.u32 %v4473, 7
    %v4475 = vsub.s32 6, %v4474
    %v4476 = vrot.slane %v4344, %v4475
    %v4477 = vlaneseq
    %v4478 = vshrl.u32 %v4477, 7
    %v4479 = vsub.s32 7, %v4478
    %v4480 = vrot.slane %v4344, %v4479
    %v4481 = vlaneseq
    %v4482 = vshrl.u32 %v4481, 7
    %v4483 = vsub.s32 0, %v4482
    %v4484 = vrot.slane %v4345, %v4483
    %v4485 = vlaneseq
    %v4486 = vshrl.u32 %v4485, 7
    %v4487 = vsub.s32 1, %v4486
    %v4488 = vrot.slane %v4345, %v4487
    %v4489 = vlaneseq
    %v4490 = vshrl.u32 %v4489, 7
    %v4491 = vsub.s32 2, %v4490
    %v4492 = vrot.slane %v4345, %v4491
    %v4493 = vlaneseq
    %v4494 = vshrl.u32 %v4493, 7
    %v4495 = vsub.s32 3, %v4494
    %v4496 = vrot.slane %v4345, %v4495
    %v4497 = vlaneseq
    %v4498 = vshrl.u32 %v4497, 7
    %v4499 = vsub.s32 4, %v4498
    %v4500 = vrot.slane %v4345, %v4499
    %v4501 = vlaneseq
    %v4502 = vshrl.u32 %v4501, 7
    %v4503 = vsub.s32 5, %v4502
    %v4504 = vrot.slane %v4345, %v4503
    %v4505 = vlaneseq
    %v4506 = vshrl.u32 %v4505, 7
    %v4507 = vsub.s32 6, %v4506
    %v4508 = vrot.slane %v4345, %v4507
    %v4509 = vlaneseq
    %v4510 = vshrl.u32 %v4509, 7
    %v4511 = vsub.s32 7, %v4510
    %v4512 = vrot.slane %v4345, %v4511
    %v4513 = vlaneseq
    %v4514 = vshrl.u32 %v4513, 7
    %v4515 = vsub.s32 0, %v4514
    %v4516 = vrot.slane %v4346, %v4515
    %v4517 = vlaneseq
    %v4518 = vshrl.u32 %v4517, 7
    %v4519 = vsub.s32 1, %v4518
    %v4520 = vrot.slane %v4346, %v4519
    %v4521 = vlaneseq
    %v4522 = vshrl.u32 %v4521, 7
    %v4523 = vsub.s32 2, %v4522
    %v4524 = vrot.slane %v4346, %v4523
    %v4525 = vlaneseq
    %v4526 = vshrl.u32 %v4525, 7
    %v4527 = vsub.s32 3, %v4526
    %v4528 = vrot.slane %v4346, %v4527
    %v4529 = vlaneseq
    %v4530 = vshrl.u32 %v4529, 7
    %v4531 = vsub.s32 4, %v4530
    %v4532 = vrot.slane %v4346, %v4531
    %v4533 = vlaneseq
    %v4534 = vshrl.u32 %v4533, 7
    %v4535 = vsub.s32 5, %v4534
    %v4536 = vrot.slane %v4346, %v4535
    %v4537 = vlaneseq
    %v4538 = vshrl.u32 %v4537, 7
    %v4539 = vsub.s32 6, %v4538
    %v4540 = vrot.slane %v4346, %v4539
    %v4541 = vlaneseq
    %v4542 = vshrl.u32 %v4541, 7
    %v4543 = vsub.s32 7, %v4542
    %v4544 = vrot.slane %v4346, %v4543
    %v4593 = vmul.f32 %v3796, %v4356
    %v4594 = vmul.f32 %v3798, %v4360
    %v4595 = vmul.f32 %v3800, %v4364
    %v4596 = vmul.f32 %v3802, %v4368
    %v4597 = vmul.f32 %v3804, %v4372
    %v4598 = vmul.f32 %v3806, %v4376
    %v4599 = vmul.f32 %v3808, %v4380
    %v4600 = vmul.f32 %v3810, %v4384
    %v4601 = vmul.f32 %v3812, %v4388
    %v4602 = vmul.f32 %v3814, %v4392
    %v4603 = vmul.f32 %v3816, %v4396
    %v4604 = vmul.f32 %v3818, %v4400
    %v4605 = vmul.f32 %v3820, %v4404
    %v4606 = vmul.f32 %v3822, %v4408
    %v4607 = vmul.f32 %v3824, %v4412
    %v4608 = vmul.f32 %v3826, %v4416
    %v4609 = vmul.f32 %v3828, %v4420
    %v4610 = vmul.f32 %v3830, %v4424
    %v4611 = vmul.f32 %v3832, %v4428
    %v4612 = vmul.f32 %v3834, %v4432
    %v4613 = vmul.f32 %v3836, %v4436
    %v4614 = vmul.f32 %v3838, %v4440
    %v4615 = vmul.f32 %v3840, %v4444
    %v4616 = vmul.f32 %v3842, %v4448
    %v4617 = vmul.f32 %v3844, %v4452
    %v4618 = vmul.f32 %v3846, %v4456
    %v4619 = vmul.f32 %v3848, %v4460
    %v4620 = vmul.f32 %v3850, %v4464
    %v4621 = vmul.f32 %v3852, %v4468
    %v4622 = vmul.f32 %v3854, %v4472
    %v4623 = vmul.f32 %v3856, %v4476
    %v4624 = vmul.f32 %v3858, %v4480
    %v4625 = vmul.f32 %v3860, %v4484
    %v4626 = vmul.f32 %v3862, %v4488
    %v4627 = vmul.f32 %v3864, %v4492
    %v4628 = vmul.f32 %v3866, %v4496
    %v4629 = vmul.f32 %v3868, %v4500
    %v4630 = vmul.f32 %v3870, %v4504
    %v4631 = vmul.f32 %v3872, %v4508
    %v4632 = vmul.f32 %v3874, %v4512
    %v4633 = vmul.f32 %v3876, %v4516
    %v4634 = vmul.f32 %v3878, %v4520
    %v4635 = vmul.f32 %v3880, %v4524
    %v4636 = vmul.f32 %v3882, %v4528
    %v4637 = vmul.f32 %v3884, %v4532
    %v4638 = vmul.f32 %v3886, %v4536
    %v4639 = vmul.f32 %v3888, %v4540
    %v4640 = vmul.f32 %v3890, %v4544
    %4689 = vset.pattern.permute.xlu0 0
    %4690 = vperm.xlu0 %4689, %v4593
    %v4691 = vpop.permute.xlu0 %4690
    %4692 = vset.pattern.permute.xlu0 0
    %4693 = vperm.xlu0 %4692, %v4594
    %v4694 = vpop.permute.xlu0 %4693
    %4695 = vset.pattern.permute.xlu0 0
    %4696 = vperm.xlu0 %4695, %v4595
    %v4697 = vpop.permute.xlu0 %4696
    %4698 = vset.pattern.permute.xlu0 0
    %4699 = vperm.xlu0 %4698, %v4596
    %v4700 = vpop.permute.xlu0 %4699
    %4701 = vset.pattern.permute.xlu0 0
    %4702 = vperm.xlu0 %4701, %v4597
    %v4703 = vpop.permute.xlu0 %4702
    %4704 = vset.pattern.permute.xlu0 0
    %4705 = vperm.xlu0 %4704, %v4598
    %v4706 = vpop.permute.xlu0 %4705
    %4707 = vset.pattern.permute.xlu0 0
    %4708 = vperm.xlu0 %4707, %v4599
    %v4709 = vpop.permute.xlu0 %4708
    %4710 = vset.pattern.permute.xlu0 0
    %4711 = vperm.xlu0 %4710, %v4600
    %v4712 = vpop.permute.xlu0 %4711
    %4713 = vset.pattern.permute.xlu0 0
    %4714 = vperm.xlu0 %4713, %v4601
    %v4715 = vpop.permute.xlu0 %4714
    %4716 = vset.pattern.permute.xlu0 0
    %4717 = vperm.xlu0 %4716, %v4602
    %v4718 = vpop.permute.xlu0 %4717
    %4719 = vset.pattern.permute.xlu0 0
    %4720 = vperm.xlu0 %4719, %v4603
    %v4721 = vpop.permute.xlu0 %4720
    %4722 = vset.pattern.permute.xlu0 0
    %4723 = vperm.xlu0 %4722, %v4604
    %v4724 = vpop.permute.xlu0 %4723
    %4725 = vset.pattern.permute.xlu0 0
    %4726 = vperm.xlu0 %4725, %v4605
    %v4727 = vpop.permute.xlu0 %4726
    %4728 = vset.pattern.permute.xlu0 0
    %4729 = vperm.xlu0 %4728, %v4606
    %v4730 = vpop.permute.xlu0 %4729
    %4731 = vset.pattern.permute.xlu0 0
    %4732 = vperm.xlu0 %4731, %v4607
    %v4733 = vpop.permute.xlu0 %4732
    %4734 = vset.pattern.permute.xlu0 0
    %4735 = vperm.xlu0 %4734, %v4608
    %v4736 = vpop.permute.xlu0 %4735
    %4737 = vset.pattern.permute.xlu0 0
    %4738 = vperm.xlu0 %4737, %v4609
    %v4739 = vpop.permute.xlu0 %4738
    %4740 = vset.pattern.permute.xlu0 0
    %4741 = vperm.xlu0 %4740, %v4610
    %v4742 = vpop.permute.xlu0 %4741
    %4743 = vset.pattern.permute.xlu0 0
    %4744 = vperm.xlu0 %4743, %v4611
    %v4745 = vpop.permute.xlu0 %4744
    %4746 = vset.pattern.permute.xlu0 0
    %4747 = vperm.xlu0 %4746, %v4612
    %v4748 = vpop.permute.xlu0 %4747
    %4749 = vset.pattern.permute.xlu0 0
    %4750 = vperm.xlu0 %4749, %v4613
    %v4751 = vpop.permute.xlu0 %4750
    %4752 = vset.pattern.permute.xlu0 0
    %4753 = vperm.xlu0 %4752, %v4614
    %v4754 = vpop.permute.xlu0 %4753
    %4755 = vset.pattern.permute.xlu0 0
    %4756 = vperm.xlu0 %4755, %v4615
    %v4757 = vpop.permute.xlu0 %4756
    %4758 = vset.pattern.permute.xlu0 0
    %4759 = vperm.xlu0 %4758, %v4616
    %v4760 = vpop.permute.xlu0 %4759
    %4761 = vset.pattern.permute.xlu0 0
    %4762 = vperm.xlu0 %4761, %v4617
    %v4763 = vpop.permute.xlu0 %4762
    %4764 = vset.pattern.permute.xlu0 0
    %4765 = vperm.xlu0 %4764, %v4618
    %v4766 = vpop.permute.xlu0 %4765
    %4767 = vset.pattern.permute.xlu0 0
    %4768 = vperm.xlu0 %4767, %v4619
    %v4769 = vpop.permute.xlu0 %4768
    %4770 = vset.pattern.permute.xlu0 0
    %4771 = vperm.xlu0 %4770, %v4620
    %v4772 = vpop.permute.xlu0 %4771
    %4773 = vset.pattern.permute.xlu0 0
    %4774 = vperm.xlu0 %4773, %v4621
    %v4775 = vpop.permute.xlu0 %4774
    %4776 = vset.pattern.permute.xlu0 0
    %4777 = vperm.xlu0 %4776, %v4622
    %v4778 = vpop.permute.xlu0 %4777
    %4779 = vset.pattern.permute.xlu0 0
    %4780 = vperm.xlu0 %4779, %v4623
    %v4781 = vpop.permute.xlu0 %4780
    %4782 = vset.pattern.permute.xlu0 0
    %4783 = vperm.xlu0 %4782, %v4624
    %v4784 = vpop.permute.xlu0 %4783
    %4785 = vset.pattern.permute.xlu0 0
    %4786 = vperm.xlu0 %4785, %v4625
    %v4787 = vpop.permute.xlu0 %4786
    %4788 = vset.pattern.permute.xlu0 0
    %4789 = vperm.xlu0 %4788, %v4626
    %v4790 = vpop.permute.xlu0 %4789
    %4791 = vset.pattern.permute.xlu0 0
    %4792 = vperm.xlu0 %4791, %v4627
    %v4793 = vpop.permute.xlu0 %4792
    %4794 = vset.pattern.permute.xlu0 0
    %4795 = vperm.xlu0 %4794, %v4628
    %v4796 = vpop.permute.xlu0 %4795
    %4797 = vset.pattern.permute.xlu0 0
    %4798 = vperm.xlu0 %4797, %v4629
    %v4799 = vpop.permute.xlu0 %4798
    %4800 = vset.pattern.permute.xlu0 0
    %4801 = vperm.xlu0 %4800, %v4630
    %v4802 = vpop.permute.xlu0 %4801
    %4803 = vset.pattern.permute.xlu0 0
    %4804 = vperm.xlu0 %4803, %v4631
    %v4805 = vpop.permute.xlu0 %4804
    %4806 = vset.pattern.permute.xlu0 0
    %4807 = vperm.xlu0 %4806, %v4632
    %v4808 = vpop.permute.xlu0 %4807
    %4809 = vset.pattern.permute.xlu0 0
    %4810 = vperm.xlu0 %4809, %v4633
    %v4811 = vpop.permute.xlu0 %4810
    %4812 = vset.pattern.permute.xlu0 0
    %4813 = vperm.xlu0 %4812, %v4634
    %v4814 = vpop.permute.xlu0 %4813
    %4815 = vset.pattern.permute.xlu0 0
    %4816 = vperm.xlu0 %4815, %v4635
    %v4817 = vpop.permute.xlu0 %4816
    %4818 = vset.pattern.permute.xlu0 0
    %4819 = vperm.xlu0 %4818, %v4636
    %v4820 = vpop.permute.xlu0 %4819
    %4821 = vset.pattern.permute.xlu0 0
    %4822 = vperm.xlu0 %4821, %v4637
    %v4823 = vpop.permute.xlu0 %4822
    %4824 = vset.pattern.permute.xlu0 0
    %4825 = vperm.xlu0 %4824, %v4638
    %v4826 = vpop.permute.xlu0 %4825
    %4827 = vset.pattern.permute.xlu0 0
    %4828 = vperm.xlu0 %4827, %v4639
    %v4829 = vpop.permute.xlu0 %4828
    %4830 = vset.pattern.permute.xlu0 0
    %4831 = vperm.xlu0 %4830, %v4640
    %v4832 = vpop.permute.xlu0 %4831
    %v4833 = vlaneseq
    %v4834 = vshrl.u32 %v4833, 7
    %v4835 = vsub.s32 %v3234, %v4834
    %v4836 = vrot.slane %v4691, %v4835
    %v4837 = vlaneseq
    %v4838 = vshrl.u32 %v4837, 7
    %v4839 = vsub.s32 %v3234, %v4838
    %v4840 = vrot.slane %v4694, %v4839
    %v4841 = vlaneseq
    %v4842 = vshrl.u32 %v4841, 7
    %v4843 = vsub.s32 %v3234, %v4842
    %v4844 = vrot.slane %v4697, %v4843
    %v4845 = vlaneseq
    %v4846 = vshrl.u32 %v4845, 7
    %v4847 = vsub.s32 %v3234, %v4846
    %v4848 = vrot.slane %v4700, %v4847
    %v4849 = vlaneseq
    %v4850 = vshrl.u32 %v4849, 7
    %v4851 = vsub.s32 %v3234, %v4850
    %v4852 = vrot.slane %v4703, %v4851
    %v4853 = vlaneseq
    %v4854 = vshrl.u32 %v4853, 7
    %v4855 = vsub.s32 %v3234, %v4854
    %v4856 = vrot.slane %v4706, %v4855
    %v4857 = vlaneseq
    %v4858 = vshrl.u32 %v4857, 7
    %v4859 = vsub.s32 %v3234, %v4858
    %v4860 = vrot.slane %v4709, %v4859
    %v4861 = vlaneseq
    %v4862 = vshrl.u32 %v4861, 7
    %v4863 = vsub.s32 %v3234, %v4862
    %v4864 = vrot.slane %v4712, %v4863
    %v4865 = vlaneseq
    %v4866 = vshrl.u32 %v4865, 7
    %v4867 = vsub.s32 %v3234, %v4866
    %v4868 = vrot.slane %v4715, %v4867
    %v4869 = vlaneseq
    %v4870 = vshrl.u32 %v4869, 7
    %v4871 = vsub.s32 %v3234, %v4870
    %v4872 = vrot.slane %v4718, %v4871
    %v4873 = vlaneseq
    %v4874 = vshrl.u32 %v4873, 7
    %v4875 = vsub.s32 %v3234, %v4874
    %v4876 = vrot.slane %v4721, %v4875
    %v4877 = vlaneseq
    %v4878 = vshrl.u32 %v4877, 7
    %v4879 = vsub.s32 %v3234, %v4878
    %v4880 = vrot.slane %v4724, %v4879
    %v4881 = vlaneseq
    %v4882 = vshrl.u32 %v4881, 7
    %v4883 = vsub.s32 %v3234, %v4882
    %v4884 = vrot.slane %v4727, %v4883
    %v4885 = vlaneseq
    %v4886 = vshrl.u32 %v4885, 7
    %v4887 = vsub.s32 %v3234, %v4886
    %v4888 = vrot.slane %v4730, %v4887
    %v4889 = vlaneseq
    %v4890 = vshrl.u32 %v4889, 7
    %v4891 = vsub.s32 %v3234, %v4890
    %v4892 = vrot.slane %v4733, %v4891
    %v4893 = vlaneseq
    %v4894 = vshrl.u32 %v4893, 7
    %v4895 = vsub.s32 %v3234, %v4894
    %v4896 = vrot.slane %v4736, %v4895
    %v4897 = vlaneseq
    %v4898 = vshrl.u32 %v4897, 7
    %v4899 = vsub.s32 %v3234, %v4898
    %v4900 = vrot.slane %v4739, %v4899
    %v4901 = vlaneseq
    %v4902 = vshrl.u32 %v4901, 7
    %v4903 = vsub.s32 %v3234, %v4902
    %v4904 = vrot.slane %v4742, %v4903
    %v4905 = vlaneseq
    %v4906 = vshrl.u32 %v4905, 7
    %v4907 = vsub.s32 %v3234, %v4906
    %v4908 = vrot.slane %v4745, %v4907
    %v4909 = vlaneseq
    %v4910 = vshrl.u32 %v4909, 7
    %v4911 = vsub.s32 %v3234, %v4910
    %v4912 = vrot.slane %v4748, %v4911
    %v4913 = vlaneseq
    %v4914 = vshrl.u32 %v4913, 7
    %v4915 = vsub.s32 %v3234, %v4914
    %v4916 = vrot.slane %v4751, %v4915
    %v4917 = vlaneseq
    %v4918 = vshrl.u32 %v4917, 7
    %v4919 = vsub.s32 %v3234, %v4918
    %v4920 = vrot.slane %v4754, %v4919
    %v4921 = vlaneseq
    %v4922 = vshrl.u32 %v4921, 7
    %v4923 = vsub.s32 %v3234, %v4922
    %v4924 = vrot.slane %v4757, %v4923
    %v4925 = vlaneseq
    %v4926 = vshrl.u32 %v4925, 7
    %v4927 = vsub.s32 %v3234, %v4926
    %v4928 = vrot.slane %v4760, %v4927
    %v4929 = vlaneseq
    %v4930 = vshrl.u32 %v4929, 7
    %v4931 = vsub.s32 %v3234, %v4930
    %v4932 = vrot.slane %v4763, %v4931
    %v4933 = vlaneseq
    %v4934 = vshrl.u32 %v4933, 7
    %v4935 = vsub.s32 %v3234, %v4934
    %v4936 = vrot.slane %v4766, %v4935
    %v4937 = vlaneseq
    %v4938 = vshrl.u32 %v4937, 7
    %v4939 = vsub.s32 %v3234, %v4938
    %v4940 = vrot.slane %v4769, %v4939
    %v4941 = vlaneseq
    %v4942 = vshrl.u32 %v4941, 7
    %v4943 = vsub.s32 %v3234, %v4942
    %v4944 = vrot.slane %v4772, %v4943
    %v4945 = vlaneseq
    %v4946 = vshrl.u32 %v4945, 7
    %v4947 = vsub.s32 %v3234, %v4946
    %v4948 = vrot.slane %v4775, %v4947
    %v4949 = vlaneseq
    %v4950 = vshrl.u32 %v4949, 7
    %v4951 = vsub.s32 %v3234, %v4950
    %v4952 = vrot.slane %v4778, %v4951
    %v4953 = vlaneseq
    %v4954 = vshrl.u32 %v4953, 7
    %v4955 = vsub.s32 %v3234, %v4954
    %v4956 = vrot.slane %v4781, %v4955
    %v4957 = vlaneseq
    %v4958 = vshrl.u32 %v4957, 7
    %v4959 = vsub.s32 %v3234, %v4958
    %v4960 = vrot.slane %v4784, %v4959
    %v4961 = vlaneseq
    %v4962 = vshrl.u32 %v4961, 7
    %v4963 = vsub.s32 %v3234, %v4962
    %v4964 = vrot.slane %v4787, %v4963
    %v4965 = vlaneseq
    %v4966 = vshrl.u32 %v4965, 7
    %v4967 = vsub.s32 %v3234, %v4966
    %v4968 = vrot.slane %v4790, %v4967
    %v4969 = vlaneseq
    %v4970 = vshrl.u32 %v4969, 7
    %v4971 = vsub.s32 %v3234, %v4970
    %v4972 = vrot.slane %v4793, %v4971
    %v4973 = vlaneseq
    %v4974 = vshrl.u32 %v4973, 7
    %v4975 = vsub.s32 %v3234, %v4974
    %v4976 = vrot.slane %v4796, %v4975
    %v4977 = vlaneseq
    %v4978 = vshrl.u32 %v4977, 7
    %v4979 = vsub.s32 %v3234, %v4978
    %v4980 = vrot.slane %v4799, %v4979
    %v4981 = vlaneseq
    %v4982 = vshrl.u32 %v4981, 7
    %v4983 = vsub.s32 %v3234, %v4982
    %v4984 = vrot.slane %v4802, %v4983
    %v4985 = vlaneseq
    %v4986 = vshrl.u32 %v4985, 7
    %v4987 = vsub.s32 %v3234, %v4986
    %v4988 = vrot.slane %v4805, %v4987
    %v4989 = vlaneseq
    %v4990 = vshrl.u32 %v4989, 7
    %v4991 = vsub.s32 %v3234, %v4990
    %v4992 = vrot.slane %v4808, %v4991
    %v4993 = vlaneseq
    %v4994 = vshrl.u32 %v4993, 7
    %v4995 = vsub.s32 %v3234, %v4994
    %v4996 = vrot.slane %v4811, %v4995
    %v4997 = vlaneseq
    %v4998 = vshrl.u32 %v4997, 7
    %v4999 = vsub.s32 %v3234, %v4998
    %v5000 = vrot.slane %v4814, %v4999
    %v5001 = vlaneseq
    %v5002 = vshrl.u32 %v5001, 7
    %v5003 = vsub.s32 %v3234, %v5002
    %v5004 = vrot.slane %v4817, %v5003
    %v5005 = vlaneseq
    %v5006 = vshrl.u32 %v5005, 7
    %v5007 = vsub.s32 %v3234, %v5006
    %v5008 = vrot.slane %v4820, %v5007
    %v5009 = vlaneseq
    %v5010 = vshrl.u32 %v5009, 7
    %v5011 = vsub.s32 %v3234, %v5010
    %v5012 = vrot.slane %v4823, %v5011
    %v5013 = vlaneseq
    %v5014 = vshrl.u32 %v5013, 7
    %v5015 = vsub.s32 %v3234, %v5014
    %v5016 = vrot.slane %v4826, %v5015
    %v5017 = vlaneseq
    %v5018 = vshrl.u32 %v5017, 7
    %v5019 = vsub.s32 %v3234, %v5018
    %v5020 = vrot.slane %v4829, %v5019
    %v5021 = vlaneseq
    %v5022 = vshrl.u32 %v5021, 7
    %v5023 = vsub.s32 %v3234, %v5022
    %v5024 = vrot.slane %v4832, %v5023
    %v5025 = vsel %vm3427, %v4840, %v4836
    %v5026 = vsel %vm3429, %v4844, %v5025
    %v5027 = vsel %vm3431, %v4848, %v5026
    %v5028 = vsel %vm3433, %v4852, %v5027
    %v5029 = vsel %vm3435, %v4856, %v5028
    %v5030 = vsel %vm3437, %v4860, %v5029
    %v5031 = vsel %vm3439, %v4864, %v5030
    %v5032 = vsel %vm3427, %v4872, %v4868
    %v5033 = vsel %vm3429, %v4876, %v5032
    %v5034 = vsel %vm3431, %v4880, %v5033
    %v5035 = vsel %vm3433, %v4884, %v5034
    %v5036 = vsel %vm3435, %v4888, %v5035
    %v5037 = vsel %vm3437, %v4892, %v5036
    %v5038 = vsel %vm3439, %v4896, %v5037
    %v5039 = vsel %vm3427, %v4904, %v4900
    %v5040 = vsel %vm3429, %v4908, %v5039
    %v5041 = vsel %vm3431, %v4912, %v5040
    %v5042 = vsel %vm3433, %v4916, %v5041
    %v5043 = vsel %vm3435, %v4920, %v5042
    %v5044 = vsel %vm3437, %v4924, %v5043
    %v5045 = vsel %vm3439, %v4928, %v5044
    %v5046 = vsel %vm3427, %v4936, %v4932
    %v5047 = vsel %vm3429, %v4940, %v5046
    %v5048 = vsel %vm3431, %v4944, %v5047
    %v5049 = vsel %vm3433, %v4948, %v5048
    %v5050 = vsel %vm3435, %v4952, %v5049
    %v5051 = vsel %vm3437, %v4956, %v5050
    %v5052 = vsel %vm3439, %v4960, %v5051
    %v5053 = vsel %vm3427, %v4968, %v4964
    %v5054 = vsel %vm3429, %v4972, %v5053
    %v5055 = vsel %vm3431, %v4976, %v5054
    %v5056 = vsel %vm3433, %v4980, %v5055
    %v5057 = vsel %vm3435, %v4984, %v5056
    %v5058 = vsel %vm3437, %v4988, %v5057
    %v5059 = vsel %vm3439, %v4992, %v5058
    %v5060 = vsel %vm3427, %v5000, %v4996
    %v5061 = vsel %vm3429, %v5004, %v5060
    %v5062 = vsel %vm3431, %v5008, %v5061
    %v5063 = vsel %vm3433, %v5012, %v5062
    %v5064 = vsel %vm3435, %v5016, %v5063
    %v5065 = vsel %vm3437, %v5020, %v5064
    %v5066 = vsel %vm3439, %v5024, %v5065
    %5073 = vst.msk [vmem:[#allocation7] sm:$0xff] %vm3482, %v5031
    %5074 = vst.msk [vmem:[#allocation7 + $0x8] sm:$0xff] %vm3482, %v5038
    %5075 = vst.msk [vmem:[#allocation7 + $0x10] sm:$0xff] %vm3482, %v5045
    %5076 = vst.msk [vmem:[#allocation7 + $0x18] sm:$0xff] %vm3482, %v5052
    %5077 = vst.msk [vmem:[#allocation7 + $0x20] sm:$0xff] %vm3482, %v5059
    %5078 = vst.msk [vmem:[#allocation7 + $0x28] sm:$0xff] %vm3482, %v5066
    %v5079 = vld [vmem:[%s10] sm:$0xff]
    %v5080 = vld [vmem:[%s10 + $0x8] sm:$0xff]
    %v5081 = vld [vmem:[%s10 + $0x10] sm:$0xff]
    %v5082 = vld [vmem:[%s10 + $0x18] sm:$0xff]
    %v5083 = vld [vmem:[#allocation4] sm:$0xff]
    %v5084 = vld [vmem:[#allocation4 + $0x8] sm:$0xff]
    %v5085 = vld [vmem:[#allocation4 + $0x10] sm:$0xff]
    %v5086 = vld [vmem:[#allocation4 + $0x18] sm:$0xff]
    %v5087 = vld [vmem:[#allocation4 + $0x20] sm:$0xff]
    %v5088 = vld [vmem:[#allocation4 + $0x28] sm:$0xff]
    %v5089 = vld [vmem:[%s11] sm:$0xff]
    %v5090 = vld [vmem:[%s11 + $0x8] sm:$0xff]
    %v5091 = vld [vmem:[%s11 + $0x10] sm:$0xff]
    %v5092 = vld [vmem:[%s11 + $0x18] sm:$0xff]
    %v5093 = vld [vmem:[%s11 + $0x20] sm:$0xff]
    %v5094 = vld [vmem:[%s11 + $0x28] sm:$0xff]
    %v5095 = vld [vmem:[%s11 + $0x30] sm:$0xff]
    %v5096 = vld [vmem:[%s11 + $0x38] sm:$0xff]
    %v5098 = vsel %vm573, %v5083, 0
    %v5101 = vsel %vm573, %v5084, 0
    %v5104 = vsel %vm573, %v5085, 0
    %v5107 = vsel %vm573, %v5086, 0
    %v5110 = vsel %vm573, %v5087, 0
    %v5113 = vsel %vm573, %v5088, 0
    %5115 = vmatprep.subr.mxu0 0.0
    %5116 = vmatpush1.msra.mxu0 %v5089
    %5117 = vmatprep.subr.mxu0 0.0
    %5118 = vmatpush1.msra.mxu0 %v5090
    %5119 = vmatprep.subr.mxu0 0.0
    %5120 = vmatpush1.msra.mxu0 %v5091
    %5121 = vmatprep.subr.mxu0 0.0
    %5122 = vmatpush1.msra.mxu0 %v5092
    %5123 = vmatprep.subr.mxu0 0.0
    %5124 = vmatpush1.msra.mxu0 %v5093
    %5125 = vmatprep.subr.mxu0 0.0
    %5126 = vmatpush1.msra.mxu0 %v5094
    %5127 = vmatprep.subr.mxu0 0.0
    %5128 = vmatpush1.msra.mxu0 %v5095
    %5129 = vmatprep.subr.mxu0 0.0
    %5130 = vmatpush1.msra.mxu0 %v5096
    %5131 = vmatprep.subr.mxu0 0.0
    %5132 = vmatpush1.msra.mxu0 0.0
    %5133 = vmatprep.subr.mxu0 0.0
    %5134 = vmatpush1.msra.mxu0 0.0
    %5135 = vmatprep.subr.mxu0 0.0
    %5136 = vmatpush1.msra.mxu0 0.0
    %5137 = vmatprep.subr.mxu0 0.0
    %5138 = vmatpush1.msra.mxu0 0.0
    %5139 = vmatprep.subr.mxu0 0.0
    %5140 = vmatpush1.msra.mxu0 0.0
    %5141 = vmatprep.subr.mxu0 0.0
    %5142 = vmatpush1.msra.mxu0 0.0
    %5143 = vmatprep.subr.mxu0 0.0
    %5144 = vmatpush1.msra.mxu0 0.0
    %5145 = vmatprep.subr.mxu0 0.0
    %5146 = vmatpush1.msra.mxu0 0.0
    %5147 = vmatprep.subr.mxu0 0.0
    %5148 = vmatpush1.msra.mxu0 0.0
    %5149 = vmatprep.subr.mxu0 0.0
    %5150 = vmatpush1.msra.mxu0 0.0
    %5151 = vmatprep.subr.mxu0 0.0
    %5152 = vmatpush1.msra.mxu0 0.0
    %5153 = vmatprep.subr.mxu0 0.0
    %5154 = vmatpush1.msra.mxu0 0.0
    %5155 = vmatprep.subr.mxu0 0.0
    %5156 = vmatpush1.msra.mxu0 0.0
    %5157 = vmatprep.subr.mxu0 0.0
    %5158 = vmatpush1.msra.mxu0 0.0
    %5159 = vmatprep.subr.mxu0 0.0
    %5160 = vmatpush1.msra.mxu0 0.0
    %5161 = vmatprep.subr.mxu0 0.0
    %5162 = vmatpush1.msra.mxu0 0.0
    %5163 = vmatprep.subr.mxu0 0.0
    %5164 = vmatpush1.msra.mxu0 0.0
    %5165 = vmatprep.subr.mxu0 0.0
    %5166 = vmatpush1.msra.mxu0 0.0
    %5167 = vmatprep.subr.mxu0 0.0
    %5168 = vmatpush1.msra.mxu0 0.0
    %5169 = vmatprep.subr.mxu0 0.0
    %5170 = vmatpush1.msra.mxu0 0.0
    %5171 = vmatprep.subr.mxu0 0.0
    %5172 = vmatpush1.msra.mxu0 0.0
    %5173 = vmatprep.subr.mxu0 0.0
    %5174 = vmatpush1.msra.mxu0 0.0
    %5175 = vmatprep.subr.mxu0 0.0
    %5176 = vmatpush1.msra.mxu0 0.0
    %5177 = vmatprep.subr.mxu0 0.0
    %5178 = vmatpush1.msra.mxu0 0.0
    %5179 = vmatprep.mubr.f32.mxu0 0.0
    %5180 = vmatmul.mubr.f32.gmra.mrb[0].mxu0 %v5098
    %v5181 = vpop.f32.mrb[0].mxu0
    %v5182 = vadd.f32 0.0, %v5181
    %v5183 = vpop.f32.mrb[0].mxu0
    %5184 = vmatprep.mubr.f32.mxu0 0.0
    %5185 = vmatmul.mubr.f32.gmra.mrb[0].mxu0 %v5101
    %v5186 = vpop.f32.mrb[0].mxu0
    %v5187 = vadd.f32 0.0, %v5186
    %v5188 = vpop.f32.mrb[0].mxu0
    %5189 = vmatprep.mubr.f32.mxu0 0.0
    %5190 = vmatmul.mubr.f32.gmra.mrb[0].mxu0 %v5104
    %v5191 = vpop.f32.mrb[0].mxu0
    %v5192 = vadd.f32 0.0, %v5191
    %v5193 = vpop.f32.mrb[0].mxu0
    %5194 = vmatprep.mubr.f32.mxu0 0.0
    %5195 = vmatmul.mubr.f32.gmra.mrb[0].mxu0 %v5107
    %v5196 = vpop.f32.mrb[0].mxu0
    %v5197 = vadd.f32 0.0, %v5196
    %v5198 = vpop.f32.mrb[0].mxu0
    %5199 = vmatprep.mubr.f32.mxu0 0.0
    %5200 = vmatmul.mubr.f32.gmra.mrb[0].mxu0 %v5110
    %v5201 = vpop.f32.mrb[0].mxu0
    %v5202 = vadd.f32 0.0, %v5201
    %v5203 = vpop.f32.mrb[0].mxu0
    %5204 = vmatprep.mubr.f32.mxu0 0.0
    %5205 = vmatmul.mubr.f32.gmra.mrb[0].mxu0 %v5113
    %v5206 = vpop.f32.mrb[0].mxu0
    %v5207 = vadd.f32 0.0, %v5206
    %v5208 = vpop.f32.mrb[0].mxu0
    %5209 = vdwg.mxu0
    %5210 = vmatprep.subr.mxu0 0.0
    %5211 = vmatpush1.msra.mxu0 %v5079
    %5212 = vmatprep.subr.mxu0 0.0
    %5213 = vmatpush1.msra.mxu0 %v5080
    %5214 = vmatprep.subr.mxu0 0.0
    %5215 = vmatpush1.msra.mxu0 %v5081
    %5216 = vmatprep.subr.mxu0 0.0
    %5217 = vmatpush1.msra.mxu0 %v5082
    %5218 = vmatprep.subr.mxu0 0.0
    %5219 = vmatpush1.msra.mxu0 0.0
    %5220 = vmatprep.subr.mxu0 0.0
    %5221 = vmatpush1.msra.mxu0 0.0
    %5222 = vmatprep.subr.mxu0 0.0
    %5223 = vmatpush1.msra.mxu0 0.0
    %5224 = vmatprep.subr.mxu0 0.0
    %5225 = vmatpush1.msra.mxu0 0.0
    %5226 = vmatprep.subr.mxu0 0.0
    %5227 = vmatpush1.msra.mxu0 0.0
    %5228 = vmatprep.subr.mxu0 0.0
    %5229 = vmatpush1.msra.mxu0 0.0
    %5230 = vmatprep.subr.mxu0 0.0
    %5231 = vmatpush1.msra.mxu0 0.0
    %5232 = vmatprep.subr.mxu0 0.0
    %5233 = vmatpush1.msra.mxu0 0.0
    %5234 = vmatprep.subr.mxu0 0.0
    %5235 = vmatpush1.msra.mxu0 0.0
    %5236 = vmatprep.subr.mxu0 0.0
    %5237 = vmatpush1.msra.mxu0 0.0
    %5238 = vmatprep.subr.mxu0 0.0
    %5239 = vmatpush1.msra.mxu0 0.0
    %5240 = vmatprep.subr.mxu0 0.0
    %5241 = vmatpush1.msra.mxu0 0.0
    %5242 = vmatprep.subr.mxu0 0.0
    %5243 = vmatpush1.msra.mxu0 0.0
    %5244 = vmatprep.subr.mxu0 0.0
    %5245 = vmatpush1.msra.mxu0 0.0
    %5246 = vmatprep.subr.mxu0 0.0
    %5247 = vmatpush1.msra.mxu0 0.0
    %5248 = vmatprep.subr.mxu0 0.0
    %5249 = vmatpush1.msra.mxu0 0.0
    %5250 = vmatprep.subr.mxu0 0.0
    %5251 = vmatpush1.msra.mxu0 0.0
    %5252 = vmatprep.subr.mxu0 0.0
    %5253 = vmatpush1.msra.mxu0 0.0
    %5254 = vmatprep.subr.mxu0 0.0
    %5255 = vmatpush1.msra.mxu0 0.0
    %5256 = vmatprep.subr.mxu0 0.0
    %5257 = vmatpush1.msra.mxu0 0.0
    %5258 = vmatprep.subr.mxu0 0.0
    %5259 = vmatpush1.msra.mxu0 0.0
    %5260 = vmatprep.subr.mxu0 0.0
    %5261 = vmatpush1.msra.mxu0 0.0
    %5262 = vmatprep.subr.mxu0 0.0
    %5263 = vmatpush1.msra.mxu0 0.0
    %5264 = vmatprep.subr.mxu0 0.0
    %5265 = vmatpush1.msra.mxu0 0.0
    %5266 = vmatprep.subr.mxu0 0.0
    %5267 = vmatpush1.msra.mxu0 0.0
    %5268 = vmatprep.subr.mxu0 0.0
    %5269 = vmatpush1.msra.mxu0 0.0
    %5270 = vmatprep.subr.mxu0 0.0
    %5271 = vmatpush1.msra.mxu0 0.0
    %5272 = vmatprep.subr.mxu0 0.0
    %5273 = vmatpush1.msra.mxu0 0.0
    %5274 = vmatprep.mubr.f32.mxu0 0.0
    %5275 = vmatmul.mubr.f32.gmra.mrb[0].mxu0 %v2333
    %v5276 = vpop.f32.mrb[0].mxu0
    %v5277 = vadd.f32 %v5182, %v5276
    %v5278 = vpop.f32.mrb[0].mxu0
    %5279 = vmatprep.mubr.f32.mxu0 0.0
    %5280 = vmatmul.mubr.f32.gmra.mrb[0].mxu0 %v2336
    %v5281 = vpop.f32.mrb[0].mxu0
    %v5282 = vadd.f32 %v5187, %v5281
    %v5283 = vpop.f32.mrb[0].mxu0
    %5284 = vmatprep.mubr.f32.mxu0 0.0
    %5285 = vmatmul.mubr.f32.gmra.mrb[0].mxu0 %v2339
    %v5286 = vpop.f32.mrb[0].mxu0
    %v5287 = vadd.f32 %v5192, %v5286
    %v5288 = vpop.f32.mrb[0].mxu0
    %5289 = vmatprep.mubr.f32.mxu0 0.0
    %5290 = vmatmul.mubr.f32.gmra.mrb[0].mxu0 %v2342
    %v5291 = vpop.f32.mrb[0].mxu0
    %v5292 = vadd.f32 %v5197, %v5291
    %v5293 = vpop.f32.mrb[0].mxu0
    %5294 = vmatprep.mubr.f32.mxu0 0.0
    %5295 = vmatmul.mubr.f32.gmra.mrb[0].mxu0 %v2345
    %v5296 = vpop.f32.mrb[0].mxu0
    %v5297 = vadd.f32 %v5202, %v5296
    %v5298 = vpop.f32.mrb[0].mxu0
    %5299 = vmatprep.mubr.f32.mxu0 0.0
    %5300 = vmatmul.mubr.f32.gmra.mrb[0].mxu0 %v2348
    %v5301 = vpop.f32.mrb[0].mxu0
    %v5302 = vadd.f32 %v5207, %v5301
    %v5303 = vpop.f32.mrb[0].mxu0
    %5304 = vdwg.mxu0
    %v5305 = vld [vmem:[%s12] sm:$0x1]
    %v5307 = vlaneseq
    %v5308 = vshrl.u32 %v5307, 7
    %v5309 = vsub.s32 0, %v5308
    %v5310 = vrot.slane %v5305, %v5309
    %v5312 = vadd.f32 %v5277, %v5310
    %v5313 = vadd.f32 %v5282, %v5310
    %v5314 = vadd.f32 %v5287, %v5310
    %v5315 = vadd.f32 %v5292, %v5310
    %v5316 = vadd.f32 %v5297, %v5310
    %v5317 = vadd.f32 %v5302, %v5310
    %5318 = vst.msk [vmem:[#allocation5] sm:$0xff] %vm114, %v5312
    %5319 = vst.msk [vmem:[#allocation5 + $0x8] sm:$0xff] %vm114, %v5313
    %5320 = vst.msk [vmem:[#allocation5 + $0x10] sm:$0xff] %vm114, %v5314
    %5321 = vst.msk [vmem:[#allocation5 + $0x18] sm:$0xff] %vm114, %v5315
    %5322 = vst.msk [vmem:[#allocation5 + $0x20] sm:$0xff] %vm114, %v5316
    %5323 = vst.msk [vmem:[#allocation5 + $0x28] sm:$0xff] %vm114, %v5317
    // Predicated region
    $region66: #{mem_decoder_forward.1} parent=1 // pred_check
      _
    $region67: #{mem_decoder_forward.1} parent=1 // pred_check_branch
      %5325 = sbr.rel (0) target = $region69
    $region68: #{mem_decoder_forward.1} parent=1 // pred_region
      %s5327 = ssub.s32 768, 768
      %5328 = vsyncadd [#allocation6], %s5327
      %s5329 = sshll.u32 [#allocation5], 4
      %s5330 = int_to_ptr.vmem [resolvable:$true] %s5329
      %5335 = dma.vmem_to_hbm [thread:$0]  %s5330, 768, %s16, [#allocation6], 128, 128, 8
    $region69: #{mem_decoder_forward.1} parent=1 // pred_fallthru
      _
    // Predicated region
    $region70: #{mem_decoder_forward.1} parent=1 // pred_check
      _
    $region71: #{mem_decoder_forward.1} parent=1 // pred_check_branch
      %5337 = sbr.rel (0) target = $region73
    $region72: #{mem_decoder_forward.1} parent=1 // pred_region
      %s5339 = ssub.s32 768, 768
      %5340 = vsyncadd [#allocation8], %s5339
      %s5341 = sshll.u32 [#allocation7], 4
      %s5342 = int_to_ptr.vmem [resolvable:$true] %s5341
      %5347 = dma.vmem_to_hbm [thread:$0]  %s5342, 768, %s17, [#allocation8], 128, 128, 8
    $region73: #{mem_decoder_forward.1} parent=1 // pred_fallthru
      _
    // Predicated region
    $region74: #{mem_decoder_forward.1} parent=1 // pred_check
      _
    $region75: #{mem_decoder_forward.1} parent=1 // pred_check_branch
      %5349 = sbr.rel (0) target = $region77
    $region76: #{mem_decoder_forward.1} parent=1 // pred_region
      %5350 = dma.done [#allocation6], 768
    $region77: #{mem_decoder_forward.1} parent=1 // pred_fallthru
      _
    // Predicated region
    $region78: #{mem_decoder_forward.1} parent=1 // pred_check
      _
    $region79: #{mem_decoder_forward.1} parent=1 // pred_check_branch
      %5352 = sbr.rel (0) target = $region81
    $region80: #{mem_decoder_forward.1} parent=1 // pred_region
      %5353 = dma.done [#allocation8], 768
    $region81: #{mem_decoder_forward.1} parent=1 // pred_fallthru
      _
    %5354 = vsyncpa [#allocation6], 1
    %5355 = vsyncpa [#allocation8], 1

</llo_original>
